<compile_context>
chip_gen: v6e
topology: v6e:2x2x1
jax: 0.10.0
libtpu: 0.0.40
codegen_flags: <defaults>
</compile_context>

<pallas_src>
import math
import functools

import jax
import jax.numpy as jnp
from jax import lax
from jax.experimental import pallas as pl
from jax.experimental.pallas import tpu as pltpu


def _vmem_limit(est_bytes):
    # generous, clamped so it is valid on v5e/v6e (128 MiB) and v7x (64 MiB)
    return int(min(max(2 * est_bytes + (8 << 20), 32 << 20), 64 << 20))


# ----------------------------------------------------------------------------
# Pallas kernel 1: fused multi-domain streaming item gather + mean + VQ
# ----------------------------------------------------------------------------
def _vq_gather_kernel(ids_s, off_s, kval_s,              # scalar prefetch (SMEM)
                      idsv_ref, table_ref, cb_ref,       # inputs
                      *rest, pad_ind, emit_user):
    if emit_user:
        quant_ref, code_ref, user_ref, gbuf, user_buf, sem = rest
    else:
        quant_ref, code_ref, gbuf, user_buf, sem = rest
        user_ref = None

    _, B, L = idsv_ref.shape
    _, K, D = cb_ref.shape
    d = pl.program_id(0)
    base = off_s[d]                      # row offset of this domain's table
    idbase = d * (B * L)                 # offset into the flat id array

    # Stale rows only ever contribute weight 0.0, but un-initialised VMEM bits
    # could be NaN on first use -> zero the chunk buffers once per step.
    gbuf[...] = jnp.zeros_like(gbuf)

    def issue_sample(b, slot):
        # one DMA descriptor per non-pad row, all signalling sem[slot]
        for j in range(L):
            rid = ids_s[idbase + b * L + j]

            @pl.when(rid != pad_ind)
            def _(rid=rid, j=j):
                pltpu.make_async_copy(
                    table_ref.at[pl.ds(base + rid, 1)],
                    gbuf.at[pl.ds(slot * L + j, 1)],
                    sem.at[slot]).start()

    def wait_sample(b, slot):
        # rebuild the identical descriptors (same rows) and wait on them
        for j in range(L):
            rid = ids_s[idbase + b * L + j]

            @pl.when(rid != pad_ind)
            def _(rid=rid, j=j):
                pltpu.make_async_copy(
                    table_ref.at[pl.ds(base + rid, 1)],
                    gbuf.at[pl.ds(slot * L + j, 1)],
                    sem.at[slot]).wait()

    issue_sample(0, 0)                   # prologue: prime slot 0

    @pl.loop(0, B)
    def _(b):
        slot = b % 2

        @pl.when(b + 1 < B)              # prefetch next sample into other slot
        def _():
            issue_sample(b + 1, 1 - slot)

        wait_sample(b, slot)
        g = gbuf[pl.ds(slot * L, L), :]                              # (L, D)
        vrow = (idsv_ref[0, pl.ds(b, 1), :] != pad_ind).astype(jnp.float32)
        srow = jnp.dot(vrow, g, preferred_element_type=jnp.float32)  # (1, D)
        cnt = jnp.sum(vrow, axis=1, keepdims=True)                   # (1, 1)
        user_buf[pl.ds(b, 1), :] = srow / jnp.maximum(cnt, 1.0)

    # ---- vector quantization (distances in [K, B] layout -> lane-dense code)
    user = user_buf[...]                                             # (B, D)
    C = cb_ref[0]                                                    # (K, D)
    uc_t = lax.dot_general(C, user, (((1,), (1,)), ((), ())),
                           preferred_element_type=jnp.float32)       # (K, B)
    cc = jnp.sum(C * C, axis=1, keepdims=True)                       # (K, 1)
    # ||u||^2 is constant per column -> irrelevant for the argmin over K.
    dist_t = cc - 2.0 * uc_t                                         # (K, B)
    k_iota = lax.broadcasted_iota(jnp.int32, (K, B), 0)
    dist_t = jnp.where(k_iota < kval_s[d], dist_t, 1e30)             # pad rows
    dmin = jnp.min(dist_t, axis=0, keepdims=True)                    # (1, B)
    code = jnp.min(jnp.where(dist_t == dmin, k_iota, K),
                   axis=0, keepdims=True)                            # first argmin
    code_oh = (k_iota == code).astype(jnp.float32)                   # (K, B)
    quant = lax.dot_general(code_oh, C, (((0,), (0,)), ((), ())),
                            preferred_element_type=jnp.float32)      # (B, D)

    quant_ref[0] = quant
    code_ref[0] = code.astype(jnp.int32)
    if emit_user:
        user_ref[0] = user


def multi_domain_vq(ids, table_stacked, row_off, codebooks, k_valid, *,
                    pad_ind, emit_user):
    """ids: [n_domain, B, L] int32; table_stacked: [sum n_items, D] (HBM)."""
    n_domain, B, L = ids.shape
    _, K, D = codebooks.shape
    kernel = functools.partial(_vq_gather_kernel, pad_ind=pad_ind,
                               emit_user=emit_user)

    out_shape = [jax.ShapeDtypeStruct((n_domain, B, D), jnp.float32),
                 jax.ShapeDtypeStruct((n_domain, 1, B), jnp.int32)]
    out_specs = [pl.BlockSpec((1, B, D), lambda d, *_: (d, 0, 0)),
                 pl.BlockSpec((1, 1, B), lambda d, *_: (d, 0, 0))]
    if emit_user:   # user embeddings only needed when vq != 'True'
        out_shape.append(jax.ShapeDtypeStruct((n_domain, B, D), jnp.float32))
        out_specs.append(pl.BlockSpec((1, B, D), lambda d, *_: (d, 0, 0)))

    est = (2 * L * D + 4 * B * D + K * D + B * L) * 4
    grid_spec = pltpu.PrefetchScalarGridSpec(
        num_scalar_prefetch=3,                # flat ids, row offsets, K-valid
        grid=(n_domain,),
        in_specs=[
            pl.BlockSpec((1, B, L), lambda d, *_: (d, 0, 0)),   # ids (VMEM)
            pl.BlockSpec(memory_space=pl.ANY),                  # item table HBM
            pl.BlockSpec((1, K, D), lambda d, *_: (d, 0, 0)),   # codebook
        ],
        out_specs=out_specs,
        scratch_shapes=[pltpu.VMEM((2 * L, D), jnp.float32),    # 2-chunk ring
                        pltpu.VMEM((B, D), jnp.float32),        # user embeds
                        pltpu.SemaphoreType.DMA((2,))],
    )
    return pl.pallas_call(
        kernel,
        out_shape=tuple(out_shape),
        grid_spec=grid_spec,
        compiler_params=pltpu.CompilerParams(
            dimension_semantics=("parallel",),
            vmem_limit_bytes=_vmem_limit(est)),
    )(ids.reshape(-1), row_off, k_valid, ids, table_stacked, codebooks)


# ----------------------------------------------------------------------------
# Pallas kernel 2: BERT stack, one layer per grid step, weights streamed
# ----------------------------------------------------------------------------
def _layernorm(x, g, b, eps=1e-6):
    # gamma*(x-mean)/(unbiased_std+eps)+beta, exact divide (no approx recip)
    n = x.shape[-1]
    mu = jnp.mean(x, axis=-1, keepdims=True)
    xc = x - mu
    var = jnp.sum(xc * xc, axis=-1, keepdims=True) * (1.0 / (n - 1))
    return g * (xc / (jnp.sqrt(var) + eps)) + b


def _gelu(x):
    return 0.5 * x * (1.0 + jnp.tanh(0.7978845608028654 *
                                     (x + 0.044715 * x * x * x)))


def _bert_layer_kernel(q_ref, maskq_ref, maskk_ref, pad_ref, pe_ref,
                       ln1g_ref, ln1b_ref, wqkv_ref, bqkv_ref, wo_ref, bo_ref,
                       ln2g_ref, ln2b_ref, w1_ref, b1_ref, w2_ref, b2_ref,
                       out_ref, sub_ref, h_scr, *, num_heads):
    bt, S, D = q_ref.shape
    dk = D // num_heads
    inv_sqrt_dk = 1.0 / math.sqrt(dk)
    l = pl.program_id(1)
    n_layer = pl.num_programs(1)

    # ---- prologue (layer 0): pad-embedding substitution + positional add ----
    @pl.when(l == 0)
    def _prologue():
        q = q_ref[...]
        cond = maskq_ref[...] == 1                           # (bt, S, 1)
        sub = jnp.where(cond, pad_ref[...][None, :, :], q)   # (bt, S, D)
        sub_ref[...] = sub                                   # aliased "org" embeds
        h_scr[...] = (sub + pe_ref[...][None, :, :]).reshape(bt * S, D)

    h = h_scr[...]                                           # (bt*S, D) f32
    # additive bias: key positions with mask==0 get -1e9 (masked_fill)
    bias = jnp.where(maskk_ref[...] > 0, 0.0, -1e9).astype(jnp.float32)

    # ---- pre-norm multi-head self-attention sublayer -------------------------
    hn = _layernorm(h, ln1g_ref[0], ln1b_ref[0])
    wqkv = wqkv_ref[0]                                       # bf16 [D, 3D]
    qkv = jnp.dot(hn.astype(wqkv.dtype), wqkv,
                  preferred_element_type=jnp.float32) + bqkv_ref[0]
    q_all, k_all, v_all = qkv[:, :D], qkv[:, D:2 * D], qkv[:, 2 * D:]

    ctx_heads = []
    for hh in range(num_heads):
        sl = slice(hh * dk, (hh + 1) * dk)
        qh = q_all[:, sl].reshape(bt, S, dk).astype(jnp.bfloat16)
        kh = k_all[:, sl].reshape(bt, S, dk).astype(jnp.bfloat16)
        vh = v_all[:, sl].reshape(bt, S, dk).astype(jnp.bfloat16)
        s = jnp.einsum('bqd,bkd->bqk', qh, kh,
                       preferred_element_type=jnp.float32) * inv_sqrt_dk
        s = s + bias
        s = s - jnp.max(s, axis=-1, keepdims=True)
        p = jnp.exp(s)
        p = p * pl.reciprocal(jnp.sum(p, axis=-1, keepdims=True), approx=True)
        ctx_heads.append(jnp.einsum('bqk,bkd->bqd', p.astype(jnp.bfloat16), vh,
                                    preferred_element_type=jnp.float32))
    # heads occupy disjoint lane slices -> one D-deep output projection matmul
    ctx = jnp.concatenate(ctx_heads, axis=-1).reshape(bt * S, D)
    wo = wo_ref[0]
    h = h + jnp.dot(ctx.astype(wo.dtype), wo,
                    preferred_element_type=jnp.float32) + bo_ref[0]

    # ---- pre-norm position-wise feed-forward sublayer -------------------------
    hn2 = _layernorm(h, ln2g_ref[0], ln2b_ref[0])
    w1 = w1_ref[0]
    t = jnp.dot(hn2.astype(w1.dtype), w1,
                preferred_element_type=jnp.float32) + b1_ref[0]
    t = _gelu(t)
    w2 = w2_ref[0]
    h = h + jnp.dot(t.astype(w2.dtype), w2,
                    preferred_element_type=jnp.float32) + b2_ref[0]
    h_scr[...] = h

    @pl.when(l == n_layer - 1)
    def _epilogue():
        out_ref[...] = h_scr[...].reshape(bt, S, D).astype(out_ref.dtype)


_BERT_WEIGHT_ORDER = ('ln1g', 'ln1b', 'wqkv', 'bqkv', 'wo', 'bo',
                      'ln2g', 'ln2b', 'w1', 'b1', 'w2', 'b2')
_BF16_WEIGHTS = {'wqkv', 'wo', 'w1', 'w2'}   # MXU operands (f32 accumulate)


def bert_encode(quant, mask, pad_emb, pe, bert_params, *, num_heads,
                batch_tile=None):
    """quant: [B, S, D] f32; mask: [B, S] int32.  Returns (h, substituted)."""
    B, S, D = quant.shape
    n_layer, _, F = bert_params['w1'].shape
    if batch_tile is None:
        bt = B // 2 if (B % 2 == 0 and B >= 2) else B   # feed v7x's 2nd core
    else:
        bt = batch_tile
    assert B % bt == 0

    mask_q = mask.astype(jnp.int32).reshape(B, S, 1)    # substitution layout
    mask_k = mask.astype(jnp.int32).reshape(B, 1, S)    # attention-key layout

    weights = [bert_params[k].astype(jnp.bfloat16) if k in _BF16_WEIGHTS
               else bert_params[k] for k in _BERT_WEIGHT_ORDER]
    wspecs = [pl.BlockSpec((1,) + w.shape[1:], lambda i, l: (l, 0, 0))
              for w in weights]                         # per-layer streaming

    in_specs = [
        pl.BlockSpec((bt, S, D), lambda i, l: (i, 0, 0)),   # quant
        pl.BlockSpec((bt, S, 1), lambda i, l: (i, 0, 0)),   # mask_q
        pl.BlockSpec((bt, 1, S), lambda i, l: (i, 0, 0)),   # mask_k
        pl.BlockSpec((S, D), lambda i, l: (0, 0)),          # pad embedding
        pl.BlockSpec((S, D), lambda i, l: (0, 0)),          # positional emb
    ] + wspecs
    out_specs = (pl.BlockSpec((bt, S, D), lambda i, l: (i, 0, 0)),
                 pl.BlockSpec((bt, S, D), lambda i, l: (i, 0, 0)))
    out_shape = (jax.ShapeDtypeStruct((B, S, D), jnp.float32),
                 jax.ShapeDtypeStruct((B, S, D), jnp.float32))

    wbytes = sum(int(math.prod(w.shape[1:])) * w.dtype.itemsize
                 for w in weights)                      # one layer of weights
    est = 2 * wbytes + bt * S * (12 * D + 6 * F) * 4

    kernel = functools.partial(_bert_layer_kernel, num_heads=num_heads)
    return pl.pallas_call(
        kernel,
        out_shape=out_shape,
        grid=(B // bt, n_layer),
        in_specs=in_specs,
        out_specs=out_specs,
        scratch_shapes=[pltpu.VMEM((bt * S, D), jnp.float32)],   # resident h
        compiler_params=pltpu.CompilerParams(
            dimension_semantics=("parallel", "arbitrary"),
            vmem_limit_bytes=_vmem_limit(est)),
    )(quant, mask_q, mask_k, pad_emb, pe, *weights)


# ----------------------------------------------------------------------------
# Parameter construction (deterministic, synthetic) and forward glue
# ----------------------------------------------------------------------------
def sinusoidal_pe(n, d):
    # TODO(synk): original PositionalEmbedding source not provided; standard
    # sinusoidal PE over the domain positions is used.
    pos = jnp.arange(n, dtype=jnp.float32)[:, None]
    i = jnp.arange(0, d, 2, dtype=jnp.float32)[None, :]
    div = jnp.exp(-math.log(10000.0) * i / d)
    ang = pos * div
    pe = jnp.zeros((n, d), jnp.float32)
    pe = pe.at[:, 0::2].set(jnp.sin(ang))
    pe = pe.at[:, 1::2].set(jnp.cos(ang))
    return pe


def init_params(key, n_domain, n_items, codebook_sizes, D, n_layer, pad_ind,
                ff_mult=4):
    keys = iter(jax.random.split(key, 32))

    tables, offsets, off = [], [], 0
    for d in range(n_domain):
        tbl = 0.01 * jax.random.normal(next(keys), (n_items[d], D), jnp.float32)
        tbl = tbl.at[pad_ind].set(0.0)            # padding_idx row is zero
        tables.append(tbl)
        offsets.append(off)
        off += n_items[d]
    table_stacked = jnp.concatenate(tables, axis=0)          # [sum n_items, D]
    row_off = jnp.array(offsets, jnp.int32)

    K_max = max(codebook_sizes)
    cbs = []
    for d in range(n_domain):
        cb = 0.1 * jax.random.normal(next(keys), (codebook_sizes[d], D),
                                     jnp.float32)
        cbs.append(jnp.pad(cb, ((0, K_max - codebook_sizes[d]), (0, 0))))
    codebooks = jnp.stack(cbs, axis=0)                       # [n_domain, K, D]
    k_valid = jnp.array(codebook_sizes, jnp.int32)

    pad_embedding = 0.01 * jax.random.normal(next(keys), (n_domain, D),
                                             jnp.float32)    # std=0.01

    F = ff_mult * D

    def nrm(shape):
        return (0.02 * jax.random.normal(next(keys), shape)).astype(jnp.float32)

    wq, wk, wv = nrm((n_layer, D, D)), nrm((n_layer, D, D)), nrm((n_layer, D, D))
    bert = dict(
        ln1g=jnp.ones((n_layer, 1, D), jnp.float32),
        ln1b=jnp.zeros((n_layer, 1, D), jnp.float32),
        wqkv=jnp.concatenate([wq, wk, wv], axis=2),          # [n_layer, D, 3D]
        bqkv=jnp.zeros((n_layer, 1, 3 * D), jnp.float32),
        wo=nrm((n_layer, D, D)),
        bo=jnp.zeros((n_layer, 1, D), jnp.float32),
        ln2g=jnp.ones((n_layer, 1, D), jnp.float32),
        ln2b=jnp.zeros((n_layer, 1, D), jnp.float32),
        w1=nrm((n_layer, D, F)),
        b1=jnp.zeros((n_layer, 1, F), jnp.float32),
        w2=nrm((n_layer, F, D)),
        b2=jnp.zeros((n_layer, 1, D), jnp.float32),
    )
    return dict(table_stacked=table_stacked, row_off=row_off,
                codebooks_stacked=codebooks, k_valid=k_valid,
                pad_embedding=pad_embedding, bert=bert)


def ummd_vq_forward(user_id, x_list, mask, params, *, pad_ind, num_heads,
                    vq='True', batch_tile=None):
    """Returns (embeddings_recover [B,S,D], embeddings_org, embed_ids)."""
    del user_id  # user_embed_meth == 'item' -> the user id is unused
    n_domain = len(x_list)
    D = params['pad_embedding'].shape[1]

    # pad per-domain sequences to a common length; pads are excluded from the
    # mean and never DMA'd inside the kernel.
    L = max(int(x.shape[1]) for x in x_list)
    ids = jnp.stack([
        jnp.pad(x.astype(jnp.int32), ((0, 0), (0, L - x.shape[1])),
                constant_values=pad_ind) for x in x_list], axis=0)  # [S, B, L]

    emit_user = (vq != 'True')
    outs = multi_domain_vq(ids, params['table_stacked'], params['row_off'],
                           params['codebooks_stacked'], params['k_valid'],
                           pad_ind=pad_ind, emit_user=emit_user)
    quant = jnp.transpose(outs[0], (1, 0, 2))                # [B, S, D] (tiny)
    codes = jnp.transpose(outs[1][:, 0, :], (1, 0))          # [B, S]

    pe = sinusoidal_pe(n_domain, D)
    # pad-embedding substitution (mask==1) + PE add are fused into the BERT
    # kernel prologue; the substituted embeddings come back as emb_sub, which
    # is exactly the in-place-modified "org" tensor of the PyTorch code.
    h, emb_sub = bert_encode(quant, mask.astype(jnp.int32),
                             params['pad_embedding'], pe, params['bert'],
                             num_heads=num_heads, batch_tile=batch_tile)
    emb_org = emb_sub if vq == 'True' else jnp.transpose(outs[2], (1, 0, 2))

    # torch.squeeze on the final outputs, exactly as the reference forward().
    return h, jnp.squeeze(emb_org), jnp.squeeze(codes)


# ----------------------------------------------------------------------------
if __name__ == "__main__":
    B = 2
    n_domain = 3
    n_items = [20, 24, 28]
    codebook_sizes = [16, 16, 16]
    D = 32                       # latent_dims = [32, 32, 32]
    lengths = [8, 8, 8]          # hyper_args.length
    pad_ind = 0
    n_layer = 2                  # hyper_args.n_layer
    attn_heads = 2               # hyper_args.attn_heads

    key = jax.random.PRNGKey(0)
    kp, kx, _ = jax.random.split(key, 3)
    params = init_params(kp, n_domain, n_items, codebook_sizes, D, n_layer,
                         pad_ind)

    x_keys = jax.random.split(kx, n_domain)
    x_list = [jax.random.randint(x_keys[d], (B, lengths[d]), 0, n_items[d],
                                 dtype=jnp.int32) for d in range(n_domain)]
    mask = jnp.array([[0, 1, 0], [1, 0, 1]], dtype=jnp.int32)   # [B, n_domain]
    user_id = jnp.arange(B, dtype=jnp.int32)

    rec, org, ids_out = ummd_vq_forward(user_id, x_list, mask, params,
                                        pad_ind=pad_ind, num_heads=attn_heads,
                                        vq='True')
    jax.block_until_ready((rec, org, ids_out))

    assert rec.shape == (B, n_domain, D)
    assert org.shape == (B, n_domain, D)
    assert ids_out.shape == (B, n_domain)
    print("KERNEL_OK")
</pallas_src>

<mosaic_0001>
module attributes {stable_mosaic.version = 11 : i64} {
  func.func @_vq_gather_kernel(%arg0: i32, %arg1: memref<48xi32, #tpu.memory_space<smem>>, %arg2: memref<3xi32, #tpu.memory_space<smem>>, %arg3: memref<3xi32, #tpu.memory_space<smem>>, %arg4: memref<1x2x8xi32, #tpu.memory_space<vmem>>, %arg5: memref<72x32xf32, #tpu.memory_space<any>>, %arg6: memref<1x16x32xf32, #tpu.memory_space<vmem>>, %arg7: memref<1x2x32xf32, #tpu.memory_space<vmem>>, %arg8: memref<1x1x2xi32, #tpu.memory_space<vmem>>, %arg9: memref<16x32xf32, #tpu.memory_space<vmem>>, %arg10: memref<2x32xf32, #tpu.memory_space<vmem>>, %arg11: memref<2x!tpu.dma_semaphore, #tpu.memory_space<semaphore_mem>>) attributes {dimension_semantics = [#tpu.dimension_semantics<parallel>], iteration_bounds = array<i64: 3>, scalar_prefetch = 3 : i64, scratch_operands = 3 : i64, tpu.core_type = #tpu.core_type<tc>, window_params = [{transform_indices = @transform_0, window_bounds = array<i64: 1, 2, 8>}, {}, {transform_indices = @transform_2, window_bounds = array<i64: 1, 16, 32>}, {transform_indices = @transform_3, window_bounds = array<i64: 1, 2, 32>}, {transform_indices = @transform_4, window_bounds = array<i64: 1, 1, 2>}]} {
    %0 = arith.index_cast %arg0 : i32 to index
    %1 = memref.load %arg2[%0] : memref<3xi32, #tpu.memory_space<smem>>
    %c16_i32 = arith.constant 16 : i32
    %2 = arith.muli %arg0, %c16_i32 : i32
    %cst = arith.constant 0.000000e+00 : f32
    %3 = vector.broadcast %cst : f32 to vector<16x32xf32>
    %c0 = arith.constant 0 : index
    %c0_0 = arith.constant 0 : index
    %4 = vector.load %arg9[%c0, %c0_0] : memref<16x32xf32, #tpu.memory_space<vmem>>, vector<16x32xf32>
    tpu.vector_store %arg9[%c0, %c0_0], %3 {strides = array<i32>} : memref<16x32xf32, #tpu.memory_space<vmem>>, vector<16x32xf32>,
    %c0_i32 = arith.constant 0 : i32
    %5 = arith.addi %2, %c0_i32 : i32
    %c0_i32_1 = arith.constant 0 : i32
    %6 = arith.addi %5, %c0_i32_1 : i32
    %7 = arith.index_cast %6 : i32 to index
    %8 = memref.load %arg1[%7] : memref<48xi32, #tpu.memory_space<smem>>
    %c0_i32_2 = arith.constant 0 : i32
    %9 = arith.cmpi ne, %8, %c0_i32_2 : i32
    %10 = arith.extui %9 : i1 to i32
    %c0_i32_3 = arith.constant 0 : i32
    %11 = arith.cmpi ne, %10, %c0_i32_3 : i32
    scf.if %11 {
      %99 = arith.addi %1, %8 : i32
      %c0_i32_48 = arith.constant 0 : i32
      %c0_i32_49 = arith.constant 0 : i32
      %100 = tpu.memref_slice %arg5[%99, %c0_i32_49] : memref<72x32xf32, #tpu.memory_space<any>> -> memref<1x32xf32, #tpu.memory_space<any>>
      %c0_i32_50 = arith.constant 0 : i32
      %c0_i32_51 = arith.constant 0 : i32
      %101 = tpu.memref_slice %arg9[%c0_i32_50, %c0_i32_51] : memref<16x32xf32, #tpu.memory_space<vmem>> -> memref<1x32xf32, #tpu.memory_space<vmem>>
      %102 = tpu.memref_slice %arg11[%c0_i32_48] : memref<2x!tpu.dma_semaphore, #tpu.memory_space<semaphore_mem>> -> memref<1x!tpu.dma_semaphore, #tpu.memory_space<semaphore_mem>>
      %103 = tpu.memref_squeeze %102 : memref<1x!tpu.dma_semaphore, #tpu.memory_space<semaphore_mem>> -> memref<!tpu.dma_semaphore, #tpu.memory_space<semaphore_mem>>
      tpu.enqueue_dma source(%100 : memref<1x32xf32, #tpu.memory_space<any>>) target(%101 : memref<1x32xf32, #tpu.memory_space<vmem>>) target_semaphore(%103 : memref<!tpu.dma_semaphore, #tpu.memory_space<semaphore_mem>>)
    } else {
    }
    %c0_i32_4 = arith.constant 0 : i32
    %12 = arith.addi %2, %c0_i32_4 : i32
    %c1_i32 = arith.constant 1 : i32
    %13 = arith.addi %12, %c1_i32 : i32
    %14 = arith.index_cast %13 : i32 to index
    %15 = memref.load %arg1[%14] : memref<48xi32, #tpu.memory_space<smem>>
    %c0_i32_5 = arith.constant 0 : i32
    %16 = arith.cmpi ne, %15, %c0_i32_5 : i32
    %17 = arith.extui %16 : i1 to i32
    %c0_i32_6 = arith.constant 0 : i32
    %18 = arith.cmpi ne, %17, %c0_i32_6 : i32
    scf.if %18 {
      %99 = arith.addi %1, %15 : i32
      %c0_i32_48 = arith.constant 0 : i32
      %c0_i32_49 = arith.constant 0 : i32
      %100 = tpu.memref_slice %arg5[%99, %c0_i32_49] : memref<72x32xf32, #tpu.memory_space<any>> -> memref<1x32xf32, #tpu.memory_space<any>>
      %c1_i32_50 = arith.constant 1 : i32
      %c0_i32_51 = arith.constant 0 : i32
      %101 = tpu.memref_slice %arg9[%c1_i32_50, %c0_i32_51] : memref<16x32xf32, #tpu.memory_space<vmem>> -> memref<1x32xf32, #tpu.memory_space<vmem>>
      %102 = tpu.memref_slice %arg11[%c0_i32_48] : memref<2x!tpu.dma_semaphore, #tpu.memory_space<semaphore_mem>> -> memref<1x!tpu.dma_semaphore, #tpu.memory_space<semaphore_mem>>
      %103 = tpu.memref_squeeze %102 : memref<1x!tpu.dma_semaphore, #tpu.memory_space<semaphore_mem>> -> memref<!tpu.dma_semaphore, #tpu.memory_space<semaphore_mem>>
      tpu.enqueue_dma source(%100 : memref<1x32xf32, #tpu.memory_space<any>>) target(%101 : memref<1x32xf32, #tpu.memory_space<vmem>>) target_semaphore(%103 : memref<!tpu.dma_semaphore, #tpu.memory_space<semaphore_mem>>)
    } else {
    }
    %c0_i32_7 = arith.constant 0 : i32
    %19 = arith.addi %2, %c0_i32_7 : i32
    %c2_i32 = arith.constant 2 : i32
    %20 = arith.addi %19, %c2_i32 : i32
    %21 = arith.index_cast %20 : i32 to index
    %22 = memref.load %arg1[%21] : memref<48xi32, #tpu.memory_space<smem>>
    %c0_i32_8 = arith.constant 0 : i32
    %23 = arith.cmpi ne, %22, %c0_i32_8 : i32
    %24 = arith.extui %23 : i1 to i32
    %c0_i32_9 = arith.constant 0 : i32
    %25 = arith.cmpi ne, %24, %c0_i32_9 : i32
    scf.if %25 {
      %99 = arith.addi %1, %22 : i32
      %c0_i32_48 = arith.constant 0 : i32
      %c0_i32_49 = arith.constant 0 : i32
      %100 = tpu.memref_slice %arg5[%99, %c0_i32_49] : memref<72x32xf32, #tpu.memory_space<any>> -> memref<1x32xf32, #tpu.memory_space<any>>
      %c2_i32_50 = arith.constant 2 : i32
      %c0_i32_51 = arith.constant 0 : i32
      %101 = tpu.memref_slice %arg9[%c2_i32_50, %c0_i32_51] : memref<16x32xf32, #tpu.memory_space<vmem>> -> memref<1x32xf32, #tpu.memory_space<vmem>>
      %102 = tpu.memref_slice %arg11[%c0_i32_48] : memref<2x!tpu.dma_semaphore, #tpu.memory_space<semaphore_mem>> -> memref<1x!tpu.dma_semaphore, #tpu.memory_space<semaphore_mem>>
      %103 = tpu.memref_squeeze %102 : memref<1x!tpu.dma_semaphore, #tpu.memory_space<semaphore_mem>> -> memref<!tpu.dma_semaphore, #tpu.memory_space<semaphore_mem>>
      tpu.enqueue_dma source(%100 : memref<1x32xf32, #tpu.memory_space<any>>) target(%101 : memref<1x32xf32, #tpu.memory_space<vmem>>) target_semaphore(%103 : memref<!tpu.dma_semaphore, #tpu.memory_space<semaphore_mem>>)
    } else {
    }
    %c0_i32_10 = arith.constant 0 : i32
    %26 = arith.addi %2, %c0_i32_10 : i32
    %c3_i32 = arith.constant 3 : i32
    %27 = arith.addi %26, %c3_i32 : i32
    %28 = arith.index_cast %27 : i32 to index
    %29 = memref.load %arg1[%28] : memref<48xi32, #tpu.memory_space<smem>>
    %c0_i32_11 = arith.constant 0 : i32
    %30 = arith.cmpi ne, %29, %c0_i32_11 : i32
    %31 = arith.extui %30 : i1 to i32
    %c0_i32_12 = arith.constant 0 : i32
    %32 = arith.cmpi ne, %31, %c0_i32_12 : i32
    scf.if %32 {
      %99 = arith.addi %1, %29 : i32
      %c0_i32_48 = arith.constant 0 : i32
      %c0_i32_49 = arith.constant 0 : i32
      %100 = tpu.memref_slice %arg5[%99, %c0_i32_49] : memref<72x32xf32, #tpu.memory_space<any>> -> memref<1x32xf32, #tpu.memory_space<any>>
      %c3_i32_50 = arith.constant 3 : i32
      %c0_i32_51 = arith.constant 0 : i32
      %101 = tpu.memref_slice %arg9[%c3_i32_50, %c0_i32_51] : memref<16x32xf32, #tpu.memory_space<vmem>> -> memref<1x32xf32, #tpu.memory_space<vmem>>
      %102 = tpu.memref_slice %arg11[%c0_i32_48] : memref<2x!tpu.dma_semaphore, #tpu.memory_space<semaphore_mem>> -> memref<1x!tpu.dma_semaphore, #tpu.memory_space<semaphore_mem>>
      %103 = tpu.memref_squeeze %102 : memref<1x!tpu.dma_semaphore, #tpu.memory_space<semaphore_mem>> -> memref<!tpu.dma_semaphore, #tpu.memory_space<semaphore_mem>>
      tpu.enqueue_dma source(%100 : memref<1x32xf32, #tpu.memory_space<any>>) target(%101 : memref<1x32xf32, #tpu.memory_space<vmem>>) target_semaphore(%103 : memref<!tpu.dma_semaphore, #tpu.memory_space<semaphore_mem>>)
    } else {
    }
    %c0_i32_13 = arith.constant 0 : i32
    %33 = arith.addi %2, %c0_i32_13 : i32
    %c4_i32 = arith.constant 4 : i32
    %34 = arith.addi %33, %c4_i32 : i32
    %35 = arith.index_cast %34 : i32 to index
    %36 = memref.load %arg1[%35] : memref<48xi32, #tpu.memory_space<smem>>
    %c0_i32_14 = arith.constant 0 : i32
    %37 = arith.cmpi ne, %36, %c0_i32_14 : i32
    %38 = arith.extui %37 : i1 to i32
    %c0_i32_15 = arith.constant 0 : i32
    %39 = arith.cmpi ne, %38, %c0_i32_15 : i32
    scf.if %39 {
      %99 = arith.addi %1, %36 : i32
      %c0_i32_48 = arith.constant 0 : i32
      %c0_i32_49 = arith.constant 0 : i32
      %100 = tpu.memref_slice %arg5[%99, %c0_i32_49] : memref<72x32xf32, #tpu.memory_space<any>> -> memref<1x32xf32, #tpu.memory_space<any>>
      %c4_i32_50 = arith.constant 4 : i32
      %c0_i32_51 = arith.constant 0 : i32
      %101 = tpu.memref_slice %arg9[%c4_i32_50, %c0_i32_51] : memref<16x32xf32, #tpu.memory_space<vmem>> -> memref<1x32xf32, #tpu.memory_space<vmem>>
      %102 = tpu.memref_slice %arg11[%c0_i32_48] : memref<2x!tpu.dma_semaphore, #tpu.memory_space<semaphore_mem>> -> memref<1x!tpu.dma_semaphore, #tpu.memory_space<semaphore_mem>>
      %103 = tpu.memref_squeeze %102 : memref<1x!tpu.dma_semaphore, #tpu.memory_space<semaphore_mem>> -> memref<!tpu.dma_semaphore, #tpu.memory_space<semaphore_mem>>
      tpu.enqueue_dma source(%100 : memref<1x32xf32, #tpu.memory_space<any>>) target(%101 : memref<1x32xf32, #tpu.memory_space<vmem>>) target_semaphore(%103 : memref<!tpu.dma_semaphore, #tpu.memory_space<semaphore_mem>>)
    } else {
    }
    %c0_i32_16 = arith.constant 0 : i32
    %40 = arith.addi %2, %c0_i32_16 : i32
    %c5_i32 = arith.constant 5 : i32
    %41 = arith.addi %40, %c5_i32 : i32
    %42 = arith.index_cast %41 : i32 to index
    %43 = memref.load %arg1[%42] : memref<48xi32, #tpu.memory_space<smem>>
    %c0_i32_17 = arith.constant 0 : i32
    %44 = arith.cmpi ne, %43, %c0_i32_17 : i32
    %45 = arith.extui %44 : i1 to i32
    %c0_i32_18 = arith.constant 0 : i32
    %46 = arith.cmpi ne, %45, %c0_i32_18 : i32
    scf.if %46 {
      %99 = arith.addi %1, %43 : i32
      %c0_i32_48 = arith.constant 0 : i32
      %c0_i32_49 = arith.constant 0 : i32
      %100 = tpu.memref_slice %arg5[%99, %c0_i32_49] : memref<72x32xf32, #tpu.memory_space<any>> -> memref<1x32xf32, #tpu.memory_space<any>>
      %c5_i32_50 = arith.constant 5 : i32
      %c0_i32_51 = arith.constant 0 : i32
      %101 = tpu.memref_slice %arg9[%c5_i32_50, %c0_i32_51] : memref<16x32xf32, #tpu.memory_space<vmem>> -> memref<1x32xf32, #tpu.memory_space<vmem>>
      %102 = tpu.memref_slice %arg11[%c0_i32_48] : memref<2x!tpu.dma_semaphore, #tpu.memory_space<semaphore_mem>> -> memref<1x!tpu.dma_semaphore, #tpu.memory_space<semaphore_mem>>
      %103 = tpu.memref_squeeze %102 : memref<1x!tpu.dma_semaphore, #tpu.memory_space<semaphore_mem>> -> memref<!tpu.dma_semaphore, #tpu.memory_space<semaphore_mem>>
      tpu.enqueue_dma source(%100 : memref<1x32xf32, #tpu.memory_space<any>>) target(%101 : memref<1x32xf32, #tpu.memory_space<vmem>>) target_semaphore(%103 : memref<!tpu.dma_semaphore, #tpu.memory_space<semaphore_mem>>)
    } else {
    }
    %c0_i32_19 = arith.constant 0 : i32
    %47 = arith.addi %2, %c0_i32_19 : i32
    %c6_i32 = arith.constant 6 : i32
    %48 = arith.addi %47, %c6_i32 : i32
    %49 = arith.index_cast %48 : i32 to index
    %50 = memref.load %arg1[%49] : memref<48xi32, #tpu.memory_space<smem>>
    %c0_i32_20 = arith.constant 0 : i32
    %51 = arith.cmpi ne, %50, %c0_i32_20 : i32
    %52 = arith.extui %51 : i1 to i32
    %c0_i32_21 = arith.constant 0 : i32
    %53 = arith.cmpi ne, %52, %c0_i32_21 : i32
    scf.if %53 {
      %99 = arith.addi %1, %50 : i32
      %c0_i32_48 = arith.constant 0 : i32
      %c0_i32_49 = arith.constant 0 : i32
      %100 = tpu.memref_slice %arg5[%99, %c0_i32_49] : memref<72x32xf32, #tpu.memory_space<any>> -> memref<1x32xf32, #tpu.memory_space<any>>
      %c6_i32_50 = arith.constant 6 : i32
      %c0_i32_51 = arith.constant 0 : i32
      %101 = tpu.memref_slice %arg9[%c6_i32_50, %c0_i32_51] : memref<16x32xf32, #tpu.memory_space<vmem>> -> memref<1x32xf32, #tpu.memory_space<vmem>>
      %102 = tpu.memref_slice %arg11[%c0_i32_48] : memref<2x!tpu.dma_semaphore, #tpu.memory_space<semaphore_mem>> -> memref<1x!tpu.dma_semaphore, #tpu.memory_space<semaphore_mem>>
      %103 = tpu.memref_squeeze %102 : memref<1x!tpu.dma_semaphore, #tpu.memory_space<semaphore_mem>> -> memref<!tpu.dma_semaphore, #tpu.memory_space<semaphore_mem>>
      tpu.enqueue_dma source(%100 : memref<1x32xf32, #tpu.memory_space<any>>) target(%101 : memref<1x32xf32, #tpu.memory_space<vmem>>) target_semaphore(%103 : memref<!tpu.dma_semaphore, #tpu.memory_space<semaphore_mem>>)
    } else {
    }
    %c0_i32_22 = arith.constant 0 : i32
    %54 = arith.addi %2, %c0_i32_22 : i32
    %c7_i32 = arith.constant 7 : i32
    %55 = arith.addi %54, %c7_i32 : i32
    %56 = arith.index_cast %55 : i32 to index
    %57 = memref.load %arg1[%56] : memref<48xi32, #tpu.memory_space<smem>>
    %c0_i32_23 = arith.constant 0 : i32
    %58 = arith.cmpi ne, %57, %c0_i32_23 : i32
    %59 = arith.extui %58 : i1 to i32
    %c0_i32_24 = arith.constant 0 : i32
    %60 = arith.cmpi ne, %59, %c0_i32_24 : i32
    scf.if %60 {
      %99 = arith.addi %1, %57 : i32
      %c0_i32_48 = arith.constant 0 : i32
      %c0_i32_49 = arith.constant 0 : i32
      %100 = tpu.memref_slice %arg5[%99, %c0_i32_49] : memref<72x32xf32, #tpu.memory_space<any>> -> memref<1x32xf32, #tpu.memory_space<any>>
      %c7_i32_50 = arith.constant 7 : i32
      %c0_i32_51 = arith.constant 0 : i32
      %101 = tpu.memref_slice %arg9[%c7_i32_50, %c0_i32_51] : memref<16x32xf32, #tpu.memory_space<vmem>> -> memref<1x32xf32, #tpu.memory_space<vmem>>
      %102 = tpu.memref_slice %arg11[%c0_i32_48] : memref<2x!tpu.dma_semaphore, #tpu.memory_space<semaphore_mem>> -> memref<1x!tpu.dma_semaphore, #tpu.memory_space<semaphore_mem>>
      %103 = tpu.memref_squeeze %102 : memref<1x!tpu.dma_semaphore, #tpu.memory_space<semaphore_mem>> -> memref<!tpu.dma_semaphore, #tpu.memory_space<semaphore_mem>>
      tpu.enqueue_dma source(%100 : memref<1x32xf32, #tpu.memory_space<any>>) target(%101 : memref<1x32xf32, #tpu.memory_space<vmem>>) target_semaphore(%103 : memref<!tpu.dma_semaphore, #tpu.memory_space<semaphore_mem>>)
    } else {
    }
    %c0_i32_25 = arith.constant 0 : i32
    %c2_i32_26 = arith.constant 2 : i32
    %61 = arith.addi %c0_i32_25, %c2_i32_26 : i32
    %c1_i32_27 = arith.constant 1 : i32
    scf.for %arg12 = %c0_i32_25 to %61 step %c1_i32_27  : i32 {
      %c1_i32_48 = arith.constant 1 : i32
      %99 = arith.muli %arg12, %c1_i32_48 : i32
      %c0_i32_49 = arith.constant 0 : i32
      %100 = arith.addi %c0_i32_49, %99 : i32
      %c2_i32_50 = arith.constant 2 : i32
      %c0_i32_51 = arith.constant 0 : i32
      %101 = arith.cmpi eq, %c2_i32_50, %c0_i32_51 : i32
      %c1_i32_52 = arith.constant 1 : i32
      %102 = arith.select %101, %c1_i32_52, %c2_i32_50 : i32
      %103 = arith.remsi %100, %102 : i32
      %c0_i32_53 = arith.constant 0 : i32
      %104 = arith.cmpi ne, %103, %c0_i32_53 : i32
      %c0_i32_54 = arith.constant 0 : i32
      %105 = arith.cmpi slt, %103, %c0_i32_54 : i32
      %c0_i32_55 = arith.constant 0 : i32
      %106 = arith.cmpi slt, %102, %c0_i32_55 : i32
      %107 = arith.xori %105, %106 : i1
      %108 = arith.andi %107, %104 : i1
      %109 = arith.addi %103, %102 : i32
      %110 = arith.select %108, %109, %103 : i32
      %c1_i32_56 = arith.constant 1 : i32
      %111 = arith.addi %100, %c1_i32_56 : i32
      %c2_i32_57 = arith.constant 2 : i32
      %112 = arith.cmpi slt, %111, %c2_i32_57 : i32
      %113 = arith.extui %112 : i1 to i32
      %c0_i32_58 = arith.constant 0 : i32
      %114 = arith.cmpi ne, %113, %c0_i32_58 : i32
      scf.if %114 {
        %c1_i32_99 = arith.constant 1 : i32
        %198 = arith.addi %100, %c1_i32_99 : i32
        %c1_i32_100 = arith.constant 1 : i32
        %199 = arith.subi %c1_i32_100, %110 : i32
        %c8_i32_101 = arith.constant 8 : i32
        %200 = arith.muli %198, %c8_i32_101 : i32
        %201 = arith.addi %2, %200 : i32
        %c0_i32_102 = arith.constant 0 : i32
        %202 = arith.addi %201, %c0_i32_102 : i32
        %203 = arith.index_cast %202 : i32 to index
        %204 = memref.load %arg1[%203] : memref<48xi32, #tpu.memory_space<smem>>
        %c0_i32_103 = arith.constant 0 : i32
        %205 = arith.cmpi ne, %204, %c0_i32_103 : i32
        %206 = arith.extui %205 : i1 to i32
        %c0_i32_104 = arith.constant 0 : i32
        %207 = arith.cmpi ne, %206, %c0_i32_104 : i32
        scf.if %207 {
          %264 = arith.addi %1, %204 : i32
          %c8_i32_133 = arith.constant 8 : i32
          %265 = arith.muli %199, %c8_i32_133 : i32
          %c0_i32_134 = arith.constant 0 : i32
          %266 = arith.addi %265, %c0_i32_134 : i32
          %c0_i32_135 = arith.constant 0 : i32
          %267 = tpu.memref_slice %arg5[%264, %c0_i32_135] : memref<72x32xf32, #tpu.memory_space<any>> -> memref<1x32xf32, #tpu.memory_space<any>>
          %c0_i32_136 = arith.constant 0 : i32
          %268 = tpu.memref_slice %arg9[%266, %c0_i32_136] : memref<16x32xf32, #tpu.memory_space<vmem>> -> memref<1x32xf32, #tpu.memory_space<vmem>>
          %269 = tpu.memref_slice %arg11[%199] : memref<2x!tpu.dma_semaphore, #tpu.memory_space<semaphore_mem>> -> memref<1x!tpu.dma_semaphore, #tpu.memory_space<semaphore_mem>>
          %270 = tpu.memref_squeeze %269 : memref<1x!tpu.dma_semaphore, #tpu.memory_space<semaphore_mem>> -> memref<!tpu.dma_semaphore, #tpu.memory_space<semaphore_mem>>
          tpu.enqueue_dma source(%267 : memref<1x32xf32, #tpu.memory_space<any>>) target(%268 : memref<1x32xf32, #tpu.memory_space<vmem>>) target_semaphore(%270 : memref<!tpu.dma_semaphore, #tpu.memory_space<semaphore_mem>>)
        } else {
        }
        %c8_i32_105 = arith.constant 8 : i32
        %208 = arith.muli %198, %c8_i32_105 : i32
        %209 = arith.addi %2, %208 : i32
        %c1_i32_106 = arith.constant 1 : i32
        %210 = arith.addi %209, %c1_i32_106 : i32
        %211 = arith.index_cast %210 : i32 to index
        %212 = memref.load %arg1[%211] : memref<48xi32, #tpu.memory_space<smem>>
        %c0_i32_107 = arith.constant 0 : i32
        %213 = arith.cmpi ne, %212, %c0_i32_107 : i32
        %214 = arith.extui %213 : i1 to i32
        %c0_i32_108 = arith.constant 0 : i32
        %215 = arith.cmpi ne, %214, %c0_i32_108 : i32
        scf.if %215 {
          %264 = arith.addi %1, %212 : i32
          %c8_i32_133 = arith.constant 8 : i32
          %265 = arith.muli %199, %c8_i32_133 : i32
          %c1_i32_134 = arith.constant 1 : i32
          %266 = arith.addi %265, %c1_i32_134 : i32
          %c0_i32_135 = arith.constant 0 : i32
          %267 = tpu.memref_slice %arg5[%264, %c0_i32_135] : memref<72x32xf32, #tpu.memory_space<any>> -> memref<1x32xf32, #tpu.memory_space<any>>
          %c0_i32_136 = arith.constant 0 : i32
          %268 = tpu.memref_slice %arg9[%266, %c0_i32_136] : memref<16x32xf32, #tpu.memory_space<vmem>> -> memref<1x32xf32, #tpu.memory_space<vmem>>
          %269 = tpu.memref_slice %arg11[%199] : memref<2x!tpu.dma_semaphore, #tpu.memory_space<semaphore_mem>> -> memref<1x!tpu.dma_semaphore, #tpu.memory_space<semaphore_mem>>
          %270 = tpu.memref_squeeze %269 : memref<1x!tpu.dma_semaphore, #tpu.memory_space<semaphore_mem>> -> memref<!tpu.dma_semaphore, #tpu.memory_space<semaphore_mem>>
          tpu.enqueue_dma source(%267 : memref<1x32xf32, #tpu.memory_space<any>>) target(%268 : memref<1x32xf32, #tpu.memory_space<vmem>>) target_semaphore(%270 : memref<!tpu.dma_semaphore, #tpu.memory_space<semaphore_mem>>)
        } else {
        }
        %c8_i32_109 = arith.constant 8 : i32
        %216 = arith.muli %198, %c8_i32_109 : i32
        %217 = arith.addi %2, %216 : i32
        %c2_i32_110 = arith.constant 2 : i32
        %218 = arith.addi %217, %c2_i32_110 : i32
        %219 = arith.index_cast %218 : i32 to index
        %220 = memref.load %arg1[%219] : memref<48xi32, #tpu.memory_space<smem>>
        %c0_i32_111 = arith.constant 0 : i32
        %221 = arith.cmpi ne, %220, %c0_i32_111 : i32
        %222 = arith.extui %221 : i1 to i32
        %c0_i32_112 = arith.constant 0 : i32
        %223 = arith.cmpi ne, %222, %c0_i32_112 : i32
        scf.if %223 {
          %264 = arith.addi %1, %220 : i32
          %c8_i32_133 = arith.constant 8 : i32
          %265 = arith.muli %199, %c8_i32_133 : i32
          %c2_i32_134 = arith.constant 2 : i32
          %266 = arith.addi %265, %c2_i32_134 : i32
          %c0_i32_135 = arith.constant 0 : i32
          %267 = tpu.memref_slice %arg5[%264, %c0_i32_135] : memref<72x32xf32, #tpu.memory_space<any>> -> memref<1x32xf32, #tpu.memory_space<any>>
          %c0_i32_136 = arith.constant 0 : i32
          %268 = tpu.memref_slice %arg9[%266, %c0_i32_136] : memref<16x32xf32, #tpu.memory_space<vmem>> -> memref<1x32xf32, #tpu.memory_space<vmem>>
          %269 = tpu.memref_slice %arg11[%199] : memref<2x!tpu.dma_semaphore, #tpu.memory_space<semaphore_mem>> -> memref<1x!tpu.dma_semaphore, #tpu.memory_space<semaphore_mem>>
          %270 = tpu.memref_squeeze %269 : memref<1x!tpu.dma_semaphore, #tpu.memory_space<semaphore_mem>> -> memref<!tpu.dma_semaphore, #tpu.memory_space<semaphore_mem>>
          tpu.enqueue_dma source(%267 : memref<1x32xf32, #tpu.memory_space<any>>) target(%268 : memref<1x32xf32, #tpu.memory_space<vmem>>) target_semaphore(%270 : memref<!tpu.dma_semaphore, #tpu.memory_space<semaphore_mem>>)
        } else {
        }
        %c8_i32_113 = arith.constant 8 : i32
        %224 = arith.muli %198, %c8_i32_113 : i32
        %225 = arith.addi %2, %224 : i32
        %c3_i32_114 = arith.constant 3 : i32
        %226 = arith.addi %225, %c3_i32_114 : i32
        %227 = arith.index_cast %226 : i32 to index
        %228 = memref.load %arg1[%227] : memref<48xi32, #tpu.memory_space<smem>>
        %c0_i32_115 = arith.constant 0 : i32
        %229 = arith.cmpi ne, %228, %c0_i32_115 : i32
        %230 = arith.extui %229 : i1 to i32
        %c0_i32_116 = arith.constant 0 : i32
        %231 = arith.cmpi ne, %230, %c0_i32_116 : i32
        scf.if %231 {
          %264 = arith.addi %1, %228 : i32
          %c8_i32_133 = arith.constant 8 : i32
          %265 = arith.muli %199, %c8_i32_133 : i32
          %c3_i32_134 = arith.constant 3 : i32
          %266 = arith.addi %265, %c3_i32_134 : i32
          %c0_i32_135 = arith.constant 0 : i32
          %267 = tpu.memref_slice %arg5[%264, %c0_i32_135] : memref<72x32xf32, #tpu.memory_space<any>> -> memref<1x32xf32, #tpu.memory_space<any>>
          %c0_i32_136 = arith.constant 0 : i32
          %268 = tpu.memref_slice %arg9[%266, %c0_i32_136] : memref<16x32xf32, #tpu.memory_space<vmem>> -> memref<1x32xf32, #tpu.memory_space<vmem>>
          %269 = tpu.memref_slice %arg11[%199] : memref<2x!tpu.dma_semaphore, #tpu.memory_space<semaphore_mem>> -> memref<1x!tpu.dma_semaphore, #tpu.memory_space<semaphore_mem>>
          %270 = tpu.memref_squeeze %269 : memref<1x!tpu.dma_semaphore, #tpu.memory_space<semaphore_mem>> -> memref<!tpu.dma_semaphore, #tpu.memory_space<semaphore_mem>>
          tpu.enqueue_dma source(%267 : memref<1x32xf32, #tpu.memory_space<any>>) target(%268 : memref<1x32xf32, #tpu.memory_space<vmem>>) target_semaphore(%270 : memref<!tpu.dma_semaphore, #tpu.memory_space<semaphore_mem>>)
        } else {
        }
        %c8_i32_117 = arith.constant 8 : i32
        %232 = arith.muli %198, %c8_i32_117 : i32
        %233 = arith.addi %2, %232 : i32
        %c4_i32_118 = arith.constant 4 : i32
        %234 = arith.addi %233, %c4_i32_118 : i32
        %235 = arith.index_cast %234 : i32 to index
        %236 = memref.load %arg1[%235] : memref<48xi32, #tpu.memory_space<smem>>
        %c0_i32_119 = arith.constant 0 : i32
        %237 = arith.cmpi ne, %236, %c0_i32_119 : i32
        %238 = arith.extui %237 : i1 to i32
        %c0_i32_120 = arith.constant 0 : i32
        %239 = arith.cmpi ne, %238, %c0_i32_120 : i32
        scf.if %239 {
          %264 = arith.addi %1, %236 : i32
          %c8_i32_133 = arith.constant 8 : i32
          %265 = arith.muli %199, %c8_i32_133 : i32
          %c4_i32_134 = arith.constant 4 : i32
          %266 = arith.addi %265, %c4_i32_134 : i32
          %c0_i32_135 = arith.constant 0 : i32
          %267 = tpu.memref_slice %arg5[%264, %c0_i32_135] : memref<72x32xf32, #tpu.memory_space<any>> -> memref<1x32xf32, #tpu.memory_space<any>>
          %c0_i32_136 = arith.constant 0 : i32
          %268 = tpu.memref_slice %arg9[%266, %c0_i32_136] : memref<16x32xf32, #tpu.memory_space<vmem>> -> memref<1x32xf32, #tpu.memory_space<vmem>>
          %269 = tpu.memref_slice %arg11[%199] : memref<2x!tpu.dma_semaphore, #tpu.memory_space<semaphore_mem>> -> memref<1x!tpu.dma_semaphore, #tpu.memory_space<semaphore_mem>>
          %270 = tpu.memref_squeeze %269 : memref<1x!tpu.dma_semaphore, #tpu.memory_space<semaphore_mem>> -> memref<!tpu.dma_semaphore, #tpu.memory_space<semaphore_mem>>
          tpu.enqueue_dma source(%267 : memref<1x32xf32, #tpu.memory_space<any>>) target(%268 : memref<1x32xf32, #tpu.memory_space<vmem>>) target_semaphore(%270 : memref<!tpu.dma_semaphore, #tpu.memory_space<semaphore_mem>>)
        } else {
        }
        %c8_i32_121 = arith.constant 8 : i32
        %240 = arith.muli %198, %c8_i32_121 : i32
        %241 = arith.addi %2, %240 : i32
        %c5_i32_122 = arith.constant 5 : i32
        %242 = arith.addi %241, %c5_i32_122 : i32
        %243 = arith.index_cast %242 : i32 to index
        %244 = memref.load %arg1[%243] : memref<48xi32, #tpu.memory_space<smem>>
        %c0_i32_123 = arith.constant 0 : i32
        %245 = arith.cmpi ne, %244, %c0_i32_123 : i32
        %246 = arith.extui %245 : i1 to i32
        %c0_i32_124 = arith.constant 0 : i32
        %247 = arith.cmpi ne, %246, %c0_i32_124 : i32
        scf.if %247 {
          %264 = arith.addi %1, %244 : i32
          %c8_i32_133 = arith.constant 8 : i32
          %265 = arith.muli %199, %c8_i32_133 : i32
          %c5_i32_134 = arith.constant 5 : i32
          %266 = arith.addi %265, %c5_i32_134 : i32
          %c0_i32_135 = arith.constant 0 : i32
          %267 = tpu.memref_slice %arg5[%264, %c0_i32_135] : memref<72x32xf32, #tpu.memory_space<any>> -> memref<1x32xf32, #tpu.memory_space<any>>
          %c0_i32_136 = arith.constant 0 : i32
          %268 = tpu.memref_slice %arg9[%266, %c0_i32_136] : memref<16x32xf32, #tpu.memory_space<vmem>> -> memref<1x32xf32, #tpu.memory_space<vmem>>
          %269 = tpu.memref_slice %arg11[%199] : memref<2x!tpu.dma_semaphore, #tpu.memory_space<semaphore_mem>> -> memref<1x!tpu.dma_semaphore, #tpu.memory_space<semaphore_mem>>
          %270 = tpu.memref_squeeze %269 : memref<1x!tpu.dma_semaphore, #tpu.memory_space<semaphore_mem>> -> memref<!tpu.dma_semaphore, #tpu.memory_space<semaphore_mem>>
          tpu.enqueue_dma source(%267 : memref<1x32xf32, #tpu.memory_space<any>>) target(%268 : memref<1x32xf32, #tpu.memory_space<vmem>>) target_semaphore(%270 : memref<!tpu.dma_semaphore, #tpu.memory_space<semaphore_mem>>)
        } else {
        }
        %c8_i32_125 = arith.constant 8 : i32
        %248 = arith.muli %198, %c8_i32_125 : i32
        %249 = arith.addi %2, %248 : i32
        %c6_i32_126 = arith.constant 6 : i32
        %250 = arith.addi %249, %c6_i32_126 : i32
        %251 = arith.index_cast %250 : i32 to index
        %252 = memref.load %arg1[%251] : memref<48xi32, #tpu.memory_space<smem>>
        %c0_i32_127 = arith.constant 0 : i32
        %253 = arith.cmpi ne, %252, %c0_i32_127 : i32
        %254 = arith.extui %253 : i1 to i32
        %c0_i32_128 = arith.constant 0 : i32
        %255 = arith.cmpi ne, %254, %c0_i32_128 : i32
        scf.if %255 {
          %264 = arith.addi %1, %252 : i32
          %c8_i32_133 = arith.constant 8 : i32
          %265 = arith.muli %199, %c8_i32_133 : i32
          %c6_i32_134 = arith.constant 6 : i32
          %266 = arith.addi %265, %c6_i32_134 : i32
          %c0_i32_135 = arith.constant 0 : i32
          %267 = tpu.memref_slice %arg5[%264, %c0_i32_135] : memref<72x32xf32, #tpu.memory_space<any>> -> memref<1x32xf32, #tpu.memory_space<any>>
          %c0_i32_136 = arith.constant 0 : i32
          %268 = tpu.memref_slice %arg9[%266, %c0_i32_136] : memref<16x32xf32, #tpu.memory_space<vmem>> -> memref<1x32xf32, #tpu.memory_space<vmem>>
          %269 = tpu.memref_slice %arg11[%199] : memref<2x!tpu.dma_semaphore, #tpu.memory_space<semaphore_mem>> -> memref<1x!tpu.dma_semaphore, #tpu.memory_space<semaphore_mem>>
          %270 = tpu.memref_squeeze %269 : memref<1x!tpu.dma_semaphore, #tpu.memory_space<semaphore_mem>> -> memref<!tpu.dma_semaphore, #tpu.memory_space<semaphore_mem>>
          tpu.enqueue_dma source(%267 : memref<1x32xf32, #tpu.memory_space<any>>) target(%268 : memref<1x32xf32, #tpu.memory_space<vmem>>) target_semaphore(%270 : memref<!tpu.dma_semaphore, #tpu.memory_space<semaphore_mem>>)
        } else {
        }
        %c8_i32_129 = arith.constant 8 : i32
        %256 = arith.muli %198, %c8_i32_129 : i32
        %257 = arith.addi %2, %256 : i32
        %c7_i32_130 = arith.constant 7 : i32
        %258 = arith.addi %257, %c7_i32_130 : i32
        %259 = arith.index_cast %258 : i32 to index
        %260 = memref.load %arg1[%259] : memref<48xi32, #tpu.memory_space<smem>>
        %c0_i32_131 = arith.constant 0 : i32
        %261 = arith.cmpi ne, %260, %c0_i32_131 : i32
        %262 = arith.extui %261 : i1 to i32
        %c0_i32_132 = arith.constant 0 : i32
        %263 = arith.cmpi ne, %262, %c0_i32_132 : i32
        scf.if %263 {
          %264 = arith.addi %1, %260 : i32
          %c8_i32_133 = arith.constant 8 : i32
          %265 = arith.muli %199, %c8_i32_133 : i32
          %c7_i32_134 = arith.constant 7 : i32
          %266 = arith.addi %265, %c7_i32_134 : i32
          %c0_i32_135 = arith.constant 0 : i32
          %267 = tpu.memref_slice %arg5[%264, %c0_i32_135] : memref<72x32xf32, #tpu.memory_space<any>> -> memref<1x32xf32, #tpu.memory_space<any>>
          %c0_i32_136 = arith.constant 0 : i32
          %268 = tpu.memref_slice %arg9[%266, %c0_i32_136] : memref<16x32xf32, #tpu.memory_space<vmem>> -> memref<1x32xf32, #tpu.memory_space<vmem>>
          %269 = tpu.memref_slice %arg11[%199] : memref<2x!tpu.dma_semaphore, #tpu.memory_space<semaphore_mem>> -> memref<1x!tpu.dma_semaphore, #tpu.memory_space<semaphore_mem>>
          %270 = tpu.memref_squeeze %269 : memref<1x!tpu.dma_semaphore, #tpu.memory_space<semaphore_mem>> -> memref<!tpu.dma_semaphore, #tpu.memory_space<semaphore_mem>>
          tpu.enqueue_dma source(%267 : memref<1x32xf32, #tpu.memory_space<any>>) target(%268 : memref<1x32xf32, #tpu.memory_space<vmem>>) target_semaphore(%270 : memref<!tpu.dma_semaphore, #tpu.memory_space<semaphore_mem>>)
        } else {
        }
      } else {
      }
      %c8_i32 = arith.constant 8 : i32
      %115 = arith.muli %100, %c8_i32 : i32
      %116 = arith.addi %2, %115 : i32
      %c0_i32_59 = arith.constant 0 : i32
      %117 = arith.addi %116, %c0_i32_59 : i32
      %118 = arith.index_cast %117 : i32 to index
      %119 = memref.load %arg1[%118] : memref<48xi32, #tpu.memory_space<smem>>
      %c0_i32_60 = arith.constant 0 : i32
      %120 = arith.cmpi ne, %119, %c0_i32_60 : i32
      %121 = arith.extui %120 : i1 to i32
      %c0_i32_61 = arith.constant 0 : i32
      %122 = arith.cmpi ne, %121, %c0_i32_61 : i32
      scf.if %122 {
        %198 = arith.addi %1, %119 : i32
        %c8_i32_99 = arith.constant 8 : i32
        %199 = arith.muli %110, %c8_i32_99 : i32
        %c0_i32_100 = arith.constant 0 : i32
        %200 = arith.addi %199, %c0_i32_100 : i32
        %c0_i32_101 = arith.constant 0 : i32
        %201 = tpu.memref_slice %arg5[%198, %c0_i32_101] : memref<72x32xf32, #tpu.memory_space<any>> -> memref<1x32xf32, #tpu.memory_space<any>>
        %c0_i32_102 = arith.constant 0 : i32
        %202 = tpu.memref_slice %arg9[%200, %c0_i32_102] : memref<16x32xf32, #tpu.memory_space<vmem>> -> memref<1x32xf32, #tpu.memory_space<vmem>>
        %203 = tpu.memref_slice %arg11[%110] : memref<2x!tpu.dma_semaphore, #tpu.memory_space<semaphore_mem>> -> memref<1x!tpu.dma_semaphore, #tpu.memory_space<semaphore_mem>>
        %204 = tpu.memref_squeeze %203 : memref<1x!tpu.dma_semaphore, #tpu.memory_space<semaphore_mem>> -> memref<!tpu.dma_semaphore, #tpu.memory_space<semaphore_mem>>
        tpu.wait_dma2 semaphore(%204 : memref<!tpu.dma_semaphore, #tpu.memory_space<semaphore_mem>>) src(%201 : memref<1x32xf32, #tpu.memory_space<any>>) dst(%202 : memref<1x32xf32, #tpu.memory_space<vmem>>)
      } else {
      }
      %c8_i32_62 = arith.constant 8 : i32
      %123 = arith.muli %100, %c8_i32_62 : i32
      %124 = arith.addi %2, %123 : i32
      %c1_i32_63 = arith.constant 1 : i32
      %125 = arith.addi %124, %c1_i32_63 : i32
      %126 = arith.index_cast %125 : i32 to index
      %127 = memref.load %arg1[%126] : memref<48xi32, #tpu.memory_space<smem>>
      %c0_i32_64 = arith.constant 0 : i32
      %128 = arith.cmpi ne, %127, %c0_i32_64 : i32
      %129 = arith.extui %128 : i1 to i32
      %c0_i32_65 = arith.constant 0 : i32
      %130 = arith.cmpi ne, %129, %c0_i32_65 : i32
      scf.if %130 {
        %198 = arith.addi %1, %127 : i32
        %c8_i32_99 = arith.constant 8 : i32
        %199 = arith.muli %110, %c8_i32_99 : i32
        %c1_i32_100 = arith.constant 1 : i32
        %200 = arith.addi %199, %c1_i32_100 : i32
        %c0_i32_101 = arith.constant 0 : i32
        %201 = tpu.memref_slice %arg5[%198, %c0_i32_101] : memref<72x32xf32, #tpu.memory_space<any>> -> memref<1x32xf32, #tpu.memory_space<any>>
        %c0_i32_102 = arith.constant 0 : i32
        %202 = tpu.memref_slice %arg9[%200, %c0_i32_102] : memref<16x32xf32, #tpu.memory_space<vmem>> -> memref<1x32xf32, #tpu.memory_space<vmem>>
        %203 = tpu.memref_slice %arg11[%110] : memref<2x!tpu.dma_semaphore, #tpu.memory_space<semaphore_mem>> -> memref<1x!tpu.dma_semaphore, #tpu.memory_space<semaphore_mem>>
        %204 = tpu.memref_squeeze %203 : memref<1x!tpu.dma_semaphore, #tpu.memory_space<semaphore_mem>> -> memref<!tpu.dma_semaphore, #tpu.memory_space<semaphore_mem>>
        tpu.wait_dma2 semaphore(%204 : memref<!tpu.dma_semaphore, #tpu.memory_space<semaphore_mem>>) src(%201 : memref<1x32xf32, #tpu.memory_space<any>>) dst(%202 : memref<1x32xf32, #tpu.memory_space<vmem>>)
      } else {
      }
      %c8_i32_66 = arith.constant 8 : i32
      %131 = arith.muli %100, %c8_i32_66 : i32
      %132 = arith.addi %2, %131 : i32
      %c2_i32_67 = arith.constant 2 : i32
      %133 = arith.addi %132, %c2_i32_67 : i32
      %134 = arith.index_cast %133 : i32 to index
      %135 = memref.load %arg1[%134] : memref<48xi32, #tpu.memory_space<smem>>
      %c0_i32_68 = arith.constant 0 : i32
      %136 = arith.cmpi ne, %135, %c0_i32_68 : i32
      %137 = arith.extui %136 : i1 to i32
      %c0_i32_69 = arith.constant 0 : i32
      %138 = arith.cmpi ne, %137, %c0_i32_69 : i32
      scf.if %138 {
        %198 = arith.addi %1, %135 : i32
        %c8_i32_99 = arith.constant 8 : i32
        %199 = arith.muli %110, %c8_i32_99 : i32
        %c2_i32_100 = arith.constant 2 : i32
        %200 = arith.addi %199, %c2_i32_100 : i32
        %c0_i32_101 = arith.constant 0 : i32
        %201 = tpu.memref_slice %arg5[%198, %c0_i32_101] : memref<72x32xf32, #tpu.memory_space<any>> -> memref<1x32xf32, #tpu.memory_space<any>>
        %c0_i32_102 = arith.constant 0 : i32
        %202 = tpu.memref_slice %arg9[%200, %c0_i32_102] : memref<16x32xf32, #tpu.memory_space<vmem>> -> memref<1x32xf32, #tpu.memory_space<vmem>>
        %203 = tpu.memref_slice %arg11[%110] : memref<2x!tpu.dma_semaphore, #tpu.memory_space<semaphore_mem>> -> memref<1x!tpu.dma_semaphore, #tpu.memory_space<semaphore_mem>>
        %204 = tpu.memref_squeeze %203 : memref<1x!tpu.dma_semaphore, #tpu.memory_space<semaphore_mem>> -> memref<!tpu.dma_semaphore, #tpu.memory_space<semaphore_mem>>
        tpu.wait_dma2 semaphore(%204 : memref<!tpu.dma_semaphore, #tpu.memory_space<semaphore_mem>>) src(%201 : memref<1x32xf32, #tpu.memory_space<any>>) dst(%202 : memref<1x32xf32, #tpu.memory_space<vmem>>)
      } else {
      }
      %c8_i32_70 = arith.constant 8 : i32
      %139 = arith.muli %100, %c8_i32_70 : i32
      %140 = arith.addi %2, %139 : i32
      %c3_i32_71 = arith.constant 3 : i32
      %141 = arith.addi %140, %c3_i32_71 : i32
      %142 = arith.index_cast %141 : i32 to index
      %143 = memref.load %arg1[%142] : memref<48xi32, #tpu.memory_space<smem>>
      %c0_i32_72 = arith.constant 0 : i32
      %144 = arith.cmpi ne, %143, %c0_i32_72 : i32
      %145 = arith.extui %144 : i1 to i32
      %c0_i32_73 = arith.constant 0 : i32
      %146 = arith.cmpi ne, %145, %c0_i32_73 : i32
      scf.if %146 {
        %198 = arith.addi %1, %143 : i32
        %c8_i32_99 = arith.constant 8 : i32
        %199 = arith.muli %110, %c8_i32_99 : i32
        %c3_i32_100 = arith.constant 3 : i32
        %200 = arith.addi %199, %c3_i32_100 : i32
        %c0_i32_101 = arith.constant 0 : i32
        %201 = tpu.memref_slice %arg5[%198, %c0_i32_101] : memref<72x32xf32, #tpu.memory_space<any>> -> memref<1x32xf32, #tpu.memory_space<any>>
        %c0_i32_102 = arith.constant 0 : i32
        %202 = tpu.memref_slice %arg9[%200, %c0_i32_102] : memref<16x32xf32, #tpu.memory_space<vmem>> -> memref<1x32xf32, #tpu.memory_space<vmem>>
        %203 = tpu.memref_slice %arg11[%110] : memref<2x!tpu.dma_semaphore, #tpu.memory_space<semaphore_mem>> -> memref<1x!tpu.dma_semaphore, #tpu.memory_space<semaphore_mem>>
        %204 = tpu.memref_squeeze %203 : memref<1x!tpu.dma_semaphore, #tpu.memory_space<semaphore_mem>> -> memref<!tpu.dma_semaphore, #tpu.memory_space<semaphore_mem>>
        tpu.wait_dma2 semaphore(%204 : memref<!tpu.dma_semaphore, #tpu.memory_space<semaphore_mem>>) src(%201 : memref<1x32xf32, #tpu.memory_space<any>>) dst(%202 : memref<1x32xf32, #tpu.memory_space<vmem>>)
      } else {
      }
      %c8_i32_74 = arith.constant 8 : i32
      %147 = arith.muli %100, %c8_i32_74 : i32
      %148 = arith.addi %2, %147 : i32
      %c4_i32_75 = arith.constant 4 : i32
      %149 = arith.addi %148, %c4_i32_75 : i32
      %150 = arith.index_cast %149 : i32 to index
      %151 = memref.load %arg1[%150] : memref<48xi32, #tpu.memory_space<smem>>
      %c0_i32_76 = arith.constant 0 : i32
      %152 = arith.cmpi ne, %151, %c0_i32_76 : i32
      %153 = arith.extui %152 : i1 to i32
      %c0_i32_77 = arith.constant 0 : i32
      %154 = arith.cmpi ne, %153, %c0_i32_77 : i32
      scf.if %154 {
        %198 = arith.addi %1, %151 : i32
        %c8_i32_99 = arith.constant 8 : i32
        %199 = arith.muli %110, %c8_i32_99 : i32
        %c4_i32_100 = arith.constant 4 : i32
        %200 = arith.addi %199, %c4_i32_100 : i32
        %c0_i32_101 = arith.constant 0 : i32
        %201 = tpu.memref_slice %arg5[%198, %c0_i32_101] : memref<72x32xf32, #tpu.memory_space<any>> -> memref<1x32xf32, #tpu.memory_space<any>>
        %c0_i32_102 = arith.constant 0 : i32
        %202 = tpu.memref_slice %arg9[%200, %c0_i32_102] : memref<16x32xf32, #tpu.memory_space<vmem>> -> memref<1x32xf32, #tpu.memory_space<vmem>>
        %203 = tpu.memref_slice %arg11[%110] : memref<2x!tpu.dma_semaphore, #tpu.memory_space<semaphore_mem>> -> memref<1x!tpu.dma_semaphore, #tpu.memory_space<semaphore_mem>>
        %204 = tpu.memref_squeeze %203 : memref<1x!tpu.dma_semaphore, #tpu.memory_space<semaphore_mem>> -> memref<!tpu.dma_semaphore, #tpu.memory_space<semaphore_mem>>
        tpu.wait_dma2 semaphore(%204 : memref<!tpu.dma_semaphore, #tpu.memory_space<semaphore_mem>>) src(%201 : memref<1x32xf32, #tpu.memory_space<any>>) dst(%202 : memref<1x32xf32, #tpu.memory_space<vmem>>)
      } else {
      }
      %c8_i32_78 = arith.constant 8 : i32
      %155 = arith.muli %100, %c8_i32_78 : i32
      %156 = arith.addi %2, %155 : i32
      %c5_i32_79 = arith.constant 5 : i32
      %157 = arith.addi %156, %c5_i32_79 : i32
      %158 = arith.index_cast %157 : i32 to index
      %159 = memref.load %arg1[%158] : memref<48xi32, #tpu.memory_space<smem>>
      %c0_i32_80 = arith.constant 0 : i32
      %160 = arith.cmpi ne, %159, %c0_i32_80 : i32
      %161 = arith.extui %160 : i1 to i32
      %c0_i32_81 = arith.constant 0 : i32
      %162 = arith.cmpi ne, %161, %c0_i32_81 : i32
      scf.if %162 {
        %198 = arith.addi %1, %159 : i32
        %c8_i32_99 = arith.constant 8 : i32
        %199 = arith.muli %110, %c8_i32_99 : i32
        %c5_i32_100 = arith.constant 5 : i32
        %200 = arith.addi %199, %c5_i32_100 : i32
        %c0_i32_101 = arith.constant 0 : i32
        %201 = tpu.memref_slice %arg5[%198, %c0_i32_101] : memref<72x32xf32, #tpu.memory_space<any>> -> memref<1x32xf32, #tpu.memory_space<any>>
        %c0_i32_102 = arith.constant 0 : i32
        %202 = tpu.memref_slice %arg9[%200, %c0_i32_102] : memref<16x32xf32, #tpu.memory_space<vmem>> -> memref<1x32xf32, #tpu.memory_space<vmem>>
        %203 = tpu.memref_slice %arg11[%110] : memref<2x!tpu.dma_semaphore, #tpu.memory_space<semaphore_mem>> -> memref<1x!tpu.dma_semaphore, #tpu.memory_space<semaphore_mem>>
        %204 = tpu.memref_squeeze %203 : memref<1x!tpu.dma_semaphore, #tpu.memory_space<semaphore_mem>> -> memref<!tpu.dma_semaphore, #tpu.memory_space<semaphore_mem>>
        tpu.wait_dma2 semaphore(%204 : memref<!tpu.dma_semaphore, #tpu.memory_space<semaphore_mem>>) src(%201 : memref<1x32xf32, #tpu.memory_space<any>>) dst(%202 : memref<1x32xf32, #tpu.memory_space<vmem>>)
      } else {
      }
      %c8_i32_82 = arith.constant 8 : i32
      %163 = arith.muli %100, %c8_i32_82 : i32
      %164 = arith.addi %2, %163 : i32
      %c6_i32_83 = arith.constant 6 : i32
      %165 = arith.addi %164, %c6_i32_83 : i32
      %166 = arith.index_cast %165 : i32 to index
      %167 = memref.load %arg1[%166] : memref<48xi32, #tpu.memory_space<smem>>
      %c0_i32_84 = arith.constant 0 : i32
      %168 = arith.cmpi ne, %167, %c0_i32_84 : i32
      %169 = arith.extui %168 : i1 to i32
      %c0_i32_85 = arith.constant 0 : i32
      %170 = arith.cmpi ne, %169, %c0_i32_85 : i32
      scf.if %170 {
        %198 = arith.addi %1, %167 : i32
        %c8_i32_99 = arith.constant 8 : i32
        %199 = arith.muli %110, %c8_i32_99 : i32
        %c6_i32_100 = arith.constant 6 : i32
        %200 = arith.addi %199, %c6_i32_100 : i32
        %c0_i32_101 = arith.constant 0 : i32
        %201 = tpu.memref_slice %arg5[%198, %c0_i32_101] : memref<72x32xf32, #tpu.memory_space<any>> -> memref<1x32xf32, #tpu.memory_space<any>>
        %c0_i32_102 = arith.constant 0 : i32
        %202 = tpu.memref_slice %arg9[%200, %c0_i32_102] : memref<16x32xf32, #tpu.memory_space<vmem>> -> memref<1x32xf32, #tpu.memory_space<vmem>>
        %203 = tpu.memref_slice %arg11[%110] : memref<2x!tpu.dma_semaphore, #tpu.memory_space<semaphore_mem>> -> memref<1x!tpu.dma_semaphore, #tpu.memory_space<semaphore_mem>>
        %204 = tpu.memref_squeeze %203 : memref<1x!tpu.dma_semaphore, #tpu.memory_space<semaphore_mem>> -> memref<!tpu.dma_semaphore, #tpu.memory_space<semaphore_mem>>
        tpu.wait_dma2 semaphore(%204 : memref<!tpu.dma_semaphore, #tpu.memory_space<semaphore_mem>>) src(%201 : memref<1x32xf32, #tpu.memory_space<any>>) dst(%202 : memref<1x32xf32, #tpu.memory_space<vmem>>)
      } else {
      }
      %c8_i32_86 = arith.constant 8 : i32
      %171 = arith.muli %100, %c8_i32_86 : i32
      %172 = arith.addi %2, %171 : i32
      %c7_i32_87 = arith.constant 7 : i32
      %173 = arith.addi %172, %c7_i32_87 : i32
      %174 = arith.index_cast %173 : i32 to index
      %175 = memref.load %arg1[%174] : memref<48xi32, #tpu.memory_space<smem>>
      %c0_i32_88 = arith.constant 0 : i32
      %176 = arith.cmpi ne, %175, %c0_i32_88 : i32
      %177 = arith.extui %176 : i1 to i32
      %c0_i32_89 = arith.constant 0 : i32
      %178 = arith.cmpi ne, %177, %c0_i32_89 : i32
      scf.if %178 {
        %198 = arith.addi %1, %175 : i32
        %c8_i32_99 = arith.constant 8 : i32
        %199 = arith.muli %110, %c8_i32_99 : i32
        %c7_i32_100 = arith.constant 7 : i32
        %200 = arith.addi %199, %c7_i32_100 : i32
        %c0_i32_101 = arith.constant 0 : i32
        %201 = tpu.memref_slice %arg5[%198, %c0_i32_101] : memref<72x32xf32, #tpu.memory_space<any>> -> memref<1x32xf32, #tpu.memory_space<any>>
        %c0_i32_102 = arith.constant 0 : i32
        %202 = tpu.memref_slice %arg9[%200, %c0_i32_102] : memref<16x32xf32, #tpu.memory_space<vmem>> -> memref<1x32xf32, #tpu.memory_space<vmem>>
        %203 = tpu.memref_slice %arg11[%110] : memref<2x!tpu.dma_semaphore, #tpu.memory_space<semaphore_mem>> -> memref<1x!tpu.dma_semaphore, #tpu.memory_space<semaphore_mem>>
        %204 = tpu.memref_squeeze %203 : memref<1x!tpu.dma_semaphore, #tpu.memory_space<semaphore_mem>> -> memref<!tpu.dma_semaphore, #tpu.memory_space<semaphore_mem>>
        tpu.wait_dma2 semaphore(%204 : memref<!tpu.dma_semaphore, #tpu.memory_space<semaphore_mem>>) src(%201 : memref<1x32xf32, #tpu.memory_space<any>>) dst(%202 : memref<1x32xf32, #tpu.memory_space<vmem>>)
      } else {
      }
      %c8_i32_90 = arith.constant 8 : i32
      %179 = arith.muli %110, %c8_i32_90 : i32
      %180 = arith.index_cast %179 : i32 to index
      %c0_91 = arith.constant 0 : index
      %181 = vector.load %arg9[%180, %c0_91] : memref<16x32xf32, #tpu.memory_space<vmem>>, vector<8x32xf32>
      %c0_92 = arith.constant 0 : index
      %182 = arith.index_cast %100 : i32 to index
      %c0_93 = arith.constant 0 : index
      %183 = vector.load %arg4[%c0_92, %182, %c0_93] : memref<1x2x8xi32, #tpu.memory_space<vmem>>, vector<1x1x8xi32>
      %184 = vector.shape_cast %183 : vector<1x1x8xi32> to vector<1x8xi32>
      %c0_i32_94 = arith.constant 0 : i32
      %185 = vector.broadcast %c0_i32_94 : i32 to vector<1x8xi32>
      %186 = arith.cmpi ne, %184, %185 : vector<1x8xi32>
      %187 = arith.extui %186 : vector<1x8xi1> to vector<1x8xi32>
      %188 = arith.sitofp %187 : vector<1x8xi32> to vector<1x8xf32>
      %cst_95 = arith.constant dense<0.000000e+00> : vector<1x32xf32>
      %189 = tpu.matmul %188, %181, %cst_95 {dimension_numbers = #tpu.dot_dimension_numbers<[1], [0], [0], [1], [0, 0, 1, 1], [], []>} : vector<1x8xf32>, vector<8x32xf32>, vector<1x32xf32> -> vector<1x32xf32>
      %cst_96 = arith.constant dense<0.000000e+00> : vector<1xf32>
      %190 = vector.multi_reduction <add>, %188, %cst_96 [1] : vector<1x8xf32> to vector<1xf32>
      %191 = vector.shape_cast %190 : vector<1xf32> to vector<1x1xf32>
      %cst_97 = arith.constant 1.000000e+00 : f32
      %192 = vector.broadcast %cst_97 : f32 to vector<1x1xf32>
      %193 = arith.maximumf %191, %192 : vector<1x1xf32>
      %194 = vector.broadcast %193 : vector<1x1xf32> to vector<1x32xf32>
      %195 = arith.divf %189, %194 : vector<1x32xf32>
      %196 = arith.index_cast %100 : i32 to index
      %c0_98 = arith.constant 0 : index
      %197 = vector.load %arg10[%196, %c0_98] : memref<2x32xf32, #tpu.memory_space<vmem>>, vector<1x32xf32>
      tpu.vector_store %arg10[%196, %c0_98], %195 {strides = array<i32>} : memref<2x32xf32, #tpu.memory_space<vmem>>, vector<1x32xf32>,
    }
    %c2_i32_28 = arith.constant 2 : i32
    %c0_29 = arith.constant 0 : index
    %c0_30 = arith.constant 0 : index
    %62 = vector.load %arg10[%c0_29, %c0_30] : memref<2x32xf32, #tpu.memory_space<vmem>>, vector<2x32xf32>
    %c0_31 = arith.constant 0 : index
    %c0_32 = arith.constant 0 : index
    %c0_33 = arith.constant 0 : index
    %63 = vector.load %arg6[%c0_31, %c0_32, %c0_33] : memref<1x16x32xf32, #tpu.memory_space<vmem>>, vector<1x16x32xf32>
    %64 = vector.shape_cast %63 : vector<1x16x32xf32> to vector<16x32xf32>
    %cst_34 = arith.constant dense<0.000000e+00> : vector<16x2xf32>
    %65 = tpu.matmul %64, %62, %cst_34 {dimension_numbers = #tpu.dot_dimension_numbers<[1], [1], [0], [0], [0, 0, 1, 0], [], []>} : vector<16x32xf32>, vector<2x32xf32>, vector<16x2xf32> -> vector<16x2xf32>
    %66 = arith.mulf %64, %64 : vector<16x32xf32>
    %cst_35 = arith.constant dense<0.000000e+00> : vector<16xf32>
    %67 = vector.multi_reduction <add>, %66, %cst_35 [1] : vector<16x32xf32> to vector<16xf32>
    %68 = vector.shape_cast %67 : vector<16xf32> to vector<16x1xf32>
    %cst_36 = arith.constant 2.000000e+00 : f32
    %69 = vector.broadcast %cst_36 : f32 to vector<16x2xf32>
    %70 = arith.mulf %69, %65 : vector<16x2xf32>
    %71 = vector.broadcast %68 : vector<16x1xf32> to vector<16x2xf32>
    %72 = arith.subf %71, %70 : vector<16x2xf32>
    %73 = tpu.iota {dimensions = array<i32: 0>} : vector<16x2xi32>
    %74 = arith.index_cast %arg0 : i32 to index
    %75 = memref.load %arg3[%74] : memref<3xi32, #tpu.memory_space<smem>>
    %76 = vector.broadcast %75 : i32 to vector<16x2xi32>
    %77 = arith.cmpi slt, %73, %76 : vector<16x2xi32>
    %cst_37 = arith.constant 1.000000e+30 : f32
    %78 = vector.broadcast %cst_37 : f32 to vector<16x2xf32>
    %79 = arith.select %77, %72, %78 : vector<16x2xi1>, vector<16x2xf32>
    %cst_38 = arith.constant dense<0x7F800000> : vector<2xf32>
    %80 = vector.multi_reduction <minimumf>, %79, %cst_38 [0] : vector<16x2xf32> to vector<2xf32>
    %81 = vector.shape_cast %80 : vector<2xf32> to vector<1x2xf32>
    %82 = vector.broadcast %81 : vector<1x2xf32> to vector<16x2xf32>
    %83 = arith.cmpf oeq, %79, %82 : vector<16x2xf32>
    %c16_i32_39 = arith.constant 16 : i32
    %84 = vector.broadcast %c16_i32_39 : i32 to vector<16x2xi32>
    %85 = arith.select %83, %73, %84 : vector<16x2xi1>, vector<16x2xi32>
    %cst_40 = arith.constant dense<2147483647> : vector<2xi32>
    %86 = vector.multi_reduction <minsi>, %85, %cst_40 [0] : vector<16x2xi32> to vector<2xi32>
    %87 = vector.shape_cast %86 : vector<2xi32> to vector<1x2xi32>
    %88 = vector.broadcast %87 : vector<1x2xi32> to vector<16x2xi32>
    %89 = arith.cmpi eq, %73, %88 : vector<16x2xi32>
    %90 = arith.extui %89 : vector<16x2xi1> to vector<16x2xi32>
    %91 = arith.sitofp %90 : vector<16x2xi32> to vector<16x2xf32>
    %cst_41 = arith.constant dense<0.000000e+00> : vector<2x32xf32>
    %92 = tpu.matmul %91, %64, %cst_41 {dimension_numbers = #tpu.dot_dimension_numbers<[0], [0], [1], [1], [0, 1, 1, 1], [], []>} : vector<16x2xf32>, vector<16x32xf32>, vector<2x32xf32> -> vector<2x32xf32>
    %c0_42 = arith.constant 0 : index
    %c0_43 = arith.constant 0 : index
    %c0_44 = arith.constant 0 : index
    %93 = vector.load %arg7[%c0_42, %c0_43, %c0_44] : memref<1x2x32xf32, #tpu.memory_space<vmem>>, vector<1x2x32xf32>
    %94 = vector.shape_cast %93 : vector<1x2x32xf32> to vector<2x32xf32>
    %95 = vector.shape_cast %92 : vector<2x32xf32> to vector<1x2x32xf32>
    tpu.vector_store %arg7[%c0_42, %c0_43, %c0_44], %95 {strides = array<i32>} : memref<1x2x32xf32, #tpu.memory_space<vmem>>, vector<1x2x32xf32>,
    %c0_45 = arith.constant 0 : index
    %c0_46 = arith.constant 0 : index
    %c0_47 = arith.constant 0 : index
    %96 = vector.load %arg8[%c0_45, %c0_46, %c0_47] : memref<1x1x2xi32, #tpu.memory_space<vmem>>, vector<1x1x2xi32>
    %97 = vector.shape_cast %96 : vector<1x1x2xi32> to vector<1x2xi32>
    %98 = vector.shape_cast %87 : vector<1x2xi32> to vector<1x1x2xi32>
    tpu.vector_store %arg8[%c0_45, %c0_46, %c0_47], %98 {strides = array<i32>} : memref<1x1x2xi32, #tpu.memory_space<vmem>>, vector<1x1x2xi32>,
    return
  }
  func.func @transform_0(%arg0: i32, %arg1: memref<48xi32, #tpu.memory_space<smem>>, %arg2: memref<3xi32, #tpu.memory_space<smem>>, %arg3: memref<3xi32, #tpu.memory_space<smem>>) -> (i32, i32, i32) {
    %c0_i32 = arith.constant 0 : i32
    %c0_i32_0 = arith.constant 0 : i32
    %c0_i32_1 = arith.constant 0 : i32
    return %arg0, %c0_i32, %c0_i32_0 : i32, i32, i32
  }
  func.func @transform_2(%arg0: i32, %arg1: memref<48xi32, #tpu.memory_space<smem>>, %arg2: memref<3xi32, #tpu.memory_space<smem>>, %arg3: memref<3xi32, #tpu.memory_space<smem>>) -> (i32, i32, i32) {
    %c0_i32 = arith.constant 0 : i32
    %c0_i32_0 = arith.constant 0 : i32
    %c0_i32_1 = arith.constant 0 : i32
    return %arg0, %c0_i32, %c0_i32_0 : i32, i32, i32
  }
  func.func @transform_3(%arg0: i32, %arg1: memref<48xi32, #tpu.memory_space<smem>>, %arg2: memref<3xi32, #tpu.memory_space<smem>>, %arg3: memref<3xi32, #tpu.memory_space<smem>>) -> (i32, i32, i32) {
    %c0_i32 = arith.constant 0 : i32
    %c0_i32_0 = arith.constant 0 : i32
    %c0_i32_1 = arith.constant 0 : i32
    return %arg0, %c0_i32, %c0_i32_0 : i32, i32, i32
  }
  func.func @transform_4(%arg0: i32, %arg1: memref<48xi32, #tpu.memory_space<smem>>, %arg2: memref<3xi32, #tpu.memory_space<smem>>, %arg3: memref<3xi32, #tpu.memory_space<smem>>) -> (i32, i32, i32) {
    %c0_i32 = arith.constant 0 : i32
    %c0_i32_0 = arith.constant 0 : i32
    %c0_i32_1 = arith.constant 0 : i32
    return %arg0, %c0_i32, %c0_i32_0 : i32, i32, i32
  }
}

</mosaic_0001>

<llo_original>
// kernel: tpu_custom_call.1
$region0: #{tpu_custom_call.1}
  #allocation0 [shape = 'u32[]', space=smem, size = 0x4, offset = 0x4, fixed_abs, tag = 'smem constant byte address 0x4 - core index']
  #allocation1 [shape = 'u32[144,128]{1,0:T(1,128)}', space=vmem, size = 0x12000, scoped, tag = 'internal scratch']
  #allocation2 [shape = 'f32[16,32]{1,0:T(8,128)}', space=vmem, size = 0x2000, scoped, tag = 'scratch operand']
  #allocation3 [shape = 'f32[2,32]{1,0:T(2,128)}', space=vmem, size = 0x400, scoped, tag = 'scratch operand']
  #allocation4 [shape = 's32[2]{0}', space=sflag, size = 0x8, scoped, tag = 'scratch operand']
  #allocation5 [shape = 's32[1]{0}', space=sflag, size = 0x4, scoped, tag = 'scoped memory for tpu_custom_call.1']
  #allocation6 [shape = 'u8[512]{0}', space=smem, size = 0x200, scoped, tag = 'prefetched SMEM operand 0']
  #allocation7 [shape = 'u8[512]{0}', space=smem, size = 0x200, scoped, tag = 'prefetched SMEM operand 1']
  #allocation8 [shape = 'u8[512]{0}', space=smem, size = 0x200, scoped, tag = 'prefetched SMEM operand 2']
  #allocation11 [shape = 's32[]', space=sflag, size = 0x4, offset = 0, fixed_abs, tag = 'sflag constant byte address 0x0 - dummy sync flag']
  #allocation12 [shape = 's32[]', space=sflag, size = 0x4, offset = 0, fixed_abs, tag = 'sflag constant byte address 0x0 - dummy sync flag']
  #allocation13 [shape = 's32[]', space=sflag, size = 0x4, offset = 0, fixed_abs, tag = 'sflag constant byte address 0x0 - dummy sync flag']
  #allocation14 [shape = 's32[]', space=sflag, size = 0x4, offset = 0, fixed_abs, tag = 'sflag constant byte address 0x0 - dummy sync flag']
  #allocation15 [shape = 's32[]', space=sflag, size = 0x4, offset = 0, fixed_abs, tag = 'sflag constant byte address 0x0 - dummy sync flag']
  #allocation16 [shape = 's32[]', space=sflag, size = 0x4, offset = 0, fixed_abs, tag = 'sflag constant byte address 0x0 - dummy sync flag']
  #allocation17 [shape = 's32[]', space=sflag, size = 0x4, offset = 0, fixed_abs, tag = 'sflag constant byte address 0x0 - dummy sync flag']
  #allocation18 [shape = 's32[]', space=sflag, size = 0x4, offset = 0, fixed_abs, tag = 'sflag constant byte address 0x0 - dummy sync flag']
  #allocation19 [shape = 's32[]', space=sflag, size = 0x4, offset = 0, fixed_abs, tag = 'sflag constant byte address 0x0 - dummy sync flag']
  #allocation20 [shape = 's32[]', space=sflag, size = 0x4, offset = 0, fixed_abs, tag = 'sflag constant byte address 0x0 - dummy sync flag']
  #allocation21 [shape = 's32[]', space=sflag, size = 0x4, offset = 0, fixed_abs, tag = 'sflag constant byte address 0x0 - dummy sync flag']
  #allocation22 [shape = 's32[]', space=sflag, size = 0x4, offset = 0, fixed_abs, tag = 'sflag constant byte address 0x0 - dummy sync flag']
  #allocation23 [shape = 's32[]', space=sflag, size = 0x4, offset = 0, fixed_abs, tag = 'sflag constant byte address 0x0 - dummy sync flag']
  #allocation24 [shape = 's32[]', space=sflag, size = 0x4, offset = 0, fixed_abs, tag = 'sflag constant byte address 0x0 - dummy sync flag']
  #allocation25 [shape = 's32[]', space=sflag, size = 0x4, offset = 0, fixed_abs, tag = 'sflag constant byte address 0x0 - dummy sync flag']
  #allocation26 [shape = 's32[]', space=sflag, size = 0x4, offset = 0, fixed_abs, tag = 'sflag constant byte address 0x0 - dummy sync flag']
  %s0 = inlined_call_operand.vmem [shape: s32[48], index: 0, kind: input, shape index: {}]
  %s1 = inlined_call_operand.vmem [shape: s32[3], index: 1, kind: input, shape index: {}]
  %s2 = inlined_call_operand.vmem [shape: s32[3], index: 2, kind: input, shape index: {}]
  %s3 = inlined_call_operand.vmem [shape: s32[3,2,8], index: 3, kind: input, shape index: {}]
  %s4 = inlined_call_operand.vmem [shape: f32[72,32], index: 4, kind: input, shape index: {}]
  %s5 = inlined_call_operand.vmem [shape: f32[3,16,32], index: 5, kind: input, shape index: {}]
  %s6 = inlined_call_operand.hbm [shape: f32[3,2,32], index: 6, kind: output, shape index: {0}]
  %s7 = inlined_call_operand.vmem [shape: s32[3,1,2], index: 7, kind: output, shape index: {1}]
  %8 = xla_tuple %s6, %s7
  %s9 = sld [smem:[#allocation0]]
  $region636: #{tpu_custom_call.1} parent=0
    _
  %s11 = ssub.s32 1, %s9
  %s12 = scalar_select 0, %s11, %s9
  %s13 = sshll.u32 %s0, 4
  %s14 = int_to_ptr.vmem [resolvable:$true] %s13
  %16 = dma.vmem_to_smem %s14, 16, [#allocation6], [#allocation5]
  %s17 = sshll.u32 %s1, 4
  %s18 = int_to_ptr.vmem [resolvable:$true] %s17
  %20 = dma.vmem_to_smem %s18, 16, [#allocation7], [#allocation5]
  %s21 = sshll.u32 %s2, 4
  %s22 = int_to_ptr.vmem [resolvable:$true] %s21
  %24 = dma.vmem_to_smem %s22, 16, [#allocation8], [#allocation5]
  %25 = dma.done [#allocation5], 48
  %26 = sfence
  $region1: #{tpu_custom_call.1} parent=0
    #allocation9 [shape = 'u8[2048]{0}', space=vmem, size = 0x800, scoped, tag = 'output window, operand 0']
    #allocation10 [shape = 's32[2]{0}', space=sflag, size = 0x8, scoped, tag = 'scoped memory for tpu_custom_call.1']
    %27 = vsyncpa [#allocation10], 0
    %s28 = scalar_lea.sflag [#allocation10], 1
    %29 = vsyncpa %s28, 0
    loop: start=0, step=1, limit=5
    $region2: #{tpu_custom_call.1} parent=1 // loop_pre_header
      _
    $region3: #{tpu_custom_call.1} parent=1 // loop_header
      %s31 = sphi 0, %s35
      %p32 = scmp.ge.s32.totalorder %s31, 5
      %s41 = sphi 0, %s43
      %s44 = sphi 0, %s41
      %s45 = sphi 0, %s44
      %s61 = sphi 0, %s45
      %s67 = sphi 0, %s69
      %s70 = sphi 0, %s67
      %s71 = sphi 0, %s70
      %s87 = sphi 0, %s71
      %s93 = sphi 0, %s95
      %s96 = sphi 0, %s93
      %s97 = sphi 0, %s96
      %s113 = sphi 0, %s97
      %s119 = sphi 0, %s121
      %s122 = sphi 0, %s119
      %s123 = sphi 0, %s122
      %s139 = sphi 0, %s123
    $region4: #{tpu_custom_call.1} parent=1 // loop_header_branch
      %34 = sbr.rel (%p32) target = $region8
    $region5: #{tpu_custom_call.1} parent=1 // loop_body
      %s36 = ssub.s32 %s31, 1
      %s37 = ssub.s32 %s31, 2
      %s38 = sadd.s32 %s31, 1
      %s39 = ssub.s32 %s31, %s38
      %p40 = scmp.eq.s32.totalorder %s39, 0
      %s42 = sadd.s32 %s41, 1
      %s43 = scalar_select %p40, %s41, %s42
      %p46 = pneg %p40
      %p47 = scmp.eq.s32.totalorder %s31, 2
      %p48 = por %p46, %p47
      %p49 = scmp.ne.s32.totalorder %s41, %s44
      %p50 = scmp.eq.s32.totalorder %s31, 0
      %p51 = por %p49, %p50
      %p52 = scmp.ne.s32.totalorder %s41, %s44
      %p53 = scmp.eq.s32.totalorder %s36, 2
      %p54 = por %p52, %p53
      %p55 = scmp.ne.s32.totalorder %s44, %s45
      %p56 = scmp.eq.s32.totalorder %s36, 0
      %p57 = por %p55, %p56
      %p58 = scmp.ne.s32.totalorder %s44, %s45
      %p59 = scmp.eq.s32.totalorder %s37, 2
      %p60 = por %p58, %p59
      %p62 = scmp.ne.s32.totalorder %s45, %s61
      %p63 = scmp.eq.s32.totalorder %s37, 0
      %p64 = por %p62, %p63
      %s65 = ssub.s32 %s31, %s38
      %p66 = scmp.eq.s32.totalorder %s65, 0
      %s68 = sadd.s32 %s67, 1
      %s69 = scalar_select %p66, %s67, %s68
      %p72 = pneg %p66
      %p73 = scmp.eq.s32.totalorder %s31, 2
      %p74 = por %p72, %p73
      %p75 = scmp.ne.s32.totalorder %s67, %s70
      %p76 = scmp.eq.s32.totalorder %s31, 0
      %p77 = por %p75, %p76
      %p78 = scmp.ne.s32.totalorder %s67, %s70
      %p79 = scmp.eq.s32.totalorder %s36, 2
      %p80 = por %p78, %p79
      %p81 = scmp.ne.s32.totalorder %s70, %s71
      %p82 = scmp.eq.s32.totalorder %s36, 0
      %p83 = por %p81, %p82
      %p84 = scmp.ne.s32.totalorder %s70, %s71
      %p85 = scmp.eq.s32.totalorder %s37, 2
      %p86 = por %p84, %p85
      %p88 = scmp.ne.s32.totalorder %s71, %s87
      %p89 = scmp.eq.s32.totalorder %s37, 0
      %p90 = por %p88, %p89
      %s91 = ssub.s32 %s31, %s38
      %p92 = scmp.eq.s32.totalorder %s91, 0
      %s94 = sadd.s32 %s93, 1
      %s95 = scalar_select %p92, %s93, %s94
      %p98 = pneg %p92
      %p99 = scmp.eq.s32.totalorder %s31, 2
      %p100 = por %p98, %p99
      %p101 = scmp.ne.s32.totalorder %s93, %s96
      %p102 = scmp.eq.s32.totalorder %s31, 0
      %p103 = por %p101, %p102
      %p104 = scmp.ne.s32.totalorder %s93, %s96
      %p105 = scmp.eq.s32.totalorder %s36, 2
      %p106 = por %p104, %p105
      %p107 = scmp.ne.s32.totalorder %s96, %s97
      %p108 = scmp.eq.s32.totalorder %s36, 0
      %p109 = por %p107, %p108
      %p110 = scmp.ne.s32.totalorder %s96, %s97
      %p111 = scmp.eq.s32.totalorder %s37, 2
      %p112 = por %p110, %p111
      %p114 = scmp.ne.s32.totalorder %s97, %s113
      %p115 = scmp.eq.s32.totalorder %s37, 0
      %p116 = por %p114, %p115
      %s117 = ssub.s32 %s31, %s38
      %p118 = scmp.eq.s32.totalorder %s117, 0
      %s120 = sadd.s32 %s119, 1
      %s121 = scalar_select %p118, %s119, %s120
      %p124 = pneg %p118
      %p125 = scmp.eq.s32.totalorder %s31, 2
      %p126 = por %p124, %p125
      %p127 = scmp.ne.s32.totalorder %s119, %s122
      %p128 = scmp.eq.s32.totalorder %s31, 0
      %p129 = por %p127, %p128
      %p130 = scmp.ne.s32.totalorder %s119, %s122
      %p131 = scmp.eq.s32.totalorder %s36, 2
      %p132 = por %p130, %p131
      %p133 = scmp.ne.s32.totalorder %s122, %s123
      %p134 = scmp.eq.s32.totalorder %s36, 0
      %p135 = por %p133, %p134
      %p136 = scmp.ne.s32.totalorder %s122, %s123
      %p137 = scmp.eq.s32.totalorder %s37, 2
      %p138 = por %p136, %p137
      %p140 = scmp.ne.s32.totalorder %s123, %s139
      %p141 = scmp.eq.s32.totalorder %s37, 0
      %p142 = por %p140, %p141
      %p143 = scmp.le.s32.totalorder 1, %s31
      %p144 = scmp.lt.s32.totalorder %s31, 4
      %p145 = pnand %p143, %p144
      %p146 = pneg %p145
      // Predicated region
      $region9: #{tpu_custom_call.1} parent=5 // pred_check
        _
      $region10: #{tpu_custom_call.1} parent=5 // pred_check_branch
        %148 = sbr.rel (%p145) target = $region12
      $region11: #{tpu_custom_call.1} parent=5 // pred_region
        %s149 = ssub.s32 %s31, 1
      $region12: #{tpu_custom_call.1} parent=5 // pred_fallthru
        _
      %p150 = scmp.lt.s32.totalorder %s31, 3
      // Predicated region
      $region13: #{tpu_custom_call.1} parent=5 // pred_check
        %p151 = pneg %p150
      $region14: #{tpu_custom_call.1} parent=5 // pred_check_branch
        %153 = sbr.rel (%p151) target = $region16
      $region15: #{tpu_custom_call.1} parent=5 // pred_region
        // Predicated region
        $region17: #{tpu_custom_call.1} parent=15 // pred_check
          %p154 = pneg %p51
        $region18: #{tpu_custom_call.1} parent=15 // pred_check_branch
          %156 = sbr.rel (%p154) target = $region20
        $region19: #{tpu_custom_call.1} parent=15 // pred_region
          %p157 = scmp.lt.s32.totalorder %s31, 2
          %s158 = scalar_select %p157, %s31, 2
          %s159 = smul.addr %s158, 2
          %s160 = scalar_lea.vmem %s3, %s159
        $region20: #{tpu_custom_call.1} parent=15 // pred_fallthru
          _
        // Predicated region
        $region21: #{tpu_custom_call.1} parent=15 // pred_check
          %p161 = pneg %p77
        $region22: #{tpu_custom_call.1} parent=15 // pred_check_branch
          %163 = sbr.rel (%p161) target = $region24
        $region23: #{tpu_custom_call.1} parent=15 // pred_region
          %p164 = scmp.lt.s32.totalorder %s31, 2
          %s165 = scalar_select %p164, %s31, 2
          %s166 = smul.addr %s165, 2
          %s167 = smul.addr %s166, 8
          %s168 = scalar_lea.vmem %s5, %s167
        $region24: #{tpu_custom_call.1} parent=15 // pred_fallthru
          _
      $region16: #{tpu_custom_call.1} parent=5 // pred_fallthru
        _
      %p169 = scmp.le.s32.totalorder 1, %s31
      %p170 = scmp.lt.s32.totalorder %s31, 4
      %p171 = pnand %p169, %p170
      %p172 = pneg %p171
      // Predicated region
      $region25: #{tpu_custom_call.1} parent=5 // pred_check
        _
      $region26: #{tpu_custom_call.1} parent=5 // pred_check_branch
        %174 = sbr.rel (%p171) target = $region28
      $region27: #{tpu_custom_call.1} parent=5 // pred_region
        %s175 = ssub.s32 %s31, 1
        %p176 = scmp.lt.s32.totalorder %s36, 2
        %s177 = scalar_select %p176, %s36, 2
        %s178 = smul.addr %s177, 2
        %s179 = scalar_lea.vmem %s3, %s178
        %p180 = pneg %p57
        %p181 = pneg %p54
        %p182 = scmp.lt.s32.totalorder %s36, 2
        %s183 = scalar_select %p182, %s36, 2
        %s184 = smul.addr %s183, 2
        %s185 = smul.addr %s184, 8
        %s186 = scalar_lea.vmem %s5, %s185
        %p187 = pneg %p83
        %p188 = pneg %p80
        %p189 = pneg %p109
        %p190 = pneg %p106
        %s191 = sand.u32 %s96, 1
        %s192 = scalar_lea.sflag [#allocation10], %s191
        %s193 = sand.u32 %s96, 1
        %s194 = smul.addr %s193, 2
        %s195 = scalar_lea.vmem [#allocation9], %s194
        %p196 = pneg %p135
        %p197 = pneg %p132
        %p198 = scmp.lt.s32.totalorder %s36, 2
        %s199 = scalar_select %p198, %s36, 2
        %s200 = scalar_lea.vmem %s7, %s199
        %p201 = scmp.lt.s32.totalorder %s36, 2
        %s202 = scalar_select %p201, %s36, 2
        %s203 = smul.addr %s202, 2
        %s204 = scalar_lea.vmem %s3, %s203
        %p205 = scmp.lt.s32.totalorder %s36, 2
        %s206 = scalar_select %p205, %s36, 2
        %s207 = smul.addr %s206, 2
        %s208 = smul.addr %s207, 8
        %s209 = scalar_lea.vmem %s5, %s208
        %p210 = scmp.lt.s32.totalorder %s36, 2
        %s211 = scalar_select %p210, %s36, 2
        %s212 = scalar_lea.vmem %s7, %s211
        %s213 = sld [smem:[#allocation7 + %s36]]
        %s214 = smul.u32 %s36, 16
        %vm215 = vcmask 261120
        %216 = vst.msk [vmem:[#allocation2] sm:$0xff] %vm215, 0.0
        %217 = vst.msk [vmem:[#allocation2 + $0x8] sm:$0xff] %vm215, 0.0
        %s218 = sld [smem:[#allocation6 + %s214]]
        %p219 = scmp.ne.s32.totalorder %s218, 0
        // Predicated region
        $region29: #{tpu_custom_call.1} parent=27 // pred_check
          %p220 = pneg %p219
        $region30: #{tpu_custom_call.1} parent=27 // pred_check_branch
          %222 = sbr.rel (%p220) target = $region32
        $region31: #{tpu_custom_call.1} parent=27 // pred_region
          %s223 = sadd.s32 %s213, %s218
          %s224 = scalar_lea.vmem %s4, %s223
          %p226 = scmp.lt.u32.totalorder 1, 8
          %p227 = pneg %p226
          // Predicated region
          $region33: #{tpu_custom_call.1} parent=31 // pred_check
            _
          $region34: #{tpu_custom_call.1} parent=31 // pred_check_branch
            %229 = sbr.rel (%p226) target = $region36
          $region35: #{tpu_custom_call.1} parent=31 // pred_region
            %s245 = sand.u32 1, 7
            %p246 = scmp.eq.s32.totalorder %s245, 0
            %p247 = pneg %p246
            // Predicated region
            $region48: #{tpu_custom_call.1} parent=35 // pred_check
              _
            $region49: #{tpu_custom_call.1} parent=35 // pred_check_branch
              %249 = sbr.rel (%p246) target = $region51
            $region50: #{tpu_custom_call.1} parent=35 // pred_region
              %s250 = sand.u32 1, 7
              %s251 = ssub.s32 1, %s250
              %s252 = scalar_lea.vmem %s224, %s251
              %s253 = ssub.s32 1, %s250
              %s254 = scalar_lea.vmem [#allocation2], %s253
              %s255 = sshll.u32 1, %s250
              %s256 = ssub.s32 %s255, 1
              loop: start=0, step=1, limit=1
              $region52: #{tpu_custom_call.1} parent=50 // loop_pre_header
                _
              $region53: #{tpu_custom_call.1} parent=50 // loop_header
                %s258 = sphi 0, %s262
                %p259 = scmp.ge.s32.totalorder %s258, 1
                %s263 = sphi %s252, %s252
                %s264 = sphi %s254, %s254
              $region54: #{tpu_custom_call.1} parent=50 // loop_header_branch
                %261 = sbr.rel (%p259) target = $region58
              $region55: #{tpu_custom_call.1} parent=50 // loop_body
                %v265 = vld [vmem:[%s263] sm:%s256]
                %266 = vst [vmem:[%s264] sm:%s256] %v265
              $region56: #{tpu_custom_call.1} parent=50 // loop_footer
                %s262 = sadd.s32 1, %s258
              $region57: #{tpu_custom_call.1} parent=50 // loop_footer_branch
                %257 = sbr.rel target = $region53
              $region58: #{tpu_custom_call.1} parent=50 // loop_exit
                _
            $region51: #{tpu_custom_call.1} parent=35 // pred_fallthru
              _
          $region36: #{tpu_custom_call.1} parent=31 // pred_fallthru
            _
          // Predicated region
          $region37: #{tpu_custom_call.1} parent=31 // pred_check
            %p230 = pneg %p226
          $region38: #{tpu_custom_call.1} parent=31 // pred_check_branch
            %232 = sbr.rel (%p230) target = $region40
          $region39: #{tpu_custom_call.1} parent=31 // pred_region
            %s233 = sshll.u32 1, 1
            %s234 = ssub.s32 %s233, 1
            loop: start=0, step=1, limit=1
            $region41: #{tpu_custom_call.1} parent=39 // loop_pre_header
              _
            $region42: #{tpu_custom_call.1} parent=39 // loop_header
              %s236 = sphi 0, %s240
              %p237 = scmp.ge.s32.totalorder %s236, 1
              %s241 = sphi %s224, %s224
              %s242 = sphi [#allocation2], [#allocation2]
            $region43: #{tpu_custom_call.1} parent=39 // loop_header_branch
              %239 = sbr.rel (%p237) target = $region47
            $region44: #{tpu_custom_call.1} parent=39 // loop_body
              %v243 = vld [vmem:[%s241] sm:%s234]
              %244 = vst [vmem:[%s242] sm:%s234] %v243
            $region45: #{tpu_custom_call.1} parent=39 // loop_footer
              %s240 = sadd.s32 1, %s236
            $region46: #{tpu_custom_call.1} parent=39 // loop_footer_branch
              %235 = sbr.rel target = $region42
            $region47: #{tpu_custom_call.1} parent=39 // loop_exit
              _
          $region40: #{tpu_custom_call.1} parent=31 // pred_fallthru
            _
          // Predicated region
          $region59: #{tpu_custom_call.1} parent=31 // pred_check
            _
          $region60: #{tpu_custom_call.1} parent=31 // pred_check_branch
            %269 = sbr.rel (0) target = $region62
          $region61: #{tpu_custom_call.1} parent=31 // pred_region
            %270 = vsyncadd [#allocation4], 16
          $region62: #{tpu_custom_call.1} parent=31 // pred_fallthru
            _
        $region32: #{tpu_custom_call.1} parent=27 // pred_fallthru
          _
        %s271 = sadd.s32 %s214, 1
        %s272 = sld [smem:[#allocation6 + %s271]]
        %p273 = scmp.ne.s32.totalorder %s272, 0
        // Predicated region
        $region63: #{tpu_custom_call.1} parent=27 // pred_check
          %p274 = pneg %p273
        $region64: #{tpu_custom_call.1} parent=27 // pred_check_branch
          %276 = sbr.rel (%p274) target = $region66
        $region65: #{tpu_custom_call.1} parent=27 // pred_region
          %s277 = sadd.s32 %s213, %s272
          %s278 = scalar_lea.vmem %s4, %s277
          %s279 = scalar_lea.vmem [#allocation2], 1
          %p281 = scmp.lt.u32.totalorder 1, 8
          %p282 = pneg %p281
          // Predicated region
          $region67: #{tpu_custom_call.1} parent=65 // pred_check
            _
          $region68: #{tpu_custom_call.1} parent=65 // pred_check_branch
            %284 = sbr.rel (%p281) target = $region70
          $region69: #{tpu_custom_call.1} parent=65 // pred_region
            %s300 = sand.u32 1, 7
            %p301 = scmp.eq.s32.totalorder %s300, 0
            %p302 = pneg %p301
            // Predicated region
            $region82: #{tpu_custom_call.1} parent=69 // pred_check
              _
            $region83: #{tpu_custom_call.1} parent=69 // pred_check_branch
              %304 = sbr.rel (%p301) target = $region85
            $region84: #{tpu_custom_call.1} parent=69 // pred_region
              %s305 = sand.u32 1, 7
              %s306 = ssub.s32 1, %s305
              %s307 = scalar_lea.vmem %s278, %s306
              %s308 = ssub.s32 1, %s305
              %s309 = scalar_lea.vmem %s279, %s308 [#allocation2]
              %s310 = sshll.u32 1, %s305
              %s311 = ssub.s32 %s310, 1
              loop: start=0, step=1, limit=1
              $region86: #{tpu_custom_call.1} parent=84 // loop_pre_header
                _
              $region87: #{tpu_custom_call.1} parent=84 // loop_header
                %s313 = sphi 0, %s317
                %p314 = scmp.ge.s32.totalorder %s313, 1
                %s318 = sphi %s307, %s307
                %s319 = sphi %s309, %s309
              $region88: #{tpu_custom_call.1} parent=84 // loop_header_branch
                %316 = sbr.rel (%p314) target = $region92
              $region89: #{tpu_custom_call.1} parent=84 // loop_body
                %v320 = vld [vmem:[%s318] sm:%s311]
                %321 = vst [vmem:[%s319] sm:%s311] %v320
              $region90: #{tpu_custom_call.1} parent=84 // loop_footer
                %s317 = sadd.s32 1, %s313
              $region91: #{tpu_custom_call.1} parent=84 // loop_footer_branch
                %312 = sbr.rel target = $region87
              $region92: #{tpu_custom_call.1} parent=84 // loop_exit
                _
            $region85: #{tpu_custom_call.1} parent=69 // pred_fallthru
              _
          $region70: #{tpu_custom_call.1} parent=65 // pred_fallthru
            _
          // Predicated region
          $region71: #{tpu_custom_call.1} parent=65 // pred_check
            %p285 = pneg %p281
          $region72: #{tpu_custom_call.1} parent=65 // pred_check_branch
            %287 = sbr.rel (%p285) target = $region74
          $region73: #{tpu_custom_call.1} parent=65 // pred_region
            %s288 = sshll.u32 1, 1
            %s289 = ssub.s32 %s288, 1
            loop: start=0, step=1, limit=1
            $region75: #{tpu_custom_call.1} parent=73 // loop_pre_header
              _
            $region76: #{tpu_custom_call.1} parent=73 // loop_header
              %s291 = sphi 0, %s295
              %p292 = scmp.ge.s32.totalorder %s291, 1
              %s296 = sphi %s278, %s278
              %s297 = sphi %s279, %s279
            $region77: #{tpu_custom_call.1} parent=73 // loop_header_branch
              %294 = sbr.rel (%p292) target = $region81
            $region78: #{tpu_custom_call.1} parent=73 // loop_body
              %v298 = vld [vmem:[%s296] sm:%s289]
              %299 = vst [vmem:[%s297] sm:%s289] %v298
            $region79: #{tpu_custom_call.1} parent=73 // loop_footer
              %s295 = sadd.s32 1, %s291
            $region80: #{tpu_custom_call.1} parent=73 // loop_footer_branch
              %290 = sbr.rel target = $region76
            $region81: #{tpu_custom_call.1} parent=73 // loop_exit
              _
          $region74: #{tpu_custom_call.1} parent=65 // pred_fallthru
            _
          // Predicated region
          $region93: #{tpu_custom_call.1} parent=65 // pred_check
            _
          $region94: #{tpu_custom_call.1} parent=65 // pred_check_branch
            %324 = sbr.rel (0) target = $region96
          $region95: #{tpu_custom_call.1} parent=65 // pred_region
            %325 = vsyncadd [#allocation4], 16
          $region96: #{tpu_custom_call.1} parent=65 // pred_fallthru
            _
        $region66: #{tpu_custom_call.1} parent=27 // pred_fallthru
          _
        %s326 = sadd.s32 %s214, 2
        %s327 = sld [smem:[#allocation6 + %s326]]
        %p328 = scmp.ne.s32.totalorder %s327, 0
        // Predicated region
        $region97: #{tpu_custom_call.1} parent=27 // pred_check
          %p329 = pneg %p328
        $region98: #{tpu_custom_call.1} parent=27 // pred_check_branch
          %331 = sbr.rel (%p329) target = $region100
        $region99: #{tpu_custom_call.1} parent=27 // pred_region
          %s332 = sadd.s32 %s213, %s327
          %s333 = scalar_lea.vmem %s4, %s332
          %s334 = scalar_lea.vmem [#allocation2], 2
          %p336 = scmp.lt.u32.totalorder 1, 8
          %p337 = pneg %p336
          // Predicated region
          $region101: #{tpu_custom_call.1} parent=99 // pred_check
            _
          $region102: #{tpu_custom_call.1} parent=99 // pred_check_branch
            %339 = sbr.rel (%p336) target = $region104
          $region103: #{tpu_custom_call.1} parent=99 // pred_region
            %s355 = sand.u32 1, 7
            %p356 = scmp.eq.s32.totalorder %s355, 0
            %p357 = pneg %p356
            // Predicated region
            $region116: #{tpu_custom_call.1} parent=103 // pred_check
              _
            $region117: #{tpu_custom_call.1} parent=103 // pred_check_branch
              %359 = sbr.rel (%p356) target = $region119
            $region118: #{tpu_custom_call.1} parent=103 // pred_region
              %s360 = sand.u32 1, 7
              %s361 = ssub.s32 1, %s360
              %s362 = scalar_lea.vmem %s333, %s361
              %s363 = ssub.s32 1, %s360
              %s364 = scalar_lea.vmem %s334, %s363 [#allocation2]
              %s365 = sshll.u32 1, %s360
              %s366 = ssub.s32 %s365, 1
              loop: start=0, step=1, limit=1
              $region120: #{tpu_custom_call.1} parent=118 // loop_pre_header
                _
              $region121: #{tpu_custom_call.1} parent=118 // loop_header
                %s368 = sphi 0, %s372
                %p369 = scmp.ge.s32.totalorder %s368, 1
                %s373 = sphi %s362, %s362
                %s374 = sphi %s364, %s364
              $region122: #{tpu_custom_call.1} parent=118 // loop_header_branch
                %371 = sbr.rel (%p369) target = $region126
              $region123: #{tpu_custom_call.1} parent=118 // loop_body
                %v375 = vld [vmem:[%s373] sm:%s366]
                %376 = vst [vmem:[%s374] sm:%s366] %v375
              $region124: #{tpu_custom_call.1} parent=118 // loop_footer
                %s372 = sadd.s32 1, %s368
              $region125: #{tpu_custom_call.1} parent=118 // loop_footer_branch
                %367 = sbr.rel target = $region121
              $region126: #{tpu_custom_call.1} parent=118 // loop_exit
                _
            $region119: #{tpu_custom_call.1} parent=103 // pred_fallthru
              _
          $region104: #{tpu_custom_call.1} parent=99 // pred_fallthru
            _
          // Predicated region
          $region105: #{tpu_custom_call.1} parent=99 // pred_check
            %p340 = pneg %p336
          $region106: #{tpu_custom_call.1} parent=99 // pred_check_branch
            %342 = sbr.rel (%p340) target = $region108
          $region107: #{tpu_custom_call.1} parent=99 // pred_region
            %s343 = sshll.u32 1, 1
            %s344 = ssub.s32 %s343, 1
            loop: start=0, step=1, limit=1
            $region109: #{tpu_custom_call.1} parent=107 // loop_pre_header
              _
            $region110: #{tpu_custom_call.1} parent=107 // loop_header
              %s346 = sphi 0, %s350
              %p347 = scmp.ge.s32.totalorder %s346, 1
              %s351 = sphi %s333, %s333
              %s352 = sphi %s334, %s334
            $region111: #{tpu_custom_call.1} parent=107 // loop_header_branch
              %349 = sbr.rel (%p347) target = $region115
            $region112: #{tpu_custom_call.1} parent=107 // loop_body
              %v353 = vld [vmem:[%s351] sm:%s344]
              %354 = vst [vmem:[%s352] sm:%s344] %v353
            $region113: #{tpu_custom_call.1} parent=107 // loop_footer
              %s350 = sadd.s32 1, %s346
            $region114: #{tpu_custom_call.1} parent=107 // loop_footer_branch
              %345 = sbr.rel target = $region110
            $region115: #{tpu_custom_call.1} parent=107 // loop_exit
              _
          $region108: #{tpu_custom_call.1} parent=99 // pred_fallthru
            _
          // Predicated region
          $region127: #{tpu_custom_call.1} parent=99 // pred_check
            _
          $region128: #{tpu_custom_call.1} parent=99 // pred_check_branch
            %379 = sbr.rel (0) target = $region130
          $region129: #{tpu_custom_call.1} parent=99 // pred_region
            %380 = vsyncadd [#allocation4], 16
          $region130: #{tpu_custom_call.1} parent=99 // pred_fallthru
            _
        $region100: #{tpu_custom_call.1} parent=27 // pred_fallthru
          _
        %s381 = sadd.s32 %s214, 3
        %s382 = sld [smem:[#allocation6 + %s381]]
        %p383 = scmp.ne.s32.totalorder %s382, 0
        // Predicated region
        $region131: #{tpu_custom_call.1} parent=27 // pred_check
          %p384 = pneg %p383
        $region132: #{tpu_custom_call.1} parent=27 // pred_check_branch
          %386 = sbr.rel (%p384) target = $region134
        $region133: #{tpu_custom_call.1} parent=27 // pred_region
          %s387 = sadd.s32 %s213, %s382
          %s388 = scalar_lea.vmem %s4, %s387
          %s389 = scalar_lea.vmem [#allocation2], 3
          %p391 = scmp.lt.u32.totalorder 1, 8
          %p392 = pneg %p391
          // Predicated region
          $region135: #{tpu_custom_call.1} parent=133 // pred_check
            _
          $region136: #{tpu_custom_call.1} parent=133 // pred_check_branch
            %394 = sbr.rel (%p391) target = $region138
          $region137: #{tpu_custom_call.1} parent=133 // pred_region
            %s410 = sand.u32 1, 7
            %p411 = scmp.eq.s32.totalorder %s410, 0
            %p412 = pneg %p411
            // Predicated region
            $region150: #{tpu_custom_call.1} parent=137 // pred_check
              _
            $region151: #{tpu_custom_call.1} parent=137 // pred_check_branch
              %414 = sbr.rel (%p411) target = $region153
            $region152: #{tpu_custom_call.1} parent=137 // pred_region
              %s415 = sand.u32 1, 7
              %s416 = ssub.s32 1, %s415
              %s417 = scalar_lea.vmem %s388, %s416
              %s418 = ssub.s32 1, %s415
              %s419 = scalar_lea.vmem %s389, %s418 [#allocation2]
              %s420 = sshll.u32 1, %s415
              %s421 = ssub.s32 %s420, 1
              loop: start=0, step=1, limit=1
              $region154: #{tpu_custom_call.1} parent=152 // loop_pre_header
                _
              $region155: #{tpu_custom_call.1} parent=152 // loop_header
                %s423 = sphi 0, %s427
                %p424 = scmp.ge.s32.totalorder %s423, 1
                %s428 = sphi %s417, %s417
                %s429 = sphi %s419, %s419
              $region156: #{tpu_custom_call.1} parent=152 // loop_header_branch
                %426 = sbr.rel (%p424) target = $region160
              $region157: #{tpu_custom_call.1} parent=152 // loop_body
                %v430 = vld [vmem:[%s428] sm:%s421]
                %431 = vst [vmem:[%s429] sm:%s421] %v430
              $region158: #{tpu_custom_call.1} parent=152 // loop_footer
                %s427 = sadd.s32 1, %s423
              $region159: #{tpu_custom_call.1} parent=152 // loop_footer_branch
                %422 = sbr.rel target = $region155
              $region160: #{tpu_custom_call.1} parent=152 // loop_exit
                _
            $region153: #{tpu_custom_call.1} parent=137 // pred_fallthru
              _
          $region138: #{tpu_custom_call.1} parent=133 // pred_fallthru
            _
          // Predicated region
          $region139: #{tpu_custom_call.1} parent=133 // pred_check
            %p395 = pneg %p391
          $region140: #{tpu_custom_call.1} parent=133 // pred_check_branch
            %397 = sbr.rel (%p395) target = $region142
          $region141: #{tpu_custom_call.1} parent=133 // pred_region
            %s398 = sshll.u32 1, 1
            %s399 = ssub.s32 %s398, 1
            loop: start=0, step=1, limit=1
            $region143: #{tpu_custom_call.1} parent=141 // loop_pre_header
              _
            $region144: #{tpu_custom_call.1} parent=141 // loop_header
              %s401 = sphi 0, %s405
              %p402 = scmp.ge.s32.totalorder %s401, 1
              %s406 = sphi %s388, %s388
              %s407 = sphi %s389, %s389
            $region145: #{tpu_custom_call.1} parent=141 // loop_header_branch
              %404 = sbr.rel (%p402) target = $region149
            $region146: #{tpu_custom_call.1} parent=141 // loop_body
              %v408 = vld [vmem:[%s406] sm:%s399]
              %409 = vst [vmem:[%s407] sm:%s399] %v408
            $region147: #{tpu_custom_call.1} parent=141 // loop_footer
              %s405 = sadd.s32 1, %s401
            $region148: #{tpu_custom_call.1} parent=141 // loop_footer_branch
              %400 = sbr.rel target = $region144
            $region149: #{tpu_custom_call.1} parent=141 // loop_exit
              _
          $region142: #{tpu_custom_call.1} parent=133 // pred_fallthru
            _
          // Predicated region
          $region161: #{tpu_custom_call.1} parent=133 // pred_check
            _
          $region162: #{tpu_custom_call.1} parent=133 // pred_check_branch
            %434 = sbr.rel (0) target = $region164
          $region163: #{tpu_custom_call.1} parent=133 // pred_region
            %435 = vsyncadd [#allocation4], 16
          $region164: #{tpu_custom_call.1} parent=133 // pred_fallthru
            _
        $region134: #{tpu_custom_call.1} parent=27 // pred_fallthru
          _
        %s436 = sadd.s32 %s214, 4
        %s437 = sld [smem:[#allocation6 + %s436]]
        %p438 = scmp.ne.s32.totalorder %s437, 0
        // Predicated region
        $region165: #{tpu_custom_call.1} parent=27 // pred_check
          %p439 = pneg %p438
        $region166: #{tpu_custom_call.1} parent=27 // pred_check_branch
          %441 = sbr.rel (%p439) target = $region168
        $region167: #{tpu_custom_call.1} parent=27 // pred_region
          %s442 = sadd.s32 %s213, %s437
          %s443 = scalar_lea.vmem %s4, %s442
          %s444 = scalar_lea.vmem [#allocation2], 4
          %p446 = scmp.lt.u32.totalorder 1, 8
          %p447 = pneg %p446
          // Predicated region
          $region169: #{tpu_custom_call.1} parent=167 // pred_check
            _
          $region170: #{tpu_custom_call.1} parent=167 // pred_check_branch
            %449 = sbr.rel (%p446) target = $region172
          $region171: #{tpu_custom_call.1} parent=167 // pred_region
            %s465 = sand.u32 1, 7
            %p466 = scmp.eq.s32.totalorder %s465, 0
            %p467 = pneg %p466
            // Predicated region
            $region184: #{tpu_custom_call.1} parent=171 // pred_check
              _
            $region185: #{tpu_custom_call.1} parent=171 // pred_check_branch
              %469 = sbr.rel (%p466) target = $region187
            $region186: #{tpu_custom_call.1} parent=171 // pred_region
              %s470 = sand.u32 1, 7
              %s471 = ssub.s32 1, %s470
              %s472 = scalar_lea.vmem %s443, %s471
              %s473 = ssub.s32 1, %s470
              %s474 = scalar_lea.vmem %s444, %s473 [#allocation2]
              %s475 = sshll.u32 1, %s470
              %s476 = ssub.s32 %s475, 1
              loop: start=0, step=1, limit=1
              $region188: #{tpu_custom_call.1} parent=186 // loop_pre_header
                _
              $region189: #{tpu_custom_call.1} parent=186 // loop_header
                %s478 = sphi 0, %s482
                %p479 = scmp.ge.s32.totalorder %s478, 1
                %s483 = sphi %s472, %s472
                %s484 = sphi %s474, %s474
              $region190: #{tpu_custom_call.1} parent=186 // loop_header_branch
                %481 = sbr.rel (%p479) target = $region194
              $region191: #{tpu_custom_call.1} parent=186 // loop_body
                %v485 = vld [vmem:[%s483] sm:%s476]
                %486 = vst [vmem:[%s484] sm:%s476] %v485
              $region192: #{tpu_custom_call.1} parent=186 // loop_footer
                %s482 = sadd.s32 1, %s478
              $region193: #{tpu_custom_call.1} parent=186 // loop_footer_branch
                %477 = sbr.rel target = $region189
              $region194: #{tpu_custom_call.1} parent=186 // loop_exit
                _
            $region187: #{tpu_custom_call.1} parent=171 // pred_fallthru
              _
          $region172: #{tpu_custom_call.1} parent=167 // pred_fallthru
            _
          // Predicated region
          $region173: #{tpu_custom_call.1} parent=167 // pred_check
            %p450 = pneg %p446
          $region174: #{tpu_custom_call.1} parent=167 // pred_check_branch
            %452 = sbr.rel (%p450) target = $region176
          $region175: #{tpu_custom_call.1} parent=167 // pred_region
            %s453 = sshll.u32 1, 1
            %s454 = ssub.s32 %s453, 1
            loop: start=0, step=1, limit=1
            $region177: #{tpu_custom_call.1} parent=175 // loop_pre_header
              _
            $region178: #{tpu_custom_call.1} parent=175 // loop_header
              %s456 = sphi 0, %s460
              %p457 = scmp.ge.s32.totalorder %s456, 1
              %s461 = sphi %s443, %s443
              %s462 = sphi %s444, %s444
            $region179: #{tpu_custom_call.1} parent=175 // loop_header_branch
              %459 = sbr.rel (%p457) target = $region183
            $region180: #{tpu_custom_call.1} parent=175 // loop_body
              %v463 = vld [vmem:[%s461] sm:%s454]
              %464 = vst [vmem:[%s462] sm:%s454] %v463
            $region181: #{tpu_custom_call.1} parent=175 // loop_footer
              %s460 = sadd.s32 1, %s456
            $region182: #{tpu_custom_call.1} parent=175 // loop_footer_branch
              %455 = sbr.rel target = $region178
            $region183: #{tpu_custom_call.1} parent=175 // loop_exit
              _
          $region176: #{tpu_custom_call.1} parent=167 // pred_fallthru
            _
          // Predicated region
          $region195: #{tpu_custom_call.1} parent=167 // pred_check
            _
          $region196: #{tpu_custom_call.1} parent=167 // pred_check_branch
            %489 = sbr.rel (0) target = $region198
          $region197: #{tpu_custom_call.1} parent=167 // pred_region
            %490 = vsyncadd [#allocation4], 16
          $region198: #{tpu_custom_call.1} parent=167 // pred_fallthru
            _
        $region168: #{tpu_custom_call.1} parent=27 // pred_fallthru
          _
        %s491 = sadd.s32 %s214, 5
        %s492 = sld [smem:[#allocation6 + %s491]]
        %p493 = scmp.ne.s32.totalorder %s492, 0
        // Predicated region
        $region199: #{tpu_custom_call.1} parent=27 // pred_check
          %p494 = pneg %p493
        $region200: #{tpu_custom_call.1} parent=27 // pred_check_branch
          %496 = sbr.rel (%p494) target = $region202
        $region201: #{tpu_custom_call.1} parent=27 // pred_region
          %s497 = sadd.s32 %s213, %s492
          %s498 = scalar_lea.vmem %s4, %s497
          %s499 = scalar_lea.vmem [#allocation2], 5
          %p501 = scmp.lt.u32.totalorder 1, 8
          %p502 = pneg %p501
          // Predicated region
          $region203: #{tpu_custom_call.1} parent=201 // pred_check
            _
          $region204: #{tpu_custom_call.1} parent=201 // pred_check_branch
            %504 = sbr.rel (%p501) target = $region206
          $region205: #{tpu_custom_call.1} parent=201 // pred_region
            %s520 = sand.u32 1, 7
            %p521 = scmp.eq.s32.totalorder %s520, 0
            %p522 = pneg %p521
            // Predicated region
            $region218: #{tpu_custom_call.1} parent=205 // pred_check
              _
            $region219: #{tpu_custom_call.1} parent=205 // pred_check_branch
              %524 = sbr.rel (%p521) target = $region221
            $region220: #{tpu_custom_call.1} parent=205 // pred_region
              %s525 = sand.u32 1, 7
              %s526 = ssub.s32 1, %s525
              %s527 = scalar_lea.vmem %s498, %s526
              %s528 = ssub.s32 1, %s525
              %s529 = scalar_lea.vmem %s499, %s528 [#allocation2]
              %s530 = sshll.u32 1, %s525
              %s531 = ssub.s32 %s530, 1
              loop: start=0, step=1, limit=1
              $region222: #{tpu_custom_call.1} parent=220 // loop_pre_header
                _
              $region223: #{tpu_custom_call.1} parent=220 // loop_header
                %s533 = sphi 0, %s537
                %p534 = scmp.ge.s32.totalorder %s533, 1
                %s538 = sphi %s527, %s527
                %s539 = sphi %s529, %s529
              $region224: #{tpu_custom_call.1} parent=220 // loop_header_branch
                %536 = sbr.rel (%p534) target = $region228
              $region225: #{tpu_custom_call.1} parent=220 // loop_body
                %v540 = vld [vmem:[%s538] sm:%s531]
                %541 = vst [vmem:[%s539] sm:%s531] %v540
              $region226: #{tpu_custom_call.1} parent=220 // loop_footer
                %s537 = sadd.s32 1, %s533
              $region227: #{tpu_custom_call.1} parent=220 // loop_footer_branch
                %532 = sbr.rel target = $region223
              $region228: #{tpu_custom_call.1} parent=220 // loop_exit
                _
            $region221: #{tpu_custom_call.1} parent=205 // pred_fallthru
              _
          $region206: #{tpu_custom_call.1} parent=201 // pred_fallthru
            _
          // Predicated region
          $region207: #{tpu_custom_call.1} parent=201 // pred_check
            %p505 = pneg %p501
          $region208: #{tpu_custom_call.1} parent=201 // pred_check_branch
            %507 = sbr.rel (%p505) target = $region210
          $region209: #{tpu_custom_call.1} parent=201 // pred_region
            %s508 = sshll.u32 1, 1
            %s509 = ssub.s32 %s508, 1
            loop: start=0, step=1, limit=1
            $region211: #{tpu_custom_call.1} parent=209 // loop_pre_header
              _
            $region212: #{tpu_custom_call.1} parent=209 // loop_header
              %s511 = sphi 0, %s515
              %p512 = scmp.ge.s32.totalorder %s511, 1
              %s516 = sphi %s498, %s498
              %s517 = sphi %s499, %s499
            $region213: #{tpu_custom_call.1} parent=209 // loop_header_branch
              %514 = sbr.rel (%p512) target = $region217
            $region214: #{tpu_custom_call.1} parent=209 // loop_body
              %v518 = vld [vmem:[%s516] sm:%s509]
              %519 = vst [vmem:[%s517] sm:%s509] %v518
            $region215: #{tpu_custom_call.1} parent=209 // loop_footer
              %s515 = sadd.s32 1, %s511
            $region216: #{tpu_custom_call.1} parent=209 // loop_footer_branch
              %510 = sbr.rel target = $region212
            $region217: #{tpu_custom_call.1} parent=209 // loop_exit
              _
          $region210: #{tpu_custom_call.1} parent=201 // pred_fallthru
            _
          // Predicated region
          $region229: #{tpu_custom_call.1} parent=201 // pred_check
            _
          $region230: #{tpu_custom_call.1} parent=201 // pred_check_branch
            %544 = sbr.rel (0) target = $region232
          $region231: #{tpu_custom_call.1} parent=201 // pred_region
            %545 = vsyncadd [#allocation4], 16
          $region232: #{tpu_custom_call.1} parent=201 // pred_fallthru
            _
        $region202: #{tpu_custom_call.1} parent=27 // pred_fallthru
          _
        %s546 = sadd.s32 %s214, 6
        %s547 = sld [smem:[#allocation6 + %s546]]
        %p548 = scmp.ne.s32.totalorder %s547, 0
        // Predicated region
        $region233: #{tpu_custom_call.1} parent=27 // pred_check
          %p549 = pneg %p548
        $region234: #{tpu_custom_call.1} parent=27 // pred_check_branch
          %551 = sbr.rel (%p549) target = $region236
        $region235: #{tpu_custom_call.1} parent=27 // pred_region
          %s552 = sadd.s32 %s213, %s547
          %s553 = scalar_lea.vmem %s4, %s552
          %s554 = scalar_lea.vmem [#allocation2], 6
          %p556 = scmp.lt.u32.totalorder 1, 8
          %p557 = pneg %p556
          // Predicated region
          $region237: #{tpu_custom_call.1} parent=235 // pred_check
            _
          $region238: #{tpu_custom_call.1} parent=235 // pred_check_branch
            %559 = sbr.rel (%p556) target = $region240
          $region239: #{tpu_custom_call.1} parent=235 // pred_region
            %s575 = sand.u32 1, 7
            %p576 = scmp.eq.s32.totalorder %s575, 0
            %p577 = pneg %p576
            // Predicated region
            $region252: #{tpu_custom_call.1} parent=239 // pred_check
              _
            $region253: #{tpu_custom_call.1} parent=239 // pred_check_branch
              %579 = sbr.rel (%p576) target = $region255
            $region254: #{tpu_custom_call.1} parent=239 // pred_region
              %s580 = sand.u32 1, 7
              %s581 = ssub.s32 1, %s580
              %s582 = scalar_lea.vmem %s553, %s581
              %s583 = ssub.s32 1, %s580
              %s584 = scalar_lea.vmem %s554, %s583 [#allocation2]
              %s585 = sshll.u32 1, %s580
              %s586 = ssub.s32 %s585, 1
              loop: start=0, step=1, limit=1
              $region256: #{tpu_custom_call.1} parent=254 // loop_pre_header
                _
              $region257: #{tpu_custom_call.1} parent=254 // loop_header
                %s588 = sphi 0, %s592
                %p589 = scmp.ge.s32.totalorder %s588, 1
                %s593 = sphi %s582, %s582
                %s594 = sphi %s584, %s584
              $region258: #{tpu_custom_call.1} parent=254 // loop_header_branch
                %591 = sbr.rel (%p589) target = $region262
              $region259: #{tpu_custom_call.1} parent=254 // loop_body
                %v595 = vld [vmem:[%s593] sm:%s586]
                %596 = vst [vmem:[%s594] sm:%s586] %v595
              $region260: #{tpu_custom_call.1} parent=254 // loop_footer
                %s592 = sadd.s32 1, %s588
              $region261: #{tpu_custom_call.1} parent=254 // loop_footer_branch
                %587 = sbr.rel target = $region257
              $region262: #{tpu_custom_call.1} parent=254 // loop_exit
                _
            $region255: #{tpu_custom_call.1} parent=239 // pred_fallthru
              _
          $region240: #{tpu_custom_call.1} parent=235 // pred_fallthru
            _
          // Predicated region
          $region241: #{tpu_custom_call.1} parent=235 // pred_check
            %p560 = pneg %p556
          $region242: #{tpu_custom_call.1} parent=235 // pred_check_branch
            %562 = sbr.rel (%p560) target = $region244
          $region243: #{tpu_custom_call.1} parent=235 // pred_region
            %s563 = sshll.u32 1, 1
            %s564 = ssub.s32 %s563, 1
            loop: start=0, step=1, limit=1
            $region245: #{tpu_custom_call.1} parent=243 // loop_pre_header
              _
            $region246: #{tpu_custom_call.1} parent=243 // loop_header
              %s566 = sphi 0, %s570
              %p567 = scmp.ge.s32.totalorder %s566, 1
              %s571 = sphi %s553, %s553
              %s572 = sphi %s554, %s554
            $region247: #{tpu_custom_call.1} parent=243 // loop_header_branch
              %569 = sbr.rel (%p567) target = $region251
            $region248: #{tpu_custom_call.1} parent=243 // loop_body
              %v573 = vld [vmem:[%s571] sm:%s564]
              %574 = vst [vmem:[%s572] sm:%s564] %v573
            $region249: #{tpu_custom_call.1} parent=243 // loop_footer
              %s570 = sadd.s32 1, %s566
            $region250: #{tpu_custom_call.1} parent=243 // loop_footer_branch
              %565 = sbr.rel target = $region246
            $region251: #{tpu_custom_call.1} parent=243 // loop_exit
              _
          $region244: #{tpu_custom_call.1} parent=235 // pred_fallthru
            _
          // Predicated region
          $region263: #{tpu_custom_call.1} parent=235 // pred_check
            _
          $region264: #{tpu_custom_call.1} parent=235 // pred_check_branch
            %599 = sbr.rel (0) target = $region266
          $region265: #{tpu_custom_call.1} parent=235 // pred_region
            %600 = vsyncadd [#allocation4], 16
          $region266: #{tpu_custom_call.1} parent=235 // pred_fallthru
            _
        $region236: #{tpu_custom_call.1} parent=27 // pred_fallthru
          _
        %s601 = sadd.s32 %s214, 7
        %s602 = sld [smem:[#allocation6 + %s601]]
        %p603 = scmp.ne.s32.totalorder %s602, 0
        // Predicated region
        $region267: #{tpu_custom_call.1} parent=27 // pred_check
          %p604 = pneg %p603
        $region268: #{tpu_custom_call.1} parent=27 // pred_check_branch
          %606 = sbr.rel (%p604) target = $region270
        $region269: #{tpu_custom_call.1} parent=27 // pred_region
          %s607 = sadd.s32 %s213, %s602
          %s608 = scalar_lea.vmem %s4, %s607
          %s609 = scalar_lea.vmem [#allocation2], 7
          %p611 = scmp.lt.u32.totalorder 1, 8
          %p612 = pneg %p611
          // Predicated region
          $region271: #{tpu_custom_call.1} parent=269 // pred_check
            _
          $region272: #{tpu_custom_call.1} parent=269 // pred_check_branch
            %614 = sbr.rel (%p611) target = $region274
          $region273: #{tpu_custom_call.1} parent=269 // pred_region
            %s630 = sand.u32 1, 7
            %p631 = scmp.eq.s32.totalorder %s630, 0
            %p632 = pneg %p631
            // Predicated region
            $region286: #{tpu_custom_call.1} parent=273 // pred_check
              _
            $region287: #{tpu_custom_call.1} parent=273 // pred_check_branch
              %634 = sbr.rel (%p631) target = $region289
            $region288: #{tpu_custom_call.1} parent=273 // pred_region
              %s635 = sand.u32 1, 7
              %s636 = ssub.s32 1, %s635
              %s637 = scalar_lea.vmem %s608, %s636
              %s638 = ssub.s32 1, %s635
              %s639 = scalar_lea.vmem %s609, %s638 [#allocation2]
              %s640 = sshll.u32 1, %s635
              %s641 = ssub.s32 %s640, 1
              loop: start=0, step=1, limit=1
              $region290: #{tpu_custom_call.1} parent=288 // loop_pre_header
                _
              $region291: #{tpu_custom_call.1} parent=288 // loop_header
                %s643 = sphi 0, %s647
                %p644 = scmp.ge.s32.totalorder %s643, 1
                %s648 = sphi %s637, %s637
                %s649 = sphi %s639, %s639
              $region292: #{tpu_custom_call.1} parent=288 // loop_header_branch
                %646 = sbr.rel (%p644) target = $region296
              $region293: #{tpu_custom_call.1} parent=288 // loop_body
                %v650 = vld [vmem:[%s648] sm:%s641]
                %651 = vst [vmem:[%s649] sm:%s641] %v650
              $region294: #{tpu_custom_call.1} parent=288 // loop_footer
                %s647 = sadd.s32 1, %s643
              $region295: #{tpu_custom_call.1} parent=288 // loop_footer_branch
                %642 = sbr.rel target = $region291
              $region296: #{tpu_custom_call.1} parent=288 // loop_exit
                _
            $region289: #{tpu_custom_call.1} parent=273 // pred_fallthru
              _
          $region274: #{tpu_custom_call.1} parent=269 // pred_fallthru
            _
          // Predicated region
          $region275: #{tpu_custom_call.1} parent=269 // pred_check
            %p615 = pneg %p611
          $region276: #{tpu_custom_call.1} parent=269 // pred_check_branch
            %617 = sbr.rel (%p615) target = $region278
          $region277: #{tpu_custom_call.1} parent=269 // pred_region
            %s618 = sshll.u32 1, 1
            %s619 = ssub.s32 %s618, 1
            loop: start=0, step=1, limit=1
            $region279: #{tpu_custom_call.1} parent=277 // loop_pre_header
              _
            $region280: #{tpu_custom_call.1} parent=277 // loop_header
              %s621 = sphi 0, %s625
              %p622 = scmp.ge.s32.totalorder %s621, 1
              %s626 = sphi %s608, %s608
              %s627 = sphi %s609, %s609
            $region281: #{tpu_custom_call.1} parent=277 // loop_header_branch
              %624 = sbr.rel (%p622) target = $region285
            $region282: #{tpu_custom_call.1} parent=277 // loop_body
              %v628 = vld [vmem:[%s626] sm:%s619]
              %629 = vst [vmem:[%s627] sm:%s619] %v628
            $region283: #{tpu_custom_call.1} parent=277 // loop_footer
              %s625 = sadd.s32 1, %s621
            $region284: #{tpu_custom_call.1} parent=277 // loop_footer_branch
              %620 = sbr.rel target = $region280
            $region285: #{tpu_custom_call.1} parent=277 // loop_exit
              _
          $region278: #{tpu_custom_call.1} parent=269 // pred_fallthru
            _
          // Predicated region
          $region297: #{tpu_custom_call.1} parent=269 // pred_check
            _
          $region298: #{tpu_custom_call.1} parent=269 // pred_check_branch
            %654 = sbr.rel (0) target = $region300
          $region299: #{tpu_custom_call.1} parent=269 // pred_region
            %655 = vsyncadd [#allocation4], 16
          $region300: #{tpu_custom_call.1} parent=269 // pred_fallthru
            _
        $region270: #{tpu_custom_call.1} parent=27 // pred_fallthru
          _
        loop: start=0, step=1, limit=2
        $region301: #{tpu_custom_call.1} parent=27 // loop_pre_header
          _
        $region302: #{tpu_custom_call.1} parent=27 // loop_header
          %s657 = sphi 0, %s661
          %p658 = scmp.ge.s32.totalorder %s657, 2
        $region303: #{tpu_custom_call.1} parent=27 // loop_header_branch
          %660 = sbr.rel (%p658) target = $region307
        $region304: #{tpu_custom_call.1} parent=27 // loop_body
          %p662 = scmp.lt.s32.totalorder %s657, 0
          %s663 = ssub.s32 0, %s657
          %s664 = scalar_select %p662, %s663, %s657
          %s665 = sand.u32 %s664, 1
          %s666 = ssub.s32 0, %s665
          %s667 = scalar_select %p662, %s666, %s665
          %p668 = scmp.ne.s32.totalorder %s667, 0
          %p669 = scmp.lt.s32.totalorder %s667, 0
          %p670 = pnand %p669, %p668
          %p671 = pneg %p670
          %s672 = sadd.s32 %s667, 2
          %s673 = scalar_select %p671, %s672, %s667
          %s674 = sadd.s32 %s657, 1
          %p675 = scmp.lt.s32.totalorder %s674, 2
          // Predicated region
          $region308: #{tpu_custom_call.1} parent=304 // pred_check
            %p676 = pneg %p675
          $region309: #{tpu_custom_call.1} parent=304 // pred_check_branch
            %678 = sbr.rel (%p676) target = $region311
          $region310: #{tpu_custom_call.1} parent=304 // pred_region
            %s679 = ssub.s32 1, %s673
            %s680 = smul.u32 %s674, 8
            %s681 = sadd.s32 %s214, %s680
            %s682 = sld [smem:[#allocation6 + %s681]]
            %p683 = scmp.ne.s32.totalorder %s682, 0
            // Predicated region
            $region312: #{tpu_custom_call.1} parent=310 // pred_check
              %p684 = pneg %p683
            $region313: #{tpu_custom_call.1} parent=310 // pred_check_branch
              %686 = sbr.rel (%p684) target = $region315
            $region314: #{tpu_custom_call.1} parent=310 // pred_region
              %s687 = sadd.s32 %s213, %s682
              %s688 = smul.u32 %s679, 8
              %s689 = scalar_lea.vmem %s4, %s687
              %s690 = scalar_lea.vmem [#allocation2], %s688
              %s691 = scalar_lea.sflag [#allocation4], %s679
              %p693 = scmp.lt.u32.totalorder 1, 8
              %p694 = pneg %p693
              // Predicated region
              $region316: #{tpu_custom_call.1} parent=314 // pred_check
                _
              $region317: #{tpu_custom_call.1} parent=314 // pred_check_branch
                %696 = sbr.rel (%p693) target = $region319
              $region318: #{tpu_custom_call.1} parent=314 // pred_region
                %s712 = sand.u32 1, 7
                %p713 = scmp.eq.s32.totalorder %s712, 0
                %p714 = pneg %p713
                // Predicated region
                $region331: #{tpu_custom_call.1} parent=318 // pred_check
                  _
                $region332: #{tpu_custom_call.1} parent=318 // pred_check_branch
                  %716 = sbr.rel (%p713) target = $region334
                $region333: #{tpu_custom_call.1} parent=318 // pred_region
                  %s717 = sand.u32 1, 7
                  %s718 = ssub.s32 1, %s717
                  %s719 = scalar_lea.vmem %s689, %s718
                  %s720 = ssub.s32 1, %s717
                  %s721 = scalar_lea.vmem %s690, %s720 [#allocation2]
                  %s722 = sshll.u32 1, %s717
                  %s723 = ssub.s32 %s722, 1
                  loop: start=0, step=1, limit=1
                  $region335: #{tpu_custom_call.1} parent=333 // loop_pre_header
                    _
                  $region336: #{tpu_custom_call.1} parent=333 // loop_header
                    %s725 = sphi 0, %s729
                    %p726 = scmp.ge.s32.totalorder %s725, 1
                    %s730 = sphi %s719, %s719
                    %s731 = sphi %s721, %s721
                  $region337: #{tpu_custom_call.1} parent=333 // loop_header_branch
                    %728 = sbr.rel (%p726) target = $region341
                  $region338: #{tpu_custom_call.1} parent=333 // loop_body
                    %v732 = vld [vmem:[%s730] sm:%s723]
                    %733 = vst [vmem:[%s731] sm:%s723] %v732
                  $region339: #{tpu_custom_call.1} parent=333 // loop_footer
                    %s729 = sadd.s32 1, %s725
                  $region340: #{tpu_custom_call.1} parent=333 // loop_footer_branch
                    %724 = sbr.rel target = $region336
                  $region341: #{tpu_custom_call.1} parent=333 // loop_exit
                    _
                $region334: #{tpu_custom_call.1} parent=318 // pred_fallthru
                  _
              $region319: #{tpu_custom_call.1} parent=314 // pred_fallthru
                _
              // Predicated region
              $region320: #{tpu_custom_call.1} parent=314 // pred_check
                %p697 = pneg %p693
              $region321: #{tpu_custom_call.1} parent=314 // pred_check_branch
                %699 = sbr.rel (%p697) target = $region323
              $region322: #{tpu_custom_call.1} parent=314 // pred_region
                %s700 = sshll.u32 1, 1
                %s701 = ssub.s32 %s700, 1
                loop: start=0, step=1, limit=1
                $region324: #{tpu_custom_call.1} parent=322 // loop_pre_header
                  _
                $region325: #{tpu_custom_call.1} parent=322 // loop_header
                  %s703 = sphi 0, %s707
                  %p704 = scmp.ge.s32.totalorder %s703, 1
                  %s708 = sphi %s689, %s689
                  %s709 = sphi %s690, %s690
                $region326: #{tpu_custom_call.1} parent=322 // loop_header_branch
                  %706 = sbr.rel (%p704) target = $region330
                $region327: #{tpu_custom_call.1} parent=322 // loop_body
                  %v710 = vld [vmem:[%s708] sm:%s701]
                  %711 = vst [vmem:[%s709] sm:%s701] %v710
                $region328: #{tpu_custom_call.1} parent=322 // loop_footer
                  %s707 = sadd.s32 1, %s703
                $region329: #{tpu_custom_call.1} parent=322 // loop_footer_branch
                  %702 = sbr.rel target = $region325
                $region330: #{tpu_custom_call.1} parent=322 // loop_exit
                  _
              $region323: #{tpu_custom_call.1} parent=314 // pred_fallthru
                _
              // Predicated region
              $region342: #{tpu_custom_call.1} parent=314 // pred_check
                _
              $region343: #{tpu_custom_call.1} parent=314 // pred_check_branch
                %736 = sbr.rel (0) target = $region345
              $region344: #{tpu_custom_call.1} parent=314 // pred_region
                %737 = vsyncadd %s691, 16
              $region345: #{tpu_custom_call.1} parent=314 // pred_fallthru
                _
            $region315: #{tpu_custom_call.1} parent=310 // pred_fallthru
              _
            %s738 = sadd.s32 %s681, 1
            %s739 = sld [smem:[#allocation6 + %s738]]
            %p740 = scmp.ne.s32.totalorder %s739, 0
            // Predicated region
            $region346: #{tpu_custom_call.1} parent=310 // pred_check
              %p741 = pneg %p740
            $region347: #{tpu_custom_call.1} parent=310 // pred_check_branch
              %743 = sbr.rel (%p741) target = $region349
            $region348: #{tpu_custom_call.1} parent=310 // pred_region
              %s744 = sadd.s32 %s213, %s739
              %s745 = smul.u32 %s679, 8
              %s746 = sadd.s32 %s745, 1
              %s747 = scalar_lea.vmem %s4, %s744
              %s748 = scalar_lea.vmem [#allocation2], %s746
              %s749 = scalar_lea.sflag [#allocation4], %s679
              %p751 = scmp.lt.u32.totalorder 1, 8
              %p752 = pneg %p751
              // Predicated region
              $region350: #{tpu_custom_call.1} parent=348 // pred_check
                _
              $region351: #{tpu_custom_call.1} parent=348 // pred_check_branch
                %754 = sbr.rel (%p751) target = $region353
              $region352: #{tpu_custom_call.1} parent=348 // pred_region
                %s770 = sand.u32 1, 7
                %p771 = scmp.eq.s32.totalorder %s770, 0
                %p772 = pneg %p771
                // Predicated region
                $region365: #{tpu_custom_call.1} parent=352 // pred_check
                  _
                $region366: #{tpu_custom_call.1} parent=352 // pred_check_branch
                  %774 = sbr.rel (%p771) target = $region368
                $region367: #{tpu_custom_call.1} parent=352 // pred_region
                  %s775 = sand.u32 1, 7
                  %s776 = ssub.s32 1, %s775
                  %s777 = scalar_lea.vmem %s747, %s776
                  %s778 = ssub.s32 1, %s775
                  %s779 = scalar_lea.vmem %s748, %s778 [#allocation2]
                  %s780 = sshll.u32 1, %s775
                  %s781 = ssub.s32 %s780, 1
                  loop: start=0, step=1, limit=1
                  $region369: #{tpu_custom_call.1} parent=367 // loop_pre_header
                    _
                  $region370: #{tpu_custom_call.1} parent=367 // loop_header
                    %s783 = sphi 0, %s787
                    %p784 = scmp.ge.s32.totalorder %s783, 1
                    %s788 = sphi %s777, %s777
                    %s789 = sphi %s779, %s779
                  $region371: #{tpu_custom_call.1} parent=367 // loop_header_branch
                    %786 = sbr.rel (%p784) target = $region375
                  $region372: #{tpu_custom_call.1} parent=367 // loop_body
                    %v790 = vld [vmem:[%s788] sm:%s781]
                    %791 = vst [vmem:[%s789] sm:%s781] %v790
                  $region373: #{tpu_custom_call.1} parent=367 // loop_footer
                    %s787 = sadd.s32 1, %s783
                  $region374: #{tpu_custom_call.1} parent=367 // loop_footer_branch
                    %782 = sbr.rel target = $region370
                  $region375: #{tpu_custom_call.1} parent=367 // loop_exit
                    _
                $region368: #{tpu_custom_call.1} parent=352 // pred_fallthru
                  _
              $region353: #{tpu_custom_call.1} parent=348 // pred_fallthru
                _
              // Predicated region
              $region354: #{tpu_custom_call.1} parent=348 // pred_check
                %p755 = pneg %p751
              $region355: #{tpu_custom_call.1} parent=348 // pred_check_branch
                %757 = sbr.rel (%p755) target = $region357
              $region356: #{tpu_custom_call.1} parent=348 // pred_region
                %s758 = sshll.u32 1, 1
                %s759 = ssub.s32 %s758, 1
                loop: start=0, step=1, limit=1
                $region358: #{tpu_custom_call.1} parent=356 // loop_pre_header
                  _
                $region359: #{tpu_custom_call.1} parent=356 // loop_header
                  %s761 = sphi 0, %s765
                  %p762 = scmp.ge.s32.totalorder %s761, 1
                  %s766 = sphi %s747, %s747
                  %s767 = sphi %s748, %s748
                $region360: #{tpu_custom_call.1} parent=356 // loop_header_branch
                  %764 = sbr.rel (%p762) target = $region364
                $region361: #{tpu_custom_call.1} parent=356 // loop_body
                  %v768 = vld [vmem:[%s766] sm:%s759]
                  %769 = vst [vmem:[%s767] sm:%s759] %v768
                $region362: #{tpu_custom_call.1} parent=356 // loop_footer
                  %s765 = sadd.s32 1, %s761
                $region363: #{tpu_custom_call.1} parent=356 // loop_footer_branch
                  %760 = sbr.rel target = $region359
                $region364: #{tpu_custom_call.1} parent=356 // loop_exit
                  _
              $region357: #{tpu_custom_call.1} parent=348 // pred_fallthru
                _
              // Predicated region
              $region376: #{tpu_custom_call.1} parent=348 // pred_check
                _
              $region377: #{tpu_custom_call.1} parent=348 // pred_check_branch
                %794 = sbr.rel (0) target = $region379
              $region378: #{tpu_custom_call.1} parent=348 // pred_region
                %795 = vsyncadd %s749, 16
              $region379: #{tpu_custom_call.1} parent=348 // pred_fallthru
                _
            $region349: #{tpu_custom_call.1} parent=310 // pred_fallthru
              _
            %s796 = sadd.s32 %s681, 2
            %s797 = sld [smem:[#allocation6 + %s796]]
            %p798 = scmp.ne.s32.totalorder %s797, 0
            // Predicated region
            $region380: #{tpu_custom_call.1} parent=310 // pred_check
              %p799 = pneg %p798
            $region381: #{tpu_custom_call.1} parent=310 // pred_check_branch
              %801 = sbr.rel (%p799) target = $region383
            $region382: #{tpu_custom_call.1} parent=310 // pred_region
              %s802 = sadd.s32 %s213, %s797
              %s803 = smul.u32 %s679, 8
              %s804 = sadd.s32 %s803, 2
              %s805 = scalar_lea.vmem %s4, %s802
              %s806 = scalar_lea.vmem [#allocation2], %s804
              %s807 = scalar_lea.sflag [#allocation4], %s679
              %p809 = scmp.lt.u32.totalorder 1, 8
              %p810 = pneg %p809
              // Predicated region
              $region384: #{tpu_custom_call.1} parent=382 // pred_check
                _
              $region385: #{tpu_custom_call.1} parent=382 // pred_check_branch
                %812 = sbr.rel (%p809) target = $region387
              $region386: #{tpu_custom_call.1} parent=382 // pred_region
                %s828 = sand.u32 1, 7
                %p829 = scmp.eq.s32.totalorder %s828, 0
                %p830 = pneg %p829
                // Predicated region
                $region399: #{tpu_custom_call.1} parent=386 // pred_check
                  _
                $region400: #{tpu_custom_call.1} parent=386 // pred_check_branch
                  %832 = sbr.rel (%p829) target = $region402
                $region401: #{tpu_custom_call.1} parent=386 // pred_region
                  %s833 = sand.u32 1, 7
                  %s834 = ssub.s32 1, %s833
                  %s835 = scalar_lea.vmem %s805, %s834
                  %s836 = ssub.s32 1, %s833
                  %s837 = scalar_lea.vmem %s806, %s836 [#allocation2]
                  %s838 = sshll.u32 1, %s833
                  %s839 = ssub.s32 %s838, 1
                  loop: start=0, step=1, limit=1
                  $region403: #{tpu_custom_call.1} parent=401 // loop_pre_header
                    _
                  $region404: #{tpu_custom_call.1} parent=401 // loop_header
                    %s841 = sphi 0, %s845
                    %p842 = scmp.ge.s32.totalorder %s841, 1
                    %s846 = sphi %s835, %s835
                    %s847 = sphi %s837, %s837
                  $region405: #{tpu_custom_call.1} parent=401 // loop_header_branch
                    %844 = sbr.rel (%p842) target = $region409
                  $region406: #{tpu_custom_call.1} parent=401 // loop_body
                    %v848 = vld [vmem:[%s846] sm:%s839]
                    %849 = vst [vmem:[%s847] sm:%s839] %v848
                  $region407: #{tpu_custom_call.1} parent=401 // loop_footer
                    %s845 = sadd.s32 1, %s841
                  $region408: #{tpu_custom_call.1} parent=401 // loop_footer_branch
                    %840 = sbr.rel target = $region404
                  $region409: #{tpu_custom_call.1} parent=401 // loop_exit
                    _
                $region402: #{tpu_custom_call.1} parent=386 // pred_fallthru
                  _
              $region387: #{tpu_custom_call.1} parent=382 // pred_fallthru
                _
              // Predicated region
              $region388: #{tpu_custom_call.1} parent=382 // pred_check
                %p813 = pneg %p809
              $region389: #{tpu_custom_call.1} parent=382 // pred_check_branch
                %815 = sbr.rel (%p813) target = $region391
              $region390: #{tpu_custom_call.1} parent=382 // pred_region
                %s816 = sshll.u32 1, 1
                %s817 = ssub.s32 %s816, 1
                loop: start=0, step=1, limit=1
                $region392: #{tpu_custom_call.1} parent=390 // loop_pre_header
                  _
                $region393: #{tpu_custom_call.1} parent=390 // loop_header
                  %s819 = sphi 0, %s823
                  %p820 = scmp.ge.s32.totalorder %s819, 1
                  %s824 = sphi %s805, %s805
                  %s825 = sphi %s806, %s806
                $region394: #{tpu_custom_call.1} parent=390 // loop_header_branch
                  %822 = sbr.rel (%p820) target = $region398
                $region395: #{tpu_custom_call.1} parent=390 // loop_body
                  %v826 = vld [vmem:[%s824] sm:%s817]
                  %827 = vst [vmem:[%s825] sm:%s817] %v826
                $region396: #{tpu_custom_call.1} parent=390 // loop_footer
                  %s823 = sadd.s32 1, %s819
                $region397: #{tpu_custom_call.1} parent=390 // loop_footer_branch
                  %818 = sbr.rel target = $region393
                $region398: #{tpu_custom_call.1} parent=390 // loop_exit
                  _
              $region391: #{tpu_custom_call.1} parent=382 // pred_fallthru
                _
              // Predicated region
              $region410: #{tpu_custom_call.1} parent=382 // pred_check
                _
              $region411: #{tpu_custom_call.1} parent=382 // pred_check_branch
                %852 = sbr.rel (0) target = $region413
              $region412: #{tpu_custom_call.1} parent=382 // pred_region
                %853 = vsyncadd %s807, 16
              $region413: #{tpu_custom_call.1} parent=382 // pred_fallthru
                _
            $region383: #{tpu_custom_call.1} parent=310 // pred_fallthru
              _
            %s854 = sadd.s32 %s681, 3
            %s855 = sld [smem:[#allocation6 + %s854]]
            %p856 = scmp.ne.s32.totalorder %s855, 0
            // Predicated region
            $region414: #{tpu_custom_call.1} parent=310 // pred_check
              %p857 = pneg %p856
            $region415: #{tpu_custom_call.1} parent=310 // pred_check_branch
              %859 = sbr.rel (%p857) target = $region417
            $region416: #{tpu_custom_call.1} parent=310 // pred_region
              %s860 = sadd.s32 %s213, %s855
              %s861 = smul.u32 %s679, 8
              %s862 = sadd.s32 %s861, 3
              %s863 = scalar_lea.vmem %s4, %s860
              %s864 = scalar_lea.vmem [#allocation2], %s862
              %s865 = scalar_lea.sflag [#allocation4], %s679
              %p867 = scmp.lt.u32.totalorder 1, 8
              %p868 = pneg %p867
              // Predicated region
              $region418: #{tpu_custom_call.1} parent=416 // pred_check
                _
              $region419: #{tpu_custom_call.1} parent=416 // pred_check_branch
                %870 = sbr.rel (%p867) target = $region421
              $region420: #{tpu_custom_call.1} parent=416 // pred_region
                %s886 = sand.u32 1, 7
                %p887 = scmp.eq.s32.totalorder %s886, 0
                %p888 = pneg %p887
                // Predicated region
                $region433: #{tpu_custom_call.1} parent=420 // pred_check
                  _
                $region434: #{tpu_custom_call.1} parent=420 // pred_check_branch
                  %890 = sbr.rel (%p887) target = $region436
                $region435: #{tpu_custom_call.1} parent=420 // pred_region
                  %s891 = sand.u32 1, 7
                  %s892 = ssub.s32 1, %s891
                  %s893 = scalar_lea.vmem %s863, %s892
                  %s894 = ssub.s32 1, %s891
                  %s895 = scalar_lea.vmem %s864, %s894 [#allocation2]
                  %s896 = sshll.u32 1, %s891
                  %s897 = ssub.s32 %s896, 1
                  loop: start=0, step=1, limit=1
                  $region437: #{tpu_custom_call.1} parent=435 // loop_pre_header
                    _
                  $region438: #{tpu_custom_call.1} parent=435 // loop_header
                    %s899 = sphi 0, %s903
                    %p900 = scmp.ge.s32.totalorder %s899, 1
                    %s904 = sphi %s893, %s893
                    %s905 = sphi %s895, %s895
                  $region439: #{tpu_custom_call.1} parent=435 // loop_header_branch
                    %902 = sbr.rel (%p900) target = $region443
                  $region440: #{tpu_custom_call.1} parent=435 // loop_body
                    %v906 = vld [vmem:[%s904] sm:%s897]
                    %907 = vst [vmem:[%s905] sm:%s897] %v906
                  $region441: #{tpu_custom_call.1} parent=435 // loop_footer
                    %s903 = sadd.s32 1, %s899
                  $region442: #{tpu_custom_call.1} parent=435 // loop_footer_branch
                    %898 = sbr.rel target = $region438
                  $region443: #{tpu_custom_call.1} parent=435 // loop_exit
                    _
                $region436: #{tpu_custom_call.1} parent=420 // pred_fallthru
                  _
              $region421: #{tpu_custom_call.1} parent=416 // pred_fallthru
                _
              // Predicated region
              $region422: #{tpu_custom_call.1} parent=416 // pred_check
                %p871 = pneg %p867
              $region423: #{tpu_custom_call.1} parent=416 // pred_check_branch
                %873 = sbr.rel (%p871) target = $region425
              $region424: #{tpu_custom_call.1} parent=416 // pred_region
                %s874 = sshll.u32 1, 1
                %s875 = ssub.s32 %s874, 1
                loop: start=0, step=1, limit=1
                $region426: #{tpu_custom_call.1} parent=424 // loop_pre_header
                  _
                $region427: #{tpu_custom_call.1} parent=424 // loop_header
                  %s877 = sphi 0, %s881
                  %p878 = scmp.ge.s32.totalorder %s877, 1
                  %s882 = sphi %s863, %s863
                  %s883 = sphi %s864, %s864
                $region428: #{tpu_custom_call.1} parent=424 // loop_header_branch
                  %880 = sbr.rel (%p878) target = $region432
                $region429: #{tpu_custom_call.1} parent=424 // loop_body
                  %v884 = vld [vmem:[%s882] sm:%s875]
                  %885 = vst [vmem:[%s883] sm:%s875] %v884
                $region430: #{tpu_custom_call.1} parent=424 // loop_footer
                  %s881 = sadd.s32 1, %s877
                $region431: #{tpu_custom_call.1} parent=424 // loop_footer_branch
                  %876 = sbr.rel target = $region427
                $region432: #{tpu_custom_call.1} parent=424 // loop_exit
                  _
              $region425: #{tpu_custom_call.1} parent=416 // pred_fallthru
                _
              // Predicated region
              $region444: #{tpu_custom_call.1} parent=416 // pred_check
                _
              $region445: #{tpu_custom_call.1} parent=416 // pred_check_branch
                %910 = sbr.rel (0) target = $region447
              $region446: #{tpu_custom_call.1} parent=416 // pred_region
                %911 = vsyncadd %s865, 16
              $region447: #{tpu_custom_call.1} parent=416 // pred_fallthru
                _
            $region417: #{tpu_custom_call.1} parent=310 // pred_fallthru
              _
            %s912 = sadd.s32 %s681, 4
            %s913 = sld [smem:[#allocation6 + %s912]]
            %p914 = scmp.ne.s32.totalorder %s913, 0
            // Predicated region
            $region448: #{tpu_custom_call.1} parent=310 // pred_check
              %p915 = pneg %p914
            $region449: #{tpu_custom_call.1} parent=310 // pred_check_branch
              %917 = sbr.rel (%p915) target = $region451
            $region450: #{tpu_custom_call.1} parent=310 // pred_region
              %s918 = sadd.s32 %s213, %s913
              %s919 = smul.u32 %s679, 8
              %s920 = sadd.s32 %s919, 4
              %s921 = scalar_lea.vmem %s4, %s918
              %s922 = scalar_lea.vmem [#allocation2], %s920
              %s923 = scalar_lea.sflag [#allocation4], %s679
              %p925 = scmp.lt.u32.totalorder 1, 8
              %p926 = pneg %p925
              // Predicated region
              $region452: #{tpu_custom_call.1} parent=450 // pred_check
                _
              $region453: #{tpu_custom_call.1} parent=450 // pred_check_branch
                %928 = sbr.rel (%p925) target = $region455
              $region454: #{tpu_custom_call.1} parent=450 // pred_region
                %s944 = sand.u32 1, 7
                %p945 = scmp.eq.s32.totalorder %s944, 0
                %p946 = pneg %p945
                // Predicated region
                $region467: #{tpu_custom_call.1} parent=454 // pred_check
                  _
                $region468: #{tpu_custom_call.1} parent=454 // pred_check_branch
                  %948 = sbr.rel (%p945) target = $region470
                $region469: #{tpu_custom_call.1} parent=454 // pred_region
                  %s949 = sand.u32 1, 7
                  %s950 = ssub.s32 1, %s949
                  %s951 = scalar_lea.vmem %s921, %s950
                  %s952 = ssub.s32 1, %s949
                  %s953 = scalar_lea.vmem %s922, %s952 [#allocation2]
                  %s954 = sshll.u32 1, %s949
                  %s955 = ssub.s32 %s954, 1
                  loop: start=0, step=1, limit=1
                  $region471: #{tpu_custom_call.1} parent=469 // loop_pre_header
                    _
                  $region472: #{tpu_custom_call.1} parent=469 // loop_header
                    %s957 = sphi 0, %s961
                    %p958 = scmp.ge.s32.totalorder %s957, 1
                    %s962 = sphi %s951, %s951
                    %s963 = sphi %s953, %s953
                  $region473: #{tpu_custom_call.1} parent=469 // loop_header_branch
                    %960 = sbr.rel (%p958) target = $region477
                  $region474: #{tpu_custom_call.1} parent=469 // loop_body
                    %v964 = vld [vmem:[%s962] sm:%s955]
                    %965 = vst [vmem:[%s963] sm:%s955] %v964
                  $region475: #{tpu_custom_call.1} parent=469 // loop_footer
                    %s961 = sadd.s32 1, %s957
                  $region476: #{tpu_custom_call.1} parent=469 // loop_footer_branch
                    %956 = sbr.rel target = $region472
                  $region477: #{tpu_custom_call.1} parent=469 // loop_exit
                    _
                $region470: #{tpu_custom_call.1} parent=454 // pred_fallthru
                  _
              $region455: #{tpu_custom_call.1} parent=450 // pred_fallthru
                _
              // Predicated region
              $region456: #{tpu_custom_call.1} parent=450 // pred_check
                %p929 = pneg %p925
              $region457: #{tpu_custom_call.1} parent=450 // pred_check_branch
                %931 = sbr.rel (%p929) target = $region459
              $region458: #{tpu_custom_call.1} parent=450 // pred_region
                %s932 = sshll.u32 1, 1
                %s933 = ssub.s32 %s932, 1
                loop: start=0, step=1, limit=1
                $region460: #{tpu_custom_call.1} parent=458 // loop_pre_header
                  _
                $region461: #{tpu_custom_call.1} parent=458 // loop_header
                  %s935 = sphi 0, %s939
                  %p936 = scmp.ge.s32.totalorder %s935, 1
                  %s940 = sphi %s921, %s921
                  %s941 = sphi %s922, %s922
                $region462: #{tpu_custom_call.1} parent=458 // loop_header_branch
                  %938 = sbr.rel (%p936) target = $region466
                $region463: #{tpu_custom_call.1} parent=458 // loop_body
                  %v942 = vld [vmem:[%s940] sm:%s933]
                  %943 = vst [vmem:[%s941] sm:%s933] %v942
                $region464: #{tpu_custom_call.1} parent=458 // loop_footer
                  %s939 = sadd.s32 1, %s935
                $region465: #{tpu_custom_call.1} parent=458 // loop_footer_branch
                  %934 = sbr.rel target = $region461
                $region466: #{tpu_custom_call.1} parent=458 // loop_exit
                  _
              $region459: #{tpu_custom_call.1} parent=450 // pred_fallthru
                _
              // Predicated region
              $region478: #{tpu_custom_call.1} parent=450 // pred_check
                _
              $region479: #{tpu_custom_call.1} parent=450 // pred_check_branch
                %968 = sbr.rel (0) target = $region481
              $region480: #{tpu_custom_call.1} parent=450 // pred_region
                %969 = vsyncadd %s923, 16
              $region481: #{tpu_custom_call.1} parent=450 // pred_fallthru
                _
            $region451: #{tpu_custom_call.1} parent=310 // pred_fallthru
              _
            %s970 = sadd.s32 %s681, 5
            %s971 = sld [smem:[#allocation6 + %s970]]
            %p972 = scmp.ne.s32.totalorder %s971, 0
            // Predicated region
            $region482: #{tpu_custom_call.1} parent=310 // pred_check
              %p973 = pneg %p972
            $region483: #{tpu_custom_call.1} parent=310 // pred_check_branch
              %975 = sbr.rel (%p973) target = $region485
            $region484: #{tpu_custom_call.1} parent=310 // pred_region
              %s976 = sadd.s32 %s213, %s971
              %s977 = smul.u32 %s679, 8
              %s978 = sadd.s32 %s977, 5
              %s979 = scalar_lea.vmem %s4, %s976
              %s980 = scalar_lea.vmem [#allocation2], %s978
              %s981 = scalar_lea.sflag [#allocation4], %s679
              %p983 = scmp.lt.u32.totalorder 1, 8
              %p984 = pneg %p983
              // Predicated region
              $region486: #{tpu_custom_call.1} parent=484 // pred_check
                _
              $region487: #{tpu_custom_call.1} parent=484 // pred_check_branch
                %986 = sbr.rel (%p983) target = $region489
              $region488: #{tpu_custom_call.1} parent=484 // pred_region
                %s1002 = sand.u32 1, 7
                %p1003 = scmp.eq.s32.totalorder %s1002, 0
                %p1004 = pneg %p1003
                // Predicated region
                $region501: #{tpu_custom_call.1} parent=488 // pred_check
                  _
                $region502: #{tpu_custom_call.1} parent=488 // pred_check_branch
                  %1006 = sbr.rel (%p1003) target = $region504
                $region503: #{tpu_custom_call.1} parent=488 // pred_region
                  %s1007 = sand.u32 1, 7
                  %s1008 = ssub.s32 1, %s1007
                  %s1009 = scalar_lea.vmem %s979, %s1008
                  %s1010 = ssub.s32 1, %s1007
                  %s1011 = scalar_lea.vmem %s980, %s1010 [#allocation2]
                  %s1012 = sshll.u32 1, %s1007
                  %s1013 = ssub.s32 %s1012, 1
                  loop: start=0, step=1, limit=1
                  $region505: #{tpu_custom_call.1} parent=503 // loop_pre_header
                    _
                  $region506: #{tpu_custom_call.1} parent=503 // loop_header
                    %s1015 = sphi 0, %s1019
                    %p1016 = scmp.ge.s32.totalorder %s1015, 1
                    %s1020 = sphi %s1009, %s1009
                    %s1021 = sphi %s1011, %s1011
                  $region507: #{tpu_custom_call.1} parent=503 // loop_header_branch
                    %1018 = sbr.rel (%p1016) target = $region511
                  $region508: #{tpu_custom_call.1} parent=503 // loop_body
                    %v1022 = vld [vmem:[%s1020] sm:%s1013]
                    %1023 = vst [vmem:[%s1021] sm:%s1013] %v1022
                  $region509: #{tpu_custom_call.1} parent=503 // loop_footer
                    %s1019 = sadd.s32 1, %s1015
                  $region510: #{tpu_custom_call.1} parent=503 // loop_footer_branch
                    %1014 = sbr.rel target = $region506
                  $region511: #{tpu_custom_call.1} parent=503 // loop_exit
                    _
                $region504: #{tpu_custom_call.1} parent=488 // pred_fallthru
                  _
              $region489: #{tpu_custom_call.1} parent=484 // pred_fallthru
                _
              // Predicated region
              $region490: #{tpu_custom_call.1} parent=484 // pred_check
                %p987 = pneg %p983
              $region491: #{tpu_custom_call.1} parent=484 // pred_check_branch
                %989 = sbr.rel (%p987) target = $region493
              $region492: #{tpu_custom_call.1} parent=484 // pred_region
                %s990 = sshll.u32 1, 1
                %s991 = ssub.s32 %s990, 1
                loop: start=0, step=1, limit=1
                $region494: #{tpu_custom_call.1} parent=492 // loop_pre_header
                  _
                $region495: #{tpu_custom_call.1} parent=492 // loop_header
                  %s993 = sphi 0, %s997
                  %p994 = scmp.ge.s32.totalorder %s993, 1
                  %s998 = sphi %s979, %s979
                  %s999 = sphi %s980, %s980
                $region496: #{tpu_custom_call.1} parent=492 // loop_header_branch
                  %996 = sbr.rel (%p994) target = $region500
                $region497: #{tpu_custom_call.1} parent=492 // loop_body
                  %v1000 = vld [vmem:[%s998] sm:%s991]
                  %1001 = vst [vmem:[%s999] sm:%s991] %v1000
                $region498: #{tpu_custom_call.1} parent=492 // loop_footer
                  %s997 = sadd.s32 1, %s993
                $region499: #{tpu_custom_call.1} parent=492 // loop_footer_branch
                  %992 = sbr.rel target = $region495
                $region500: #{tpu_custom_call.1} parent=492 // loop_exit
                  _
              $region493: #{tpu_custom_call.1} parent=484 // pred_fallthru
                _
              // Predicated region
              $region512: #{tpu_custom_call.1} parent=484 // pred_check
                _
              $region513: #{tpu_custom_call.1} parent=484 // pred_check_branch
                %1026 = sbr.rel (0) target = $region515
              $region514: #{tpu_custom_call.1} parent=484 // pred_region
                %1027 = vsyncadd %s981, 16
              $region515: #{tpu_custom_call.1} parent=484 // pred_fallthru
                _
            $region485: #{tpu_custom_call.1} parent=310 // pred_fallthru
              _
            %s1028 = sadd.s32 %s681, 6
            %s1029 = sld [smem:[#allocation6 + %s1028]]
            %p1030 = scmp.ne.s32.totalorder %s1029, 0
            // Predicated region
            $region516: #{tpu_custom_call.1} parent=310 // pred_check
              %p1031 = pneg %p1030
            $region517: #{tpu_custom_call.1} parent=310 // pred_check_branch
              %1033 = sbr.rel (%p1031) target = $region519
            $region518: #{tpu_custom_call.1} parent=310 // pred_region
              %s1034 = sadd.s32 %s213, %s1029
              %s1035 = smul.u32 %s679, 8
              %s1036 = sadd.s32 %s1035, 6
              %s1037 = scalar_lea.vmem %s4, %s1034
              %s1038 = scalar_lea.vmem [#allocation2], %s1036
              %s1039 = scalar_lea.sflag [#allocation4], %s679
              %p1041 = scmp.lt.u32.totalorder 1, 8
              %p1042 = pneg %p1041
              // Predicated region
              $region520: #{tpu_custom_call.1} parent=518 // pred_check
                _
              $region521: #{tpu_custom_call.1} parent=518 // pred_check_branch
                %1044 = sbr.rel (%p1041) target = $region523
              $region522: #{tpu_custom_call.1} parent=518 // pred_region
                %s1060 = sand.u32 1, 7
                %p1061 = scmp.eq.s32.totalorder %s1060, 0
                %p1062 = pneg %p1061
                // Predicated region
                $region535: #{tpu_custom_call.1} parent=522 // pred_check
                  _
                $region536: #{tpu_custom_call.1} parent=522 // pred_check_branch
                  %1064 = sbr.rel (%p1061) target = $region538
                $region537: #{tpu_custom_call.1} parent=522 // pred_region
                  %s1065 = sand.u32 1, 7
                  %s1066 = ssub.s32 1, %s1065
                  %s1067 = scalar_lea.vmem %s1037, %s1066
                  %s1068 = ssub.s32 1, %s1065
                  %s1069 = scalar_lea.vmem %s1038, %s1068 [#allocation2]
                  %s1070 = sshll.u32 1, %s1065
                  %s1071 = ssub.s32 %s1070, 1
                  loop: start=0, step=1, limit=1
                  $region539: #{tpu_custom_call.1} parent=537 // loop_pre_header
                    _
                  $region540: #{tpu_custom_call.1} parent=537 // loop_header
                    %s1073 = sphi 0, %s1077
                    %p1074 = scmp.ge.s32.totalorder %s1073, 1
                    %s1078 = sphi %s1067, %s1067
                    %s1079 = sphi %s1069, %s1069
                  $region541: #{tpu_custom_call.1} parent=537 // loop_header_branch
                    %1076 = sbr.rel (%p1074) target = $region545
                  $region542: #{tpu_custom_call.1} parent=537 // loop_body
                    %v1080 = vld [vmem:[%s1078] sm:%s1071]
                    %1081 = vst [vmem:[%s1079] sm:%s1071] %v1080
                  $region543: #{tpu_custom_call.1} parent=537 // loop_footer
                    %s1077 = sadd.s32 1, %s1073
                  $region544: #{tpu_custom_call.1} parent=537 // loop_footer_branch
                    %1072 = sbr.rel target = $region540
                  $region545: #{tpu_custom_call.1} parent=537 // loop_exit
                    _
                $region538: #{tpu_custom_call.1} parent=522 // pred_fallthru
                  _
              $region523: #{tpu_custom_call.1} parent=518 // pred_fallthru
                _
              // Predicated region
              $region524: #{tpu_custom_call.1} parent=518 // pred_check
                %p1045 = pneg %p1041
              $region525: #{tpu_custom_call.1} parent=518 // pred_check_branch
                %1047 = sbr.rel (%p1045) target = $region527
              $region526: #{tpu_custom_call.1} parent=518 // pred_region
                %s1048 = sshll.u32 1, 1
                %s1049 = ssub.s32 %s1048, 1
                loop: start=0, step=1, limit=1
                $region528: #{tpu_custom_call.1} parent=526 // loop_pre_header
                  _
                $region529: #{tpu_custom_call.1} parent=526 // loop_header
                  %s1051 = sphi 0, %s1055
                  %p1052 = scmp.ge.s32.totalorder %s1051, 1
                  %s1056 = sphi %s1037, %s1037
                  %s1057 = sphi %s1038, %s1038
                $region530: #{tpu_custom_call.1} parent=526 // loop_header_branch
                  %1054 = sbr.rel (%p1052) target = $region534
                $region531: #{tpu_custom_call.1} parent=526 // loop_body
                  %v1058 = vld [vmem:[%s1056] sm:%s1049]
                  %1059 = vst [vmem:[%s1057] sm:%s1049] %v1058
                $region532: #{tpu_custom_call.1} parent=526 // loop_footer
                  %s1055 = sadd.s32 1, %s1051
                $region533: #{tpu_custom_call.1} parent=526 // loop_footer_branch
                  %1050 = sbr.rel target = $region529
                $region534: #{tpu_custom_call.1} parent=526 // loop_exit
                  _
              $region527: #{tpu_custom_call.1} parent=518 // pred_fallthru
                _
              // Predicated region
              $region546: #{tpu_custom_call.1} parent=518 // pred_check
                _
              $region547: #{tpu_custom_call.1} parent=518 // pred_check_branch
                %1084 = sbr.rel (0) target = $region549
              $region548: #{tpu_custom_call.1} parent=518 // pred_region
                %1085 = vsyncadd %s1039, 16
              $region549: #{tpu_custom_call.1} parent=518 // pred_fallthru
                _
            $region519: #{tpu_custom_call.1} parent=310 // pred_fallthru
              _
            %s1086 = sadd.s32 %s681, 7
            %s1087 = sld [smem:[#allocation6 + %s1086]]
            %p1088 = scmp.ne.s32.totalorder %s1087, 0
            // Predicated region
            $region550: #{tpu_custom_call.1} parent=310 // pred_check
              %p1089 = pneg %p1088
            $region551: #{tpu_custom_call.1} parent=310 // pred_check_branch
              %1091 = sbr.rel (%p1089) target = $region553
            $region552: #{tpu_custom_call.1} parent=310 // pred_region
              %s1092 = sadd.s32 %s213, %s1087
              %s1093 = smul.u32 %s679, 8
              %s1094 = sadd.s32 %s1093, 7
              %s1095 = scalar_lea.vmem %s4, %s1092
              %s1096 = scalar_lea.vmem [#allocation2], %s1094
              %s1097 = scalar_lea.sflag [#allocation4], %s679
              %p1099 = scmp.lt.u32.totalorder 1, 8
              %p1100 = pneg %p1099
              // Predicated region
              $region554: #{tpu_custom_call.1} parent=552 // pred_check
                _
              $region555: #{tpu_custom_call.1} parent=552 // pred_check_branch
                %1102 = sbr.rel (%p1099) target = $region557
              $region556: #{tpu_custom_call.1} parent=552 // pred_region
                %s1118 = sand.u32 1, 7
                %p1119 = scmp.eq.s32.totalorder %s1118, 0
                %p1120 = pneg %p1119
                // Predicated region
                $region569: #{tpu_custom_call.1} parent=556 // pred_check
                  _
                $region570: #{tpu_custom_call.1} parent=556 // pred_check_branch
                  %1122 = sbr.rel (%p1119) target = $region572
                $region571: #{tpu_custom_call.1} parent=556 // pred_region
                  %s1123 = sand.u32 1, 7
                  %s1124 = ssub.s32 1, %s1123
                  %s1125 = scalar_lea.vmem %s1095, %s1124
                  %s1126 = ssub.s32 1, %s1123
                  %s1127 = scalar_lea.vmem %s1096, %s1126 [#allocation2]
                  %s1128 = sshll.u32 1, %s1123
                  %s1129 = ssub.s32 %s1128, 1
                  loop: start=0, step=1, limit=1
                  $region573: #{tpu_custom_call.1} parent=571 // loop_pre_header
                    _
                  $region574: #{tpu_custom_call.1} parent=571 // loop_header
                    %s1131 = sphi 0, %s1135
                    %p1132 = scmp.ge.s32.totalorder %s1131, 1
                    %s1136 = sphi %s1125, %s1125
                    %s1137 = sphi %s1127, %s1127
                  $region575: #{tpu_custom_call.1} parent=571 // loop_header_branch
                    %1134 = sbr.rel (%p1132) target = $region579
                  $region576: #{tpu_custom_call.1} parent=571 // loop_body
                    %v1138 = vld [vmem:[%s1136] sm:%s1129]
                    %1139 = vst [vmem:[%s1137] sm:%s1129] %v1138
                  $region577: #{tpu_custom_call.1} parent=571 // loop_footer
                    %s1135 = sadd.s32 1, %s1131
                  $region578: #{tpu_custom_call.1} parent=571 // loop_footer_branch
                    %1130 = sbr.rel target = $region574
                  $region579: #{tpu_custom_call.1} parent=571 // loop_exit
                    _
                $region572: #{tpu_custom_call.1} parent=556 // pred_fallthru
                  _
              $region557: #{tpu_custom_call.1} parent=552 // pred_fallthru
                _
              // Predicated region
              $region558: #{tpu_custom_call.1} parent=552 // pred_check
                %p1103 = pneg %p1099
              $region559: #{tpu_custom_call.1} parent=552 // pred_check_branch
                %1105 = sbr.rel (%p1103) target = $region561
              $region560: #{tpu_custom_call.1} parent=552 // pred_region
                %s1106 = sshll.u32 1, 1
                %s1107 = ssub.s32 %s1106, 1
                loop: start=0, step=1, limit=1
                $region562: #{tpu_custom_call.1} parent=560 // loop_pre_header
                  _
                $region563: #{tpu_custom_call.1} parent=560 // loop_header
                  %s1109 = sphi 0, %s1113
                  %p1110 = scmp.ge.s32.totalorder %s1109, 1
                  %s1114 = sphi %s1095, %s1095
                  %s1115 = sphi %s1096, %s1096
                $region564: #{tpu_custom_call.1} parent=560 // loop_header_branch
                  %1112 = sbr.rel (%p1110) target = $region568
                $region565: #{tpu_custom_call.1} parent=560 // loop_body
                  %v1116 = vld [vmem:[%s1114] sm:%s1107]
                  %1117 = vst [vmem:[%s1115] sm:%s1107] %v1116
                $region566: #{tpu_custom_call.1} parent=560 // loop_footer
                  %s1113 = sadd.s32 1, %s1109
                $region567: #{tpu_custom_call.1} parent=560 // loop_footer_branch
                  %1108 = sbr.rel target = $region563
                $region568: #{tpu_custom_call.1} parent=560 // loop_exit
                  _
              $region561: #{tpu_custom_call.1} parent=552 // pred_fallthru
                _
              // Predicated region
              $region580: #{tpu_custom_call.1} parent=552 // pred_check
                _
              $region581: #{tpu_custom_call.1} parent=552 // pred_check_branch
                %1142 = sbr.rel (0) target = $region583
              $region582: #{tpu_custom_call.1} parent=552 // pred_region
                %1143 = vsyncadd %s1097, 16
              $region583: #{tpu_custom_call.1} parent=552 // pred_fallthru
                _
            $region553: #{tpu_custom_call.1} parent=310 // pred_fallthru
              _
          $region311: #{tpu_custom_call.1} parent=304 // pred_fallthru
            _
          %s1144 = smul.u32 %s657, 8
          %s1145 = sadd.s32 %s214, %s1144
          %s1146 = sld [smem:[#allocation6 + %s1145]]
          %p1147 = scmp.ne.s32.totalorder %s1146, 0
          // Predicated region
          $region584: #{tpu_custom_call.1} parent=304 // pred_check
            %p1148 = pneg %p1147
          $region585: #{tpu_custom_call.1} parent=304 // pred_check_branch
            %1150 = sbr.rel (%p1148) target = $region587
          $region586: #{tpu_custom_call.1} parent=304 // pred_region
            %s1151 = scalar_lea.sflag [#allocation4], %s673
            %s1152 = smul.u32 1, 1
            %s1153 = sshll.u32 %s1152, 4
            %1154 = dma.done %s1151, %s1153
          $region587: #{tpu_custom_call.1} parent=304 // pred_fallthru
            _
          %s1155 = sadd.s32 %s1145, 1
          %s1156 = sld [smem:[#allocation6 + %s1155]]
          %p1157 = scmp.ne.s32.totalorder %s1156, 0
          // Predicated region
          $region588: #{tpu_custom_call.1} parent=304 // pred_check
            %p1158 = pneg %p1157
          $region589: #{tpu_custom_call.1} parent=304 // pred_check_branch
            %1160 = sbr.rel (%p1158) target = $region591
          $region590: #{tpu_custom_call.1} parent=304 // pred_region
            %s1161 = scalar_lea.sflag [#allocation4], %s673
            %s1162 = smul.u32 1, 1
            %s1163 = sshll.u32 %s1162, 4
            %1164 = dma.done %s1161, %s1163
          $region591: #{tpu_custom_call.1} parent=304 // pred_fallthru
            _
          %s1165 = sadd.s32 %s1145, 2
          %s1166 = sld [smem:[#allocation6 + %s1165]]
          %p1167 = scmp.ne.s32.totalorder %s1166, 0
          // Predicated region
          $region592: #{tpu_custom_call.1} parent=304 // pred_check
            %p1168 = pneg %p1167
          $region593: #{tpu_custom_call.1} parent=304 // pred_check_branch
            %1170 = sbr.rel (%p1168) target = $region595
          $region594: #{tpu_custom_call.1} parent=304 // pred_region
            %s1171 = scalar_lea.sflag [#allocation4], %s673
            %s1172 = smul.u32 1, 1
            %s1173 = sshll.u32 %s1172, 4
            %1174 = dma.done %s1171, %s1173
          $region595: #{tpu_custom_call.1} parent=304 // pred_fallthru
            _
          %s1175 = sadd.s32 %s1145, 3
          %s1176 = sld [smem:[#allocation6 + %s1175]]
          %p1177 = scmp.ne.s32.totalorder %s1176, 0
          // Predicated region
          $region596: #{tpu_custom_call.1} parent=304 // pred_check
            %p1178 = pneg %p1177
          $region597: #{tpu_custom_call.1} parent=304 // pred_check_branch
            %1180 = sbr.rel (%p1178) target = $region599
          $region598: #{tpu_custom_call.1} parent=304 // pred_region
            %s1181 = scalar_lea.sflag [#allocation4], %s673
            %s1182 = smul.u32 1, 1
            %s1183 = sshll.u32 %s1182, 4
            %1184 = dma.done %s1181, %s1183
          $region599: #{tpu_custom_call.1} parent=304 // pred_fallthru
            _
          %s1185 = sadd.s32 %s1145, 4
          %s1186 = sld [smem:[#allocation6 + %s1185]]
          %p1187 = scmp.ne.s32.totalorder %s1186, 0
          // Predicated region
          $region600: #{tpu_custom_call.1} parent=304 // pred_check
            %p1188 = pneg %p1187
          $region601: #{tpu_custom_call.1} parent=304 // pred_check_branch
            %1190 = sbr.rel (%p1188) target = $region603
          $region602: #{tpu_custom_call.1} parent=304 // pred_region
            %s1191 = scalar_lea.sflag [#allocation4], %s673
            %s1192 = smul.u32 1, 1
            %s1193 = sshll.u32 %s1192, 4
            %1194 = dma.done %s1191, %s1193
          $region603: #{tpu_custom_call.1} parent=304 // pred_fallthru
            _
          %s1195 = sadd.s32 %s1145, 5
          %s1196 = sld [smem:[#allocation6 + %s1195]]
          %p1197 = scmp.ne.s32.totalorder %s1196, 0
          // Predicated region
          $region604: #{tpu_custom_call.1} parent=304 // pred_check
            %p1198 = pneg %p1197
          $region605: #{tpu_custom_call.1} parent=304 // pred_check_branch
            %1200 = sbr.rel (%p1198) target = $region607
          $region606: #{tpu_custom_call.1} parent=304 // pred_region
            %s1201 = scalar_lea.sflag [#allocation4], %s673
            %s1202 = smul.u32 1, 1
            %s1203 = sshll.u32 %s1202, 4
            %1204 = dma.done %s1201, %s1203
          $region607: #{tpu_custom_call.1} parent=304 // pred_fallthru
            _
          %s1205 = sadd.s32 %s1145, 6
          %s1206 = sld [smem:[#allocation6 + %s1205]]
          %p1207 = scmp.ne.s32.totalorder %s1206, 0
          // Predicated region
          $region608: #{tpu_custom_call.1} parent=304 // pred_check
            %p1208 = pneg %p1207
          $region609: #{tpu_custom_call.1} parent=304 // pred_check_branch
            %1210 = sbr.rel (%p1208) target = $region611
          $region610: #{tpu_custom_call.1} parent=304 // pred_region
            %s1211 = scalar_lea.sflag [#allocation4], %s673
            %s1212 = smul.u32 1, 1
            %s1213 = sshll.u32 %s1212, 4
            %1214 = dma.done %s1211, %s1213
          $region611: #{tpu_custom_call.1} parent=304 // pred_fallthru
            _
          %s1215 = sadd.s32 %s1145, 7
          %s1216 = sld [smem:[#allocation6 + %s1215]]
          %p1217 = scmp.ne.s32.totalorder %s1216, 0
          // Predicated region
          $region612: #{tpu_custom_call.1} parent=304 // pred_check
            %p1218 = pneg %p1217
          $region613: #{tpu_custom_call.1} parent=304 // pred_check_branch
            %1220 = sbr.rel (%p1218) target = $region615
          $region614: #{tpu_custom_call.1} parent=304 // pred_region
            %s1221 = scalar_lea.sflag [#allocation4], %s673
            %s1222 = smul.u32 1, 1
            %s1223 = sshll.u32 %s1222, 4
            %1224 = dma.done %s1221, %s1223
          $region615: #{tpu_custom_call.1} parent=304 // pred_fallthru
            _
          %s1225 = smul.u32 %s673, 8
          %s1226 = scalar_lea.vmem [#allocation2], %s1225
          %v1227 = vld [vmem:[%s1226] sm:$0xff]
          %s1228 = scalar_lea.vmem %s204, %s657
          %v1229 = vld [vmem:[%s1228] sm:$0x1]
          %vm1230 = vcmp.ne.s32.totalorder %v1229, 0
          %v1231 = vsel %vm1230, 1, 0
          %v1232 = vcvt.s32.f32 %v1231
          %vm1233 = vcmask 64512
          %v1235 = vsel %vm1233, %v1232, 0
          %1237 = vmatprep.subr.mxu0 0.0
          %1238 = vmatpush1.msra.mxu0 0.0
          %1239 = vmatprep.subr.mxu0 0.0
          %1240 = vmatpush1.msra.mxu0 0.0
          %1241 = vmatprep.subr.mxu0 0.0
          %1242 = vmatpush1.msra.mxu0 0.0
          %1243 = vmatprep.subr.mxu0 0.0
          %1244 = vmatpush1.msra.mxu0 0.0
          %1245 = vmatprep.subr.mxu0 0.0
          %1246 = vmatpush1.msra.mxu0 0.0
          %1247 = vmatprep.subr.mxu0 0.0
          %1248 = vmatpush1.msra.mxu0 0.0
          %1249 = vmatprep.subr.mxu0 0.0
          %1250 = vmatpush1.msra.mxu0 0.0
          %1251 = vmatprep.subr.mxu0 0.0
          %1252 = vmatpush1.msra.mxu0 0.0
          %1253 = vmatprep.subr.mxu0 0.0
          %1254 = vmatpush1.msra.mxu0 0.0
          %1255 = vmatprep.subr.mxu0 0.0
          %1256 = vmatpush1.msra.mxu0 0.0
          %1257 = vmatprep.subr.mxu0 0.0
          %1258 = vmatpush1.msra.mxu0 0.0
          %1259 = vmatprep.subr.mxu0 0.0
          %1260 = vmatpush1.msra.mxu0 0.0
          %1261 = vmatprep.subr.mxu0 0.0
          %1262 = vmatpush1.msra.mxu0 0.0
          %1263 = vmatprep.subr.mxu0 0.0
          %1264 = vmatpush1.msra.mxu0 0.0
          %1265 = vmatprep.subr.mxu0 0.0
          %1266 = vmatpush1.msra.mxu0 0.0
          %1267 = vmatprep.subr.mxu0 0.0
          %1268 = vmatpush1.msra.mxu0 %v1227
          %1269 = vmatprep.subr.mxu0 0.0
          %1270 = vmatpush2.msra.mxu0 0.0
          %1271 = vmatprep.subr.mxu0 0.0
          %1272 = vmatpush2.msra.mxu0 0.0
          %1273 = vmatprep.subr.mxu0 0.0
          %1274 = vmatpush2.msra.mxu0 0.0
          %1275 = vmatprep.subr.mxu0 0.0
          %1276 = vmatpush2.msra.mxu0 0.0
          %1277 = vmatprep.subr.mxu0 0.0
          %1278 = vmatpush2.msra.mxu0 0.0
          %1279 = vmatprep.subr.mxu0 0.0
          %1280 = vmatpush2.msra.mxu0 0.0
          %1281 = vmatprep.subr.mxu0 0.0
          %1282 = vmatpush2.msra.mxu0 0.0
          %1283 = vmatprep.subr.mxu0 0.0
          %1284 = vmatpush2.msra.mxu0 0.0
          %1285 = vmatprep.subr.mxu0 0.0
          %1286 = vmatpush2.msra.mxu0 0.0
          %1287 = vmatprep.subr.mxu0 0.0
          %1288 = vmatpush2.msra.mxu0 0.0
          %1289 = vmatprep.subr.mxu0 0.0
          %1290 = vmatpush2.msra.mxu0 0.0
          %1291 = vmatprep.subr.mxu0 0.0
          %1292 = vmatpush2.msra.mxu0 0.0
          %1293 = vmatprep.subr.mxu0 0.0
          %1294 = vmatpush2.msra.mxu0 0.0
          %1295 = vmatprep.subr.mxu0 0.0
          %1296 = vmatpush2.msra.mxu0 0.0
          %1297 = vmatprep.subr.mxu0 0.0
          %1298 = vmatpush2.msra.mxu0 0.0
          %1299 = vmatprep.subr.mxu0 0.0
          %1300 = vmatpush2.msra.mxu0 0.0
          %1301 = vmatprep.mubr.f32.mxu0 0.0
          %1302 = vmatmul.mubr.f32.gmra.mxu0 %v1235
          %v1303 = vpop.f32.mrf.mxu0
          %v1304 = vadd.f32 0.0, %v1303
          %v1305 = vpop.f32.mrf.mxu0
          %1306 = vdwg.mxu0
          %vm1307 = vcmask 57344
          %v1308 = vsel %vm1307, %v1232, 0.0
          %1309 = vadd.xlane.f32.xlu0 %v1308
          %v1310 = vpop.xlane.xlu0 %1309
          %v1311 = vmax.f32 %v1310, 1.0
          %v1312 = vrcp.pop %v1311
          %v1313 = vmul.f32 %v1304, %v1312
          %s1314 = scalar_lea.vmem [#allocation3], %s657
          %vm1315 = vcmask 253952
          %1316 = vst.msk [vmem:[%s1314] sm:$0x1] %vm1315, %v1313
        $region305: #{tpu_custom_call.1} parent=27 // loop_footer
          %s661 = sadd.s32 1, %s657
        $region306: #{tpu_custom_call.1} parent=27 // loop_footer_branch
          %656 = sbr.rel target = $region302
        $region307: #{tpu_custom_call.1} parent=27 // loop_exit
          _
        %v1317 = vld [vmem:[#allocation3] sm:$0x3]
        %v1318 = vld [vmem:[%s209] sm:$0xff]
        %v1319 = vld [vmem:[%s209 + $0x8] sm:$0xff]
        %v1321 = vsel %vm215, %v1318, 0
        %v1324 = vsel %vm215, %v1319, 0
        %v1327 = vsel %vm215, %v1317, 0
        %1329 = vmatprep.subr.mxu0 0.0
        %1330 = vmatpush1.xpose.msra.mxu0 0.0
        %1331 = vmatprep.subr.mxu0 0.0
        %1332 = vmatpush1.xpose.msra.mxu0 0.0
        %1333 = vmatprep.subr.mxu0 0.0
        %1334 = vmatpush1.xpose.msra.mxu0 0.0
        %1335 = vmatprep.subr.mxu0 0.0
        %1336 = vmatpush1.xpose.msra.mxu0 0.0
        %1337 = vmatprep.subr.mxu0 0.0
        %1338 = vmatpush1.xpose.msra.mxu0 0.0
        %1339 = vmatprep.subr.mxu0 0.0
        %1340 = vmatpush1.xpose.msra.mxu0 0.0
        %1341 = vmatprep.subr.mxu0 0.0
        %1342 = vmatpush1.xpose.msra.mxu0 0.0
        %1343 = vmatprep.subr.mxu0 0.0
        %1344 = vmatpush1.xpose.msra.mxu0 0.0
        %1345 = vmatprep.subr.mxu0 0.0
        %1346 = vmatpush1.xpose.msra.mxu0 0.0
        %1347 = vmatprep.subr.mxu0 0.0
        %1348 = vmatpush1.xpose.msra.mxu0 0.0
        %1349 = vmatprep.subr.mxu0 0.0
        %1350 = vmatpush1.xpose.msra.mxu0 0.0
        %1351 = vmatprep.subr.mxu0 0.0
        %1352 = vmatpush1.xpose.msra.mxu0 0.0
        %1353 = vmatprep.subr.mxu0 0.0
        %1354 = vmatpush1.xpose.msra.mxu0 0.0
        %1355 = vmatprep.subr.mxu0 0.0
        %1356 = vmatpush1.xpose.msra.mxu0 0.0
        %1357 = vmatprep.subr.mxu0 0.0
        %1358 = vmatpush1.xpose.msra.mxu0 0.0
        %1359 = vmatprep.subr.mxu0 0.0
        %1360 = vmatpush1.xpose.msra.mxu0 %v1327
        %1361 = vmatprep.subr.mxu0 0.0
        %1362 = vmatpush2.xpose.msra.mxu0 0.0
        %1363 = vmatprep.subr.mxu0 0.0
        %1364 = vmatpush2.xpose.msra.mxu0 0.0
        %1365 = vmatprep.subr.mxu0 0.0
        %1366 = vmatpush2.xpose.msra.mxu0 0.0
        %1367 = vmatprep.subr.mxu0 0.0
        %1368 = vmatpush2.xpose.msra.mxu0 0.0
        %1369 = vmatprep.subr.mxu0 0.0
        %1370 = vmatpush2.xpose.msra.mxu0 0.0
        %1371 = vmatprep.subr.mxu0 0.0
        %1372 = vmatpush2.xpose.msra.mxu0 0.0
        %1373 = vmatprep.subr.mxu0 0.0
        %1374 = vmatpush2.xpose.msra.mxu0 0.0
        %1375 = vmatprep.subr.mxu0 0.0
        %1376 = vmatpush2.xpose.msra.mxu0 0.0
        %1377 = vmatprep.subr.mxu0 0.0
        %1378 = vmatpush2.xpose.msra.mxu0 0.0
        %1379 = vmatprep.subr.mxu0 0.0
        %1380 = vmatpush2.xpose.msra.mxu0 0.0
        %1381 = vmatprep.subr.mxu0 0.0
        %1382 = vmatpush2.xpose.msra.mxu0 0.0
        %1383 = vmatprep.subr.mxu0 0.0
        %1384 = vmatpush2.xpose.msra.mxu0 0.0
        %1385 = vmatprep.subr.mxu0 0.0
        %1386 = vmatpush2.xpose.msra.mxu0 0.0
        %1387 = vmatprep.subr.mxu0 0.0
        %1388 = vmatpush2.xpose.msra.mxu0 0.0
        %1389 = vmatprep.subr.mxu0 0.0
        %1390 = vmatpush2.xpose.msra.mxu0 0.0
        %1391 = vmatprep.subr.mxu0 0.0
        %1392 = vmatpush2.xpose.msra.mxu0 0.0
        %1393 = vmatprep.mubr.f32.mxu0 0.0
        %1394 = vmatmul.mubr.f32.gmra.mxu0 %v1321
        %v1395 = vpop.f32.mrf.mxu0
        %v1396 = vadd.f32 0.0, %v1395
        %v1397 = vpop.f32.mrf.mxu0
        %1398 = vmatprep.mubr.f32.mxu0 0.0
        %1399 = vmatmul.mubr.f32.gmra.mxu0 %v1324
        %v1400 = vpop.f32.mrf.mxu0
        %v1401 = vadd.f32 0.0, %v1400
        %v1402 = vpop.f32.mrf.mxu0
        %1403 = vdwg.mxu0
        %v1404 = vmul.f32 %v1318, %v1318
        %v1405 = vmul.f32 %v1319, %v1319
        %v1406 = vsel %vm215, %v1404, 0.0
        %1407 = vadd.xlane.f32.xlu0 %v1406
        %v1408 = vpop.xlane.xlu0 %1407
        %v1409 = vsel %vm215, %v1405, 0.0
        %1410 = vadd.xlane.f32.xlu0 %v1409
        %v1411 = vpop.xlane.xlu0 %1410
        %v1412 = vmul.f32 %v1396, 2.0
        %v1413 = vmul.f32 %v1401, 2.0
        %v1414 = vsub.f32 %v1408, %v1412
        %v1415 = vsub.f32 %v1411, %v1413
        %v1416 = vlaneseq
        %v1417 = vshrl.u32 %v1416, 7
        %v1418 = vadd.s32 %v1417, 8
        %s1419 = sld [smem:[#allocation8 + %s36]]
        %v1420 = vstv %s1419
        %vm1421 = vcmp.lt.s32.totalorder %v1417, %v1420
        %vm1422 = vcmp.lt.s32.totalorder %v1418, %v1420
        %v1423 = vsel %vm1421, %v1414, 1e+30
        %v1424 = vsel %vm1422, %v1415, 1e+30
        %vm1425 = vcmask 15360
        %v1426 = vsel %vm1425, %v1423, inf
        %v1427 = vsel %vm1425, %v1424, inf
        %v1428 = vmin.f32 %v1426, %v1427
        %v1429 = vrot.slane %v1428, 4
        %v1430 = vmin.f32 %v1428, %v1429
        %v1431 = vrot.slane %v1430, 2
        %v1432 = vmin.f32 %v1430, %v1431
        %v1433 = vrot.slane %v1432, 1
        %v1434 = vmin.f32 %v1432, %v1433
        %vm1435 = vcmp.eq.f32.partialorder %v1423, %v1434
        %vm1436 = vcmp.eq.f32.partialorder %v1424, %v1434
        %v1437 = vsel %vm1435, %v1417, 16
        %v1438 = vsel %vm1436, %v1418, 16
        %v1439 = vsel %vm1425, %v1437, 2147483647
        %v1440 = vsel %vm1425, %v1438, 2147483647
        %vm1441 = vcmp.lt.s32.totalorder %v1439, %v1440
        %v1442 = vsel %vm1441, %v1439, %v1440
        %v1443 = vrot.slane %v1442, 4
        %vm1444 = vcmp.lt.s32.totalorder %v1442, %v1443
        %v1445 = vsel %vm1444, %v1442, %v1443
        %v1446 = vrot.slane %v1445, 2
        %vm1447 = vcmp.lt.s32.totalorder %v1445, %v1446
        %v1448 = vsel %vm1447, %v1445, %v1446
        %v1449 = vrot.slane %v1448, 1
        %vm1450 = vcmp.lt.s32.totalorder %v1448, %v1449
        %v1451 = vsel %vm1450, %v1448, %v1449
        %vm1452 = vcmp.eq.s32.totalorder %v1417, %v1451
        %vm1453 = vcmp.eq.s32.totalorder %v1418, %v1451
        %v1454 = vsel %vm1452, 1, 0
        %v1455 = vsel %vm1453, 1, 0
        %v1456 = vcvt.s32.f32 %v1454
        %v1457 = vcvt.s32.f32 %v1455
        %1458 = vxpose.xlu0.b32.start [1/16] %v1456, 128
        %1459 = vxpose.xlu0.b32.cont [2/16] %v1457, 128
        %1460 = vxpose.xlu0.b32.cont [3/16] 0.0, 128
        %1461 = vxpose.xlu0.b32.cont [4/16] 0.0, 128
        %1462 = vxpose.xlu0.b32.cont [5/16] 0.0, 128
        %1463 = vxpose.xlu0.b32.cont [6/16] 0.0, 128
        %1464 = vxpose.xlu0.b32.cont [7/16] 0.0, 128
        %1465 = vxpose.xlu0.b32.cont [8/16] 0.0, 128
        %1466 = vxpose.xlu0.b32.cont [9/16] 0.0, 128
        %1467 = vxpose.xlu0.b32.cont [10/16] 0.0, 128
        %1468 = vxpose.xlu0.b32.cont [11/16] 0.0, 128
        %1469 = vxpose.xlu0.b32.cont [12/16] 0.0, 128
        %1470 = vxpose.xlu0.b32.cont [13/16] 0.0, 128
        %1471 = vxpose.xlu0.b32.cont [14/16] 0.0, 128
        %1472 = vxpose.xlu0.b32.cont [15/16] 0.0, 128
        %1473 = vxpose.xlu0.b32.end [16/16] 0.0, 128
        %v1474 = vpop.trf.xlu0
        %v1475 = vpop.trf.xlu0
        %v1476 = vpop.trf.xlu0
        %v1477 = vpop.trf.xlu0
        %v1478 = vpop.trf.xlu0
        %v1479 = vpop.trf.xlu0
        %v1480 = vpop.trf.xlu0
        %v1481 = vpop.trf.xlu0
        %v1482 = vpop.trf.xlu0
        %v1483 = vpop.trf.xlu0
        %v1484 = vpop.trf.xlu0
        %v1485 = vpop.trf.xlu0
        %v1486 = vpop.trf.xlu0
        %v1487 = vpop.trf.xlu0
        %v1488 = vpop.trf.xlu0
        %v1489 = vpop.trf.xlu0
        %vm1490 = vcmask 130048
        %v1492 = vsel %vm1490, %v1474, 0
        %1494 = vmatprep.subr.mxu0 0.0
        %1495 = vmatpush1.msra.mxu0 0.0
        %1496 = vmatprep.subr.mxu0 0.0
        %1497 = vmatpush1.msra.mxu0 0.0
        %1498 = vmatprep.subr.mxu0 0.0
        %1499 = vmatpush1.msra.mxu0 0.0
        %1500 = vmatprep.subr.mxu0 0.0
        %1501 = vmatpush1.msra.mxu0 0.0
        %1502 = vmatprep.subr.mxu0 0.0
        %1503 = vmatpush1.msra.mxu0 0.0
        %1504 = vmatprep.subr.mxu0 0.0
        %1505 = vmatpush1.msra.mxu0 0.0
        %1506 = vmatprep.subr.mxu0 0.0
        %1507 = vmatpush1.msra.mxu0 0.0
        %1508 = vmatprep.subr.mxu0 0.0
        %1509 = vmatpush1.msra.mxu0 0.0
        %1510 = vmatprep.subr.mxu0 0.0
        %1511 = vmatpush1.msra.mxu0 0.0
        %1512 = vmatprep.subr.mxu0 0.0
        %1513 = vmatpush1.msra.mxu0 0.0
        %1514 = vmatprep.subr.mxu0 0.0
        %1515 = vmatpush1.msra.mxu0 0.0
        %1516 = vmatprep.subr.mxu0 0.0
        %1517 = vmatpush1.msra.mxu0 0.0
        %1518 = vmatprep.subr.mxu0 0.0
        %1519 = vmatpush1.msra.mxu0 0.0
        %1520 = vmatprep.subr.mxu0 0.0
        %1521 = vmatpush1.msra.mxu0 0.0
        %1522 = vmatprep.subr.mxu0 0.0
        %1523 = vmatpush1.msra.mxu0 %v1319
        %1524 = vmatprep.subr.mxu0 0.0
        %1525 = vmatpush1.msra.mxu0 %v1318
        %1526 = vmatprep.subr.mxu0 0.0
        %1527 = vmatpush2.msra.mxu0 0.0
        %1528 = vmatprep.subr.mxu0 0.0
        %1529 = vmatpush2.msra.mxu0 0.0
        %1530 = vmatprep.subr.mxu0 0.0
        %1531 = vmatpush2.msra.mxu0 0.0
        %1532 = vmatprep.subr.mxu0 0.0
        %1533 = vmatpush2.msra.mxu0 0.0
        %1534 = vmatprep.subr.mxu0 0.0
        %1535 = vmatpush2.msra.mxu0 0.0
        %1536 = vmatprep.subr.mxu0 0.0
        %1537 = vmatpush2.msra.mxu0 0.0
        %1538 = vmatprep.subr.mxu0 0.0
        %1539 = vmatpush2.msra.mxu0 0.0
        %1540 = vmatprep.subr.mxu0 0.0
        %1541 = vmatpush2.msra.mxu0 0.0
        %1542 = vmatprep.subr.mxu0 0.0
        %1543 = vmatpush2.msra.mxu0 0.0
        %1544 = vmatprep.subr.mxu0 0.0
        %1545 = vmatpush2.msra.mxu0 0.0
        %1546 = vmatprep.subr.mxu0 0.0
        %1547 = vmatpush2.msra.mxu0 0.0
        %1548 = vmatprep.subr.mxu0 0.0
        %1549 = vmatpush2.msra.mxu0 0.0
        %1550 = vmatprep.subr.mxu0 0.0
        %1551 = vmatpush2.msra.mxu0 0.0
        %1552 = vmatprep.subr.mxu0 0.0
        %1553 = vmatpush2.msra.mxu0 0.0
        %1554 = vmatprep.subr.mxu0 0.0
        %1555 = vmatpush2.msra.mxu0 0.0
        %1556 = vmatprep.subr.mxu0 0.0
        %1557 = vmatpush2.msra.mxu0 0.0
        %1558 = vmatprep.mubr.f32.mxu0 0.0
        %1559 = vmatmul.mubr.f32.gmra.mxu0 %v1492
        %v1560 = vpop.f32.mrf.mxu0
        %v1561 = vadd.f32 0.0, %v1560
        %v1562 = vpop.f32.mrf.mxu0
        %1563 = vdwg.mxu0
        %vm1564 = vcmask 254976
        %1565 = vst.msk [vmem:[%s195] sm:$0x3] %vm1564, %v1561
        %vm1566 = vcmask 8192
        %1567 = vst.msk [vmem:[%s212] sm:$0x1] %vm1566, %v1451
        %s1568 = sand.u32 %s96, 1
        %s1569 = scalar_lea.sflag [#allocation10], %s1568
        %s1570 = sand.u32 %s96, 1
        %s1571 = smul.addr %s1570, 2
        %s1572 = scalar_lea.vmem [#allocation9], %s1571
        %p1573 = scmp.lt.s32.totalorder %s36, 2
        %s1574 = scalar_select %p1573, %s36, 2
        %s1575 = scalar_lea.vmem %s7, %s1574
        // Predicated region
        $region616: #{tpu_custom_call.1} parent=27 // pred_check
          %p1576 = pneg %p106
        $region617: #{tpu_custom_call.1} parent=27 // pred_check_branch
          %1578 = sbr.rel (%p1576) target = $region619
        $region618: #{tpu_custom_call.1} parent=27 // pred_region
          %s1580 = ssub.s32 32, 32
          %1581 = vsyncadd %s1569, %s1580
          %s1582 = smul.addr %s36, 32
          %s1583 = scalar_lea.hbm %s6, %s1582
          %s1585 = sshll.u32 %s1572, 4
          %s1586 = int_to_ptr.vmem [resolvable:$true] %s1585
          %1588 = dma.vmem_to_hbm [thread:$0]  %s1586, 32, %s1583, %s1569
        $region619: #{tpu_custom_call.1} parent=27 // pred_fallthru
          _
        // Predicated region
        $region620: #{tpu_custom_call.1} parent=27 // pred_check
          %p1589 = pneg %p132
        $region621: #{tpu_custom_call.1} parent=27 // pred_check_branch
          %1591 = sbr.rel (%p1589) target = $region623
        $region622: #{tpu_custom_call.1} parent=27 // pred_region
          _
        $region623: #{tpu_custom_call.1} parent=27 // pred_fallthru
          _
      $region28: #{tpu_custom_call.1} parent=5 // pred_fallthru
        _
      %p1592 = scmp.le.s32.totalorder 2, %s31
      // Predicated region
      $region624: #{tpu_custom_call.1} parent=5 // pred_check
        %p1593 = pneg %p1592
      $region625: #{tpu_custom_call.1} parent=5 // pred_check_branch
        %1595 = sbr.rel (%p1593) target = $region627
      $region626: #{tpu_custom_call.1} parent=5 // pred_region
        %s1596 = ssub.s32 %s31, 2
        // Predicated region
        $region628: #{tpu_custom_call.1} parent=626 // pred_check
          %p1597 = pneg %p112
        $region629: #{tpu_custom_call.1} parent=626 // pred_check_branch
          %1599 = sbr.rel (%p1597) target = $region631
        $region630: #{tpu_custom_call.1} parent=626 // pred_region
          %s1600 = sand.u32 %s97, 1
          %s1601 = scalar_lea.sflag [#allocation10], %s1600
          %s1602 = sand.u32 %s97, 1
          %s1603 = smul.addr %s1602, 2
          %s1604 = scalar_lea.vmem [#allocation9], %s1603
          %1605 = dma.done %s1601, 32
        $region631: #{tpu_custom_call.1} parent=626 // pred_fallthru
          _
        // Predicated region
        $region632: #{tpu_custom_call.1} parent=626 // pred_check
          %p1606 = pneg %p138
        $region633: #{tpu_custom_call.1} parent=626 // pred_check_branch
          %1608 = sbr.rel (%p1606) target = $region635
        $region634: #{tpu_custom_call.1} parent=626 // pred_region
          %p1609 = scmp.lt.s32.totalorder %s37, 2
          %s1610 = scalar_select %p1609, %s37, 2
          %s1611 = scalar_lea.vmem %s7, %s1610
        $region635: #{tpu_custom_call.1} parent=626 // pred_fallthru
          _
      $region627: #{tpu_custom_call.1} parent=5 // pred_fallthru
        _
    $region6: #{tpu_custom_call.1} parent=1 // loop_footer
      %s35 = sadd.s32 1, %s31
    $region7: #{tpu_custom_call.1} parent=1 // loop_footer_branch
      %30 = sbr.rel target = $region3
    $region8: #{tpu_custom_call.1} parent=1 // loop_exit
      _
    %1612 = vsyncpa [#allocation10], 1
    %s1613 = scalar_lea.sflag [#allocation10], 1
    %1614 = vsyncpa %s1613, 1
  %1615 = vsyncmov [#allocation4]
  %s1616 = vpop.sfrf %1615
  %p1617 = scmp.eq.s32.totalorder %s1616, 0
  %p1618 = pneg %p1617
  %1620 = shalt.err (%p1618)
  %s1621 = scalar_lea.sflag [#allocation4], 1
  %1622 = vsyncmov %s1621
  %s1623 = vpop.sfrf %1622
  %p1624 = scmp.eq.s32.totalorder %s1623, 0
  %p1625 = pneg %p1624
  %1627 = shalt.err (%p1625)

</llo_original>
